<compile_context>
chip_gen: v7x
topology: tpu7x:2x2x1
jax: 0.10.0
libtpu: 0.0.40
codegen_flags: <defaults>
</compile_context>

<pallas_src>
import functools
import numpy as np

import jax
import jax.numpy as jnp
from jax.experimental import pallas as pl
from jax.experimental.pallas import tpu as pltpu


# tap order: t = dy*3 + dx  ->  spatial offset (dy-1, dx-1)
OFFS = tuple((dy - 1, dx - 1) for dy in range(3) for dx in range(3))

# The `x + wg_att_1(x) == 2x` fold in fold_selector_bn is only valid if
# SwapFusionEncoder is the identity (its source was not provided).
WG_ATT_IS_IDENTITY = True


# ------------------------------ Pallas kernel -------------------------------

def _resizer_fused_kernel(x_ref, w_ref, r_ref, m_ref, w1_ref, w2_ref,
                          y_ref, a_ref, xr_ref, tap_ref,
                          *, N, Cin, Cp, Wout, HWout, num_blocks):
    """Entire Resizer forward in one kernel; activations stay resident in VMEM.

    x_ref   : (N, Cin, HWin)            raw input images, flat spatial
    w_ref   : (2*Cp, Cin+1)             folded ChannelSelector(+dup)/2x/BN, bias column
    r_ref   : (HWin, HWout)             kron(Rh, Rw)^T bilinear matrix (per image)
    m_ref   : (9, N*HWout)              per-tap validity masks, tiled per image
    w1_ref  : (num_blocks, Cp, 9*Cp+1)  conv1(+BN1) folded, stacked-tap + bias column
    w2_ref  : (num_blocks, Cp, 9*Cp+1)  conv2(+BN2) folded
    y_ref   : (Cp, N*HWout)             interpolate(res_x)   (module output path)
    a_ref   : (Cp, N*HWout)             residual-block branch output
    xr_ref  : (Cin+1, N*HWout)          scratch: resized input + ones row (bias fold)
    tap_ref : (9*Cp+1, N*HWout)         scratch: stacked shifted/masked taps + ones row
    """
    NHW = N * HWout

    # --- bilinear resize of the raw input, per image.  Resize commutes with the
    #     1x1 channel mixing, so doing it first lets the channel-mix matmul
    #     cover the whole batch in one MXU issue. ---
    for n in range(N):
        xr_ref[0:Cin, n * HWout:(n + 1) * HWout] = jnp.dot(
            x_ref[n], r_ref[...], preferred_element_type=jnp.float32)
    xr_ref[Cin:Cin + 1, :] = jnp.ones((1, NHW), jnp.float32)     # bias-fold ones row

    # --- fused ChannelSelector + (x + wg_att_1(x)) + BatchNorm: ONE matmul ---
    cs = jnp.dot(w_ref[...], xr_ref[...],
                 preferred_element_type=jnp.float32)             # (2*Cp, N*HWout)
    y_ref[...] = cs[0:Cp, :]          # interpolate(res_x)          -> module output
    a = cs[Cp:2 * Cp, :]              # interpolate(BN(2*res_x))    -> residual blocks

    # --- residual blocks: each 3x3 conv = ONE stacked-tap matmul ---
    tap_ref[9 * Cp:9 * Cp + 1, :] = jnp.ones((1, NHW), jnp.float32)  # bias row (once)

    def conv3x3(v, w_blk):            # v: (Cp, NHW), w_blk: (Cp, 9*Cp+1)
        for t, (oy, ox) in enumerate(OFFS):
            off = oy * Wout + ox
            # sh[:, p] = v[:, p + off]; cross-row / cross-image wraps are masked out
            sh = v if off == 0 else jnp.roll(v, -off, axis=1)
            tap_ref[t * Cp:(t + 1) * Cp, :] = sh * m_ref[t:t + 1, :]
        return jnp.dot(w_blk, tap_ref[...], preferred_element_type=jnp.float32)

    for blk in range(num_blocks):
        h = conv3x3(a, w1_ref[blk])               # conv1 (+BN1 folded, bias folded)
        h = jnp.maximum(h, 0.01 * h)              # LeakyReLU (torch default slope)
        h = conv3x3(h, w2_ref[blk])               # conv2 (+BN2 folded, bias folded)
        a = a + h
    a_ref[...] = a


# ----------------------------- pallas_call wrapper ---------------------------

def resizer_pallas_call(x3, w_stack, r_mat, masks, w1s, w2s,
                        *, N, Cin, Cp, Wout, HWout, num_blocks):
    HWin = x3.shape[-1]
    kern = functools.partial(_resizer_fused_kernel, N=N, Cin=Cin, Cp=Cp,
                             Wout=Wout, HWout=HWout, num_blocks=num_blocks)
    return pl.pallas_call(
        kern,
        out_shape=(jax.ShapeDtypeStruct((Cp, N * HWout), jnp.float32),
                   jax.ShapeDtypeStruct((Cp, N * HWout), jnp.float32)),
        grid=(1,),
        in_specs=[
            pl.BlockSpec((N, Cin, HWin), lambda i: (0, 0, 0)),
            pl.BlockSpec((2 * Cp, Cin + 1), lambda i: (0, 0)),
            pl.BlockSpec((HWin, HWout), lambda i: (0, 0)),
            pl.BlockSpec((9, N * HWout), lambda i: (0, 0)),
            pl.BlockSpec((num_blocks, Cp, 9 * Cp + 1), lambda i: (0, 0, 0)),
            pl.BlockSpec((num_blocks, Cp, 9 * Cp + 1), lambda i: (0, 0, 0)),
        ],
        out_specs=(pl.BlockSpec((Cp, N * HWout), lambda i: (0, 0)),
                   pl.BlockSpec((Cp, N * HWout), lambda i: (0, 0))),
        scratch_shapes=[pltpu.VMEM((Cin + 1, N * HWout), jnp.float32),
                        pltpu.VMEM((9 * Cp + 1, N * HWout), jnp.float32)],
        compiler_params=pltpu.CompilerParams(dimension_semantics=("arbitrary",)),
    )(x3, w_stack, r_mat, masks, w1s, w2s)


# ------------------------- constants & parameter folds ----------------------

def _bilinear_matrix(out_size, in_size):
    """Row interpolation matrix matching torch bilinear, align_corners=False."""
    # TODO(synk): spot-check once against torch F.interpolate (clamp-at-0 semantics).
    i = np.arange(out_size, dtype=np.float64)
    src = (i + 0.5) * (in_size / out_size) - 0.5
    src = np.maximum(src, 0.0)
    i0 = np.minimum(np.floor(src).astype(np.int64), in_size - 1)
    i1 = np.minimum(i0 + 1, in_size - 1)
    frac = src - i0
    m = np.zeros((out_size, in_size), np.float32)
    m[np.arange(out_size), i0] += (1.0 - frac)
    m[np.arange(out_size), i1] += frac
    return m


def _resize_matrix_T(Hin, Win, Hout, Wout):
    rh = _bilinear_matrix(Hout, Hin)
    rw = _bilinear_matrix(Wout, Win)
    return np.kron(rh, rw).T.astype(np.float32)        # (Hin*Win, Hout*Wout)


def _conv3x3_masks(H, W, N):
    """Per-tap validity masks for lane-rolled flat 3x3 conv (zero padding),
    tiled per image along the batch-in-lanes axis (keeps cross-image wraps zero)."""
    ii, jj = np.meshgrid(np.arange(H), np.arange(W), indexing="ij")
    m = np.zeros((9, H * W), np.float32)
    for t, (oy, ox) in enumerate(OFFS):
        valid = (ii + oy >= 0) & (ii + oy < H) & (jj + ox >= 0) & (jj + ox < W)
        m[t] = valid.astype(np.float32).reshape(-1)
    return np.tile(m, (1, N))


def bn_scale_shift(gamma, beta, mean, var, eps=1e-5):
    s = gamma / jnp.sqrt(var + eps)
    return s, beta - mean * s


def fold_selector_bn(p, C, Cp):
    """ChannelSelector (both 1x1 convs + deterministic dup) / residual-add / BN
    -> one (2*Cp, 2*C+1) matrix with bias column; output channels padded C->Cp."""
    assert WG_ATT_IS_IDENTITY, "2x fold only valid when wg_att_1 is identity"
    # iter-1 retained indices are deterministically [0,0,1,1,...] -> fold duplication
    w1f = p['cs_w1'][:, 0::2] + p['cs_w1'][:, 1::2]      # (C, C)
    W_cs = w1f @ p['cs_w0']                              # (C, 2C)
    b_cs = w1f @ p['cs_b0'] + p['cs_b1']                 # (C,)
    s, t = bn_scale_shift(**p['bn'])
    W_a = (2.0 * s)[:, None] * W_cs                      # x + wg_att_1(x) == 2x fold
    b_a = 2.0 * s * b_cs + t
    Cin = W_cs.shape[1]

    def pad_rows(w, b):
        wb = jnp.concatenate([w, b[:, None]], axis=1)                  # (C, Cin+1)
        return jnp.concatenate(
            [wb, jnp.zeros((Cp - C, Cin + 1), jnp.float32)], axis=0)   # (Cp, Cin+1)

    return jnp.concatenate([pad_rows(W_cs, b_cs), pad_rows(W_a, b_a)], axis=0)


def fold_block_params(blk, C, Cp):
    """Fold eval-mode BN into conv weight/bias, pad channels C->Cp, and lay out
    as a stacked-tap matrix (Cp, 9*Cp+1) with the bias in the last column."""
    def fold(w, b, bn):
        s, t = bn_scale_shift(**bn)
        wf = s[:, None, None, None] * w
        bf = s * b + t
        wp = jnp.zeros((Cp, Cp, 3, 3), jnp.float32).at[:C, :C].set(wf)
        bp = jnp.zeros((Cp,), jnp.float32).at[:C].set(bf)
        # [o, dy, dx, c] -> column index (dy*3+dx)*Cp + c  (matches tap_ref layout)
        wstk = jnp.transpose(wp, (0, 2, 3, 1)).reshape(Cp, 9 * Cp)
        return jnp.concatenate([wstk, bp[:, None]], axis=1)            # (Cp, 9*Cp+1)

    return fold(blk['w1'], blk['b1'], blk['bn1']), fold(blk['w2'], blk['b2'], blk['bn2'])


# ------------------------------- forward ------------------------------------

def resizer_forward(x, H, W, p, out_dim):
    """Mirrors Resizer.forward(x, H, W).  Returns (y, aux):
       y   = wg_att_2(interpolate(res_x))  -- the module's actual return value
       aux = residual-block branch (computed then discarded by the original forward).
    """
    N, Cin, Hin, Win = x.shape
    C = out_dim
    assert Cin == 2 * C, "choose Cin == 2*out_dim so channel selection is deterministic"
    Cp = max(8, ((C + 7) // 8) * 8)                 # pad channels to f32 sublane minimum
    HWin, HWout = Hin * Win, H * W
    num_blocks = len(p['blocks'])
    assert num_blocks >= 1

    w_stack = fold_selector_bn(p, C, Cp)            # (2*Cp, Cin+1)
    r_mat = jnp.asarray(_resize_matrix_T(Hin, Win, H, W))
    masks = jnp.asarray(_conv3x3_masks(H, W, N))
    folds = [fold_block_params(b, C, Cp) for b in p['blocks']]
    w1s = jnp.stack([f[0] for f in folds])          # (num_blocks, Cp, 9*Cp+1)
    w2s = jnp.stack([f[1] for f in folds])

    x3 = x.reshape(N, Cin, HWin)

    y_l, a_l = resizer_pallas_call(x3, w_stack, r_mat, masks, w1s, w2s,
                                   N=N, Cin=Cin, Cp=Cp, Wout=W, HWout=HWout,
                                   num_blocks=num_blocks)

    # (Cp, N*H*W) -> (N, C, H, W): drop the zero padding channels (layout plumbing)
    def unflatten(z):
        return jnp.transpose(z.reshape(Cp, N, H, W), (1, 0, 2, 3))[:, :C]

    # TODO(synk): wg_att_2 (SwapFusionEncoder) treated as identity.
    return unflatten(y_l), unflatten(a_l)


# ------------------------- plain-XLA reference (check) ----------------------

def reference_forward(x, H, W, p, out_dim):
    N, Cin, Hin, Win = x.shape
    C = out_dim

    def conv1x1(v, w, b):
        return jnp.einsum('oc,nchw->nohw', w, v) + b[None, :, None, None]

    def conv3x3(v, w, b):
        vp = jnp.pad(v, ((0, 0), (0, 0), (1, 1), (1, 1)))
        Hh, Ww = v.shape[2], v.shape[3]
        out = jnp.broadcast_to(b[None, :, None, None], v.shape[:1] + (w.shape[0], Hh, Ww))
        for dy in range(3):
            for dx in range(3):
                out = out + jnp.einsum('oc,nchw->nohw', w[:, :, dy, dx],
                                       vp[:, :, dy:dy + Hh, dx:dx + Ww])
        return out

    rh = jnp.asarray(_bilinear_matrix(H, Hin))
    rw = jnp.asarray(_bilinear_matrix(W, Win))
    resize = lambda z: jnp.einsum('oh,nchw,vw->ncov', rh, z, rw)

    # ChannelSelector (repeat=2, deterministic dup indices [0,0,1,1,...])
    h = conv1x1(x, p['cs_w0'], p['cs_b0'])
    h = h[:, jnp.repeat(jnp.arange(C), 2)]
    res_x = conv1x1(h, p['cs_w1'], p['cs_b1'])

    # wg_att_1 identity -> x + res_x = 2*res_x -> BN -> resize -> residual blocks
    s, t = bn_scale_shift(**p['bn'])
    a = (2.0 * res_x) * s[None, :, None, None] + t[None, :, None, None]
    a = resize(a)
    for blk in p['blocks']:
        s1, t1 = bn_scale_shift(**blk['bn1'])
        s2, t2 = bn_scale_shift(**blk['bn2'])
        hh = conv3x3(a, blk['w1'], blk['b1'])
        hh = hh * s1[None, :, None, None] + t1[None, :, None, None]
        hh = jnp.where(hh >= 0, hh, 0.01 * hh)
        hh = conv3x3(hh, blk['w2'], blk['b2'])
        hh = hh * s2[None, :, None, None] + t2[None, :, None, None]
        a = a + hh
    y = resize(res_x)          # wg_att_2 identity
    return y, a


# --------------------------- deterministic params ---------------------------

def init_params(key, out_dim, num_blocks):
    keys = iter(jax.random.split(key, 64))

    def nrm(shape, scale=0.2):
        return scale * jax.random.normal(next(keys), shape, dtype=jnp.float32)

    def bn_p():
        return dict(gamma=1.0 + nrm((out_dim,), 0.05),
                    beta=nrm((out_dim,), 0.05),
                    mean=nrm((out_dim,), 0.1),
                    var=1.0 + jnp.abs(nrm((out_dim,), 0.1)))

    p = {
        'cs_w0': nrm((out_dim, 2 * out_dim)), 'cs_b0': nrm((out_dim,)),
        'cs_w1': nrm((out_dim, 2 * out_dim)), 'cs_b1': nrm((out_dim,)),
        'bn': bn_p(),
        'blocks': [],
    }
    for _ in range(num_blocks):
        p['blocks'].append(dict(
            w1=nrm((out_dim, out_dim, 3, 3)), b1=nrm((out_dim,)), bn1=bn_p(),
            w2=nrm((out_dim, out_dim, 3, 3)), b2=nrm((out_dim,)), bn2=bn_p(),
        ))
    return p


if __name__ == "__main__":
    out_dim, num_blocks = 4, 2
    N, Hin, Win = 2, 8, 8
    Hout, Wout = 16, 16

    key = jax.random.PRNGKey(0)
    kx, kp = jax.random.split(key)
    x = jax.random.normal(kx, (N, 2 * out_dim, Hin, Win), dtype=jnp.float32)
    params = init_params(kp, out_dim, num_blocks)

    fwd = jax.jit(resizer_forward, static_argnums=(1, 2, 4))
    y, aux = fwd(x, Hout, Wout, params, out_dim)
    jax.block_until_ready((y, aux))

    assert y.shape == (N, out_dim, Hout, Wout)
    assert aux.shape == (N, out_dim, Hout, Wout)

    # numerical check of the fused/folded Pallas pipeline against plain XLA
    y_ref, a_ref = reference_forward(x, Hout, Wout, params, out_dim)

    def rel(a, b):
        return float(jnp.linalg.norm(a - b) / (jnp.linalg.norm(b) + 1e-9))

    # exact algebraic refold in f32 -> tight tolerance
    assert rel(y, y_ref) < 1e-5, f"y mismatch: rel err {rel(y, y_ref)}"
    assert rel(aux, a_ref) < 1e-5, f"aux mismatch: rel err {rel(aux, a_ref)}"

    print("KERNEL_OK")
</pallas_src>

<mosaic_0001>
module attributes {stable_mosaic.version = 11 : i64} {
  func.func @_resizer_fused_kernel(%arg0: i32, %arg1: memref<2x8x64xf32, #tpu.memory_space<vmem>>, %arg2: memref<16x9xf32, #tpu.memory_space<vmem>>, %arg3: memref<64x256xf32, #tpu.memory_space<vmem>>, %arg4: memref<9x512xf32, #tpu.memory_space<vmem>>, %arg5: memref<2x8x73xf32, #tpu.memory_space<vmem>>, %arg6: memref<2x8x73xf32, #tpu.memory_space<vmem>>, %arg7: memref<8x512xf32, #tpu.memory_space<vmem>>, %arg8: memref<8x512xf32, #tpu.memory_space<vmem>>, %arg9: memref<9x512xf32, #tpu.memory_space<vmem>>, %arg10: memref<73x512xf32, #tpu.memory_space<vmem>>) attributes {dimension_semantics = [#tpu.dimension_semantics<arbitrary>], iteration_bounds = array<i64: 1>, scalar_prefetch = 0 : i64, scratch_operands = 2 : i64, tpu.core_type = #tpu.core_type<tc>, window_params = [{pipeline_mode = #tpu.pipeline_mode<synchronous>, transform_indices = @transform_0, window_bounds = array<i64: 2, 8, 64>}, {pipeline_mode = #tpu.pipeline_mode<synchronous>, transform_indices = @transform_1, window_bounds = array<i64: 16, 9>}, {pipeline_mode = #tpu.pipeline_mode<synchronous>, transform_indices = @transform_2, window_bounds = array<i64: 64, 256>}, {pipeline_mode = #tpu.pipeline_mode<synchronous>, transform_indices = @transform_3, window_bounds = array<i64: 9, 512>}, {pipeline_mode = #tpu.pipeline_mode<synchronous>, transform_indices = @transform_4, window_bounds = array<i64: 2, 8, 73>}, {pipeline_mode = #tpu.pipeline_mode<synchronous>, transform_indices = @transform_5, window_bounds = array<i64: 2, 8, 73>}, {pipeline_mode = #tpu.pipeline_mode<synchronous>, transform_indices = @transform_6, window_bounds = array<i64: 8, 512>}, {pipeline_mode = #tpu.pipeline_mode<synchronous>, transform_indices = @transform_7, window_bounds = array<i64: 8, 512>}]} {
    %c0 = arith.constant 0 : index
    %c0_0 = arith.constant 0 : index
    %c0_1 = arith.constant 0 : index
    %0 = vector.load %arg1[%c0, %c0_0, %c0_1] : memref<2x8x64xf32, #tpu.memory_space<vmem>>, vector<1x8x64xf32>
    %1 = vector.shape_cast %0 : vector<1x8x64xf32> to vector<8x64xf32>
    %c0_2 = arith.constant 0 : index
    %c0_3 = arith.constant 0 : index
    %2 = vector.load %arg3[%c0_2, %c0_3] : memref<64x256xf32, #tpu.memory_space<vmem>>, vector<64x256xf32>
    %cst = arith.constant dense<0.000000e+00> : vector<8x256xf32>
    %3 = tpu.matmul %1, %2, %cst {dimension_numbers = #tpu.dot_dimension_numbers<[1], [0], [0], [1], [0, 0, 1, 1], [], []>} : vector<8x64xf32>, vector<64x256xf32>, vector<8x256xf32> -> vector<8x256xf32>
    %c0_4 = arith.constant 0 : index
    %c0_5 = arith.constant 0 : index
    %4 = vector.load %arg9[%c0_4, %c0_5] : memref<9x512xf32, #tpu.memory_space<vmem>>, vector<8x256xf32>
    tpu.vector_store %arg9[%c0_4, %c0_5], %3 {strides = array<i32>} : memref<9x512xf32, #tpu.memory_space<vmem>>, vector<8x256xf32>,
    %c1 = arith.constant 1 : index
    %c0_6 = arith.constant 0 : index
    %c0_7 = arith.constant 0 : index
    %5 = vector.load %arg1[%c1, %c0_6, %c0_7] : memref<2x8x64xf32, #tpu.memory_space<vmem>>, vector<1x8x64xf32>
    %6 = vector.shape_cast %5 : vector<1x8x64xf32> to vector<8x64xf32>
    %c0_8 = arith.constant 0 : index
    %c0_9 = arith.constant 0 : index
    %7 = vector.load %arg3[%c0_8, %c0_9] : memref<64x256xf32, #tpu.memory_space<vmem>>, vector<64x256xf32>
    %cst_10 = arith.constant dense<0.000000e+00> : vector<8x256xf32>
    %8 = tpu.matmul %6, %7, %cst_10 {dimension_numbers = #tpu.dot_dimension_numbers<[1], [0], [0], [1], [0, 0, 1, 1], [], []>} : vector<8x64xf32>, vector<64x256xf32>, vector<8x256xf32> -> vector<8x256xf32>
    %c0_11 = arith.constant 0 : index
    %c256 = arith.constant 256 : index
    %9 = vector.load %arg9[%c0_11, %c256] : memref<9x512xf32, #tpu.memory_space<vmem>>, vector<8x256xf32>
    tpu.vector_store %arg9[%c0_11, %c256], %8 {strides = array<i32>} : memref<9x512xf32, #tpu.memory_space<vmem>>, vector<8x256xf32>,
    %cst_12 = arith.constant 1.000000e+00 : f32
    %10 = vector.broadcast %cst_12 : f32 to vector<1x512xf32>
    %c8 = arith.constant 8 : index
    %c0_13 = arith.constant 0 : index
    %11 = vector.load %arg9[%c8, %c0_13] : memref<9x512xf32, #tpu.memory_space<vmem>>, vector<1x512xf32>
    tpu.vector_store %arg9[%c8, %c0_13], %10 {strides = array<i32>} : memref<9x512xf32, #tpu.memory_space<vmem>>, vector<1x512xf32>,
    %c0_14 = arith.constant 0 : index
    %c0_15 = arith.constant 0 : index
    %12 = vector.load %arg2[%c0_14, %c0_15] : memref<16x9xf32, #tpu.memory_space<vmem>>, vector<16x9xf32>
    %c0_16 = arith.constant 0 : index
    %c0_17 = arith.constant 0 : index
    %13 = vector.load %arg9[%c0_16, %c0_17] : memref<9x512xf32, #tpu.memory_space<vmem>>, vector<9x512xf32>
    %cst_18 = arith.constant dense<0.000000e+00> : vector<16x512xf32>
    %14 = tpu.matmul %12, %13, %cst_18 {dimension_numbers = #tpu.dot_dimension_numbers<[1], [0], [0], [1], [0, 0, 1, 1], [], []>} : vector<16x9xf32>, vector<9x512xf32>, vector<16x512xf32> -> vector<16x512xf32>
    %15 = vector.extract_strided_slice %14 {offsets = [0, 0], sizes = [8, 512], strides = [1, 1]} : vector<16x512xf32> to vector<8x512xf32>
    %c0_19 = arith.constant 0 : index
    %c0_20 = arith.constant 0 : index
    %16 = vector.load %arg7[%c0_19, %c0_20] : memref<8x512xf32, #tpu.memory_space<vmem>>, vector<8x512xf32>
    tpu.vector_store %arg7[%c0_19, %c0_20], %15 {strides = array<i32>} : memref<8x512xf32, #tpu.memory_space<vmem>>, vector<8x512xf32>,
    %17 = vector.extract_strided_slice %14 {offsets = [8, 0], sizes = [8, 512], strides = [1, 1]} : vector<16x512xf32> to vector<8x512xf32>
    %cst_21 = arith.constant 1.000000e+00 : f32
    %18 = vector.broadcast %cst_21 : f32 to vector<1x512xf32>
    %c72 = arith.constant 72 : index
    %c0_22 = arith.constant 0 : index
    %19 = vector.load %arg10[%c72, %c0_22] : memref<73x512xf32, #tpu.memory_space<vmem>>, vector<1x512xf32>
    tpu.vector_store %arg10[%c72, %c0_22], %18 {strides = array<i32>} : memref<73x512xf32, #tpu.memory_space<vmem>>, vector<1x512xf32>,
    %c0_23 = arith.constant 0 : index
    %c0_24 = arith.constant 0 : index
    %c0_25 = arith.constant 0 : index
    %20 = vector.load %arg5[%c0_23, %c0_24, %c0_25] : memref<2x8x73xf32, #tpu.memory_space<vmem>>, vector<1x8x73xf32>
    %21 = vector.shape_cast %20 : vector<1x8x73xf32> to vector<8x73xf32>
    %22 = vector.extract_strided_slice %17 {offsets = [0, 495], sizes = [8, 17], strides = [1, 1]} : vector<8x512xf32> to vector<8x17xf32>
    %23 = vector.extract_strided_slice %17 {offsets = [0, 0], sizes = [8, 495], strides = [1, 1]} : vector<8x512xf32> to vector<8x495xf32>
    %24 = tpu.concatenate %22, %23 in 1 : vector<8x17xf32>, vector<8x495xf32> -> vector<8x512xf32>
    %c0_26 = arith.constant 0 : index
    %c0_27 = arith.constant 0 : index
    %25 = vector.load %arg4[%c0_26, %c0_27] : memref<9x512xf32, #tpu.memory_space<vmem>>, vector<1x512xf32>
    %26 = vector.broadcast %25 : vector<1x512xf32> to vector<8x512xf32>
    %27 = arith.mulf %24, %26 : vector<8x512xf32>
    %c0_28 = arith.constant 0 : index
    %c0_29 = arith.constant 0 : index
    %28 = vector.load %arg10[%c0_28, %c0_29] : memref<73x512xf32, #tpu.memory_space<vmem>>, vector<8x512xf32>
    tpu.vector_store %arg10[%c0_28, %c0_29], %27 {strides = array<i32>} : memref<73x512xf32, #tpu.memory_space<vmem>>, vector<8x512xf32>,
    %29 = vector.extract_strided_slice %17 {offsets = [0, 496], sizes = [8, 16], strides = [1, 1]} : vector<8x512xf32> to vector<8x16xf32>
    %30 = vector.extract_strided_slice %17 {offsets = [0, 0], sizes = [8, 496], strides = [1, 1]} : vector<8x512xf32> to vector<8x496xf32>
    %31 = tpu.concatenate %29, %30 in 1 : vector<8x16xf32>, vector<8x496xf32> -> vector<8x512xf32>
    %c1_30 = arith.constant 1 : index
    %c0_31 = arith.constant 0 : index
    %32 = vector.load %arg4[%c1_30, %c0_31] : memref<9x512xf32, #tpu.memory_space<vmem>>, vector<1x512xf32>
    %33 = vector.broadcast %32 : vector<1x512xf32> to vector<8x512xf32>
    %34 = arith.mulf %31, %33 : vector<8x512xf32>
    %c8_32 = arith.constant 8 : index
    %c0_33 = arith.constant 0 : index
    %35 = vector.load %arg10[%c8_32, %c0_33] : memref<73x512xf32, #tpu.memory_space<vmem>>, vector<8x512xf32>
    tpu.vector_store %arg10[%c8_32, %c0_33], %34 {strides = array<i32>} : memref<73x512xf32, #tpu.memory_space<vmem>>, vector<8x512xf32>,
    %36 = vector.extract_strided_slice %17 {offsets = [0, 497], sizes = [8, 15], strides = [1, 1]} : vector<8x512xf32> to vector<8x15xf32>
    %37 = vector.extract_strided_slice %17 {offsets = [0, 0], sizes = [8, 497], strides = [1, 1]} : vector<8x512xf32> to vector<8x497xf32>
    %38 = tpu.concatenate %36, %37 in 1 : vector<8x15xf32>, vector<8x497xf32> -> vector<8x512xf32>
    %c2 = arith.constant 2 : index
    %c0_34 = arith.constant 0 : index
    %39 = vector.load %arg4[%c2, %c0_34] : memref<9x512xf32, #tpu.memory_space<vmem>>, vector<1x512xf32>
    %40 = vector.broadcast %39 : vector<1x512xf32> to vector<8x512xf32>
    %41 = arith.mulf %38, %40 : vector<8x512xf32>
    %c16 = arith.constant 16 : index
    %c0_35 = arith.constant 0 : index
    %42 = vector.load %arg10[%c16, %c0_35] : memref<73x512xf32, #tpu.memory_space<vmem>>, vector<8x512xf32>
    tpu.vector_store %arg10[%c16, %c0_35], %41 {strides = array<i32>} : memref<73x512xf32, #tpu.memory_space<vmem>>, vector<8x512xf32>,
    %43 = vector.extract_strided_slice %17 {offsets = [0, 511], sizes = [8, 1], strides = [1, 1]} : vector<8x512xf32> to vector<8x1xf32>
    %44 = vector.extract_strided_slice %17 {offsets = [0, 0], sizes = [8, 511], strides = [1, 1]} : vector<8x512xf32> to vector<8x511xf32>
    %45 = tpu.concatenate %43, %44 in 1 : vector<8x1xf32>, vector<8x511xf32> -> vector<8x512xf32>
    %c3 = arith.constant 3 : index
    %c0_36 = arith.constant 0 : index
    %46 = vector.load %arg4[%c3, %c0_36] : memref<9x512xf32, #tpu.memory_space<vmem>>, vector<1x512xf32>
    %47 = vector.broadcast %46 : vector<1x512xf32> to vector<8x512xf32>
    %48 = arith.mulf %45, %47 : vector<8x512xf32>
    %c24 = arith.constant 24 : index
    %c0_37 = arith.constant 0 : index
    %49 = vector.load %arg10[%c24, %c0_37] : memref<73x512xf32, #tpu.memory_space<vmem>>, vector<8x512xf32>
    tpu.vector_store %arg10[%c24, %c0_37], %48 {strides = array<i32>} : memref<73x512xf32, #tpu.memory_space<vmem>>, vector<8x512xf32>,
    %c4 = arith.constant 4 : index
    %c0_38 = arith.constant 0 : index
    %50 = vector.load %arg4[%c4, %c0_38] : memref<9x512xf32, #tpu.memory_space<vmem>>, vector<1x512xf32>
    %51 = vector.broadcast %50 : vector<1x512xf32> to vector<8x512xf32>
    %52 = arith.mulf %17, %51 : vector<8x512xf32>
    %c32 = arith.constant 32 : index
    %c0_39 = arith.constant 0 : index
    %53 = vector.load %arg10[%c32, %c0_39] : memref<73x512xf32, #tpu.memory_space<vmem>>, vector<8x512xf32>
    tpu.vector_store %arg10[%c32, %c0_39], %52 {strides = array<i32>} : memref<73x512xf32, #tpu.memory_space<vmem>>, vector<8x512xf32>,
    %54 = vector.extract_strided_slice %17 {offsets = [0, 1], sizes = [8, 511], strides = [1, 1]} : vector<8x512xf32> to vector<8x511xf32>
    %55 = vector.extract_strided_slice %17 {offsets = [0, 0], sizes = [8, 1], strides = [1, 1]} : vector<8x512xf32> to vector<8x1xf32>
    %56 = tpu.concatenate %54, %55 in 1 : vector<8x511xf32>, vector<8x1xf32> -> vector<8x512xf32>
    %c5 = arith.constant 5 : index
    %c0_40 = arith.constant 0 : index
    %57 = vector.load %arg4[%c5, %c0_40] : memref<9x512xf32, #tpu.memory_space<vmem>>, vector<1x512xf32>
    %58 = vector.broadcast %57 : vector<1x512xf32> to vector<8x512xf32>
    %59 = arith.mulf %56, %58 : vector<8x512xf32>
    %c40 = arith.constant 40 : index
    %c0_41 = arith.constant 0 : index
    %60 = vector.load %arg10[%c40, %c0_41] : memref<73x512xf32, #tpu.memory_space<vmem>>, vector<8x512xf32>
    tpu.vector_store %arg10[%c40, %c0_41], %59 {strides = array<i32>} : memref<73x512xf32, #tpu.memory_space<vmem>>, vector<8x512xf32>,
    %61 = vector.extract_strided_slice %17 {offsets = [0, 15], sizes = [8, 497], strides = [1, 1]} : vector<8x512xf32> to vector<8x497xf32>
    %62 = vector.extract_strided_slice %17 {offsets = [0, 0], sizes = [8, 15], strides = [1, 1]} : vector<8x512xf32> to vector<8x15xf32>
    %63 = tpu.concatenate %61, %62 in 1 : vector<8x497xf32>, vector<8x15xf32> -> vector<8x512xf32>
    %c6 = arith.constant 6 : index
    %c0_42 = arith.constant 0 : index
    %64 = vector.load %arg4[%c6, %c0_42] : memref<9x512xf32, #tpu.memory_space<vmem>>, vector<1x512xf32>
    %65 = vector.broadcast %64 : vector<1x512xf32> to vector<8x512xf32>
    %66 = arith.mulf %63, %65 : vector<8x512xf32>
    %c48 = arith.constant 48 : index
    %c0_43 = arith.constant 0 : index
    %67 = vector.load %arg10[%c48, %c0_43] : memref<73x512xf32, #tpu.memory_space<vmem>>, vector<8x512xf32>
    tpu.vector_store %arg10[%c48, %c0_43], %66 {strides = array<i32>} : memref<73x512xf32, #tpu.memory_space<vmem>>, vector<8x512xf32>,
    %68 = vector.extract_strided_slice %17 {offsets = [0, 16], sizes = [8, 496], strides = [1, 1]} : vector<8x512xf32> to vector<8x496xf32>
    %69 = vector.extract_strided_slice %17 {offsets = [0, 0], sizes = [8, 16], strides = [1, 1]} : vector<8x512xf32> to vector<8x16xf32>
    %70 = tpu.concatenate %68, %69 in 1 : vector<8x496xf32>, vector<8x16xf32> -> vector<8x512xf32>
    %c7 = arith.constant 7 : index
    %c0_44 = arith.constant 0 : index
    %71 = vector.load %arg4[%c7, %c0_44] : memref<9x512xf32, #tpu.memory_space<vmem>>, vector<1x512xf32>
    %72 = vector.broadcast %71 : vector<1x512xf32> to vector<8x512xf32>
    %73 = arith.mulf %70, %72 : vector<8x512xf32>
    %c56 = arith.constant 56 : index
    %c0_45 = arith.constant 0 : index
    %74 = vector.load %arg10[%c56, %c0_45] : memref<73x512xf32, #tpu.memory_space<vmem>>, vector<8x512xf32>
    tpu.vector_store %arg10[%c56, %c0_45], %73 {strides = array<i32>} : memref<73x512xf32, #tpu.memory_space<vmem>>, vector<8x512xf32>,
    %75 = vector.extract_strided_slice %17 {offsets = [0, 17], sizes = [8, 495], strides = [1, 1]} : vector<8x512xf32> to vector<8x495xf32>
    %76 = vector.extract_strided_slice %17 {offsets = [0, 0], sizes = [8, 17], strides = [1, 1]} : vector<8x512xf32> to vector<8x17xf32>
    %77 = tpu.concatenate %75, %76 in 1 : vector<8x495xf32>, vector<8x17xf32> -> vector<8x512xf32>
    %c8_46 = arith.constant 8 : index
    %c0_47 = arith.constant 0 : index
    %78 = vector.load %arg4[%c8_46, %c0_47] : memref<9x512xf32, #tpu.memory_space<vmem>>, vector<1x512xf32>
    %79 = vector.broadcast %78 : vector<1x512xf32> to vector<8x512xf32>
    %80 = arith.mulf %77, %79 : vector<8x512xf32>
    %c64 = arith.constant 64 : index
    %c0_48 = arith.constant 0 : index
    %81 = vector.load %arg10[%c64, %c0_48] : memref<73x512xf32, #tpu.memory_space<vmem>>, vector<8x512xf32>
    tpu.vector_store %arg10[%c64, %c0_48], %80 {strides = array<i32>} : memref<73x512xf32, #tpu.memory_space<vmem>>, vector<8x512xf32>,
    %c0_49 = arith.constant 0 : index
    %c0_50 = arith.constant 0 : index
    %82 = vector.load %arg10[%c0_49, %c0_50] : memref<73x512xf32, #tpu.memory_space<vmem>>, vector<73x512xf32>
    %cst_51 = arith.constant dense<0.000000e+00> : vector<8x512xf32>
    %83 = tpu.matmul %21, %82, %cst_51 {dimension_numbers = #tpu.dot_dimension_numbers<[1], [0], [0], [1], [0, 0, 1, 1], [], []>} : vector<8x73xf32>, vector<73x512xf32>, vector<8x512xf32> -> vector<8x512xf32>
    %cst_52 = arith.constant 0.00999999977 : f32
    %84 = vector.broadcast %cst_52 : f32 to vector<8x512xf32>
    %85 = arith.mulf %84, %83 : vector<8x512xf32>
    %86 = arith.maximumf %83, %85 : vector<8x512xf32>
    %c0_53 = arith.constant 0 : index
    %c0_54 = arith.constant 0 : index
    %c0_55 = arith.constant 0 : index
    %87 = vector.load %arg6[%c0_53, %c0_54, %c0_55] : memref<2x8x73xf32, #tpu.memory_space<vmem>>, vector<1x8x73xf32>
    %88 = vector.shape_cast %87 : vector<1x8x73xf32> to vector<8x73xf32>
    %89 = vector.extract_strided_slice %86 {offsets = [0, 495], sizes = [8, 17], strides = [1, 1]} : vector<8x512xf32> to vector<8x17xf32>
    %90 = vector.extract_strided_slice %86 {offsets = [0, 0], sizes = [8, 495], strides = [1, 1]} : vector<8x512xf32> to vector<8x495xf32>
    %91 = tpu.concatenate %89, %90 in 1 : vector<8x17xf32>, vector<8x495xf32> -> vector<8x512xf32>
    %c0_56 = arith.constant 0 : index
    %c0_57 = arith.constant 0 : index
    %92 = vector.load %arg4[%c0_56, %c0_57] : memref<9x512xf32, #tpu.memory_space<vmem>>, vector<1x512xf32>
    %93 = vector.broadcast %92 : vector<1x512xf32> to vector<8x512xf32>
    %94 = arith.mulf %91, %93 : vector<8x512xf32>
    %c0_58 = arith.constant 0 : index
    %c0_59 = arith.constant 0 : index
    %95 = vector.load %arg10[%c0_58, %c0_59] : memref<73x512xf32, #tpu.memory_space<vmem>>, vector<8x512xf32>
    tpu.vector_store %arg10[%c0_58, %c0_59], %94 {strides = array<i32>} : memref<73x512xf32, #tpu.memory_space<vmem>>, vector<8x512xf32>,
    %96 = vector.extract_strided_slice %86 {offsets = [0, 496], sizes = [8, 16], strides = [1, 1]} : vector<8x512xf32> to vector<8x16xf32>
    %97 = vector.extract_strided_slice %86 {offsets = [0, 0], sizes = [8, 496], strides = [1, 1]} : vector<8x512xf32> to vector<8x496xf32>
    %98 = tpu.concatenate %96, %97 in 1 : vector<8x16xf32>, vector<8x496xf32> -> vector<8x512xf32>
    %c1_60 = arith.constant 1 : index
    %c0_61 = arith.constant 0 : index
    %99 = vector.load %arg4[%c1_60, %c0_61] : memref<9x512xf32, #tpu.memory_space<vmem>>, vector<1x512xf32>
    %100 = vector.broadcast %99 : vector<1x512xf32> to vector<8x512xf32>
    %101 = arith.mulf %98, %100 : vector<8x512xf32>
    %c8_62 = arith.constant 8 : index
    %c0_63 = arith.constant 0 : index
    %102 = vector.load %arg10[%c8_62, %c0_63] : memref<73x512xf32, #tpu.memory_space<vmem>>, vector<8x512xf32>
    tpu.vector_store %arg10[%c8_62, %c0_63], %101 {strides = array<i32>} : memref<73x512xf32, #tpu.memory_space<vmem>>, vector<8x512xf32>,
    %103 = vector.extract_strided_slice %86 {offsets = [0, 497], sizes = [8, 15], strides = [1, 1]} : vector<8x512xf32> to vector<8x15xf32>
    %104 = vector.extract_strided_slice %86 {offsets = [0, 0], sizes = [8, 497], strides = [1, 1]} : vector<8x512xf32> to vector<8x497xf32>
    %105 = tpu.concatenate %103, %104 in 1 : vector<8x15xf32>, vector<8x497xf32> -> vector<8x512xf32>
    %c2_64 = arith.constant 2 : index
    %c0_65 = arith.constant 0 : index
    %106 = vector.load %arg4[%c2_64, %c0_65] : memref<9x512xf32, #tpu.memory_space<vmem>>, vector<1x512xf32>
    %107 = vector.broadcast %106 : vector<1x512xf32> to vector<8x512xf32>
    %108 = arith.mulf %105, %107 : vector<8x512xf32>
    %c16_66 = arith.constant 16 : index
    %c0_67 = arith.constant 0 : index
    %109 = vector.load %arg10[%c16_66, %c0_67] : memref<73x512xf32, #tpu.memory_space<vmem>>, vector<8x512xf32>
    tpu.vector_store %arg10[%c16_66, %c0_67], %108 {strides = array<i32>} : memref<73x512xf32, #tpu.memory_space<vmem>>, vector<8x512xf32>,
    %110 = vector.extract_strided_slice %86 {offsets = [0, 511], sizes = [8, 1], strides = [1, 1]} : vector<8x512xf32> to vector<8x1xf32>
    %111 = vector.extract_strided_slice %86 {offsets = [0, 0], sizes = [8, 511], strides = [1, 1]} : vector<8x512xf32> to vector<8x511xf32>
    %112 = tpu.concatenate %110, %111 in 1 : vector<8x1xf32>, vector<8x511xf32> -> vector<8x512xf32>
    %c3_68 = arith.constant 3 : index
    %c0_69 = arith.constant 0 : index
    %113 = vector.load %arg4[%c3_68, %c0_69] : memref<9x512xf32, #tpu.memory_space<vmem>>, vector<1x512xf32>
    %114 = vector.broadcast %113 : vector<1x512xf32> to vector<8x512xf32>
    %115 = arith.mulf %112, %114 : vector<8x512xf32>
    %c24_70 = arith.constant 24 : index
    %c0_71 = arith.constant 0 : index
    %116 = vector.load %arg10[%c24_70, %c0_71] : memref<73x512xf32, #tpu.memory_space<vmem>>, vector<8x512xf32>
    tpu.vector_store %arg10[%c24_70, %c0_71], %115 {strides = array<i32>} : memref<73x512xf32, #tpu.memory_space<vmem>>, vector<8x512xf32>,
    %c4_72 = arith.constant 4 : index
    %c0_73 = arith.constant 0 : index
    %117 = vector.load %arg4[%c4_72, %c0_73] : memref<9x512xf32, #tpu.memory_space<vmem>>, vector<1x512xf32>
    %118 = vector.broadcast %117 : vector<1x512xf32> to vector<8x512xf32>
    %119 = arith.mulf %86, %118 : vector<8x512xf32>
    %c32_74 = arith.constant 32 : index
    %c0_75 = arith.constant 0 : index
    %120 = vector.load %arg10[%c32_74, %c0_75] : memref<73x512xf32, #tpu.memory_space<vmem>>, vector<8x512xf32>
    tpu.vector_store %arg10[%c32_74, %c0_75], %119 {strides = array<i32>} : memref<73x512xf32, #tpu.memory_space<vmem>>, vector<8x512xf32>,
    %121 = vector.extract_strided_slice %86 {offsets = [0, 1], sizes = [8, 511], strides = [1, 1]} : vector<8x512xf32> to vector<8x511xf32>
    %122 = vector.extract_strided_slice %86 {offsets = [0, 0], sizes = [8, 1], strides = [1, 1]} : vector<8x512xf32> to vector<8x1xf32>
    %123 = tpu.concatenate %121, %122 in 1 : vector<8x511xf32>, vector<8x1xf32> -> vector<8x512xf32>
    %c5_76 = arith.constant 5 : index
    %c0_77 = arith.constant 0 : index
    %124 = vector.load %arg4[%c5_76, %c0_77] : memref<9x512xf32, #tpu.memory_space<vmem>>, vector<1x512xf32>
    %125 = vector.broadcast %124 : vector<1x512xf32> to vector<8x512xf32>
    %126 = arith.mulf %123, %125 : vector<8x512xf32>
    %c40_78 = arith.constant 40 : index
    %c0_79 = arith.constant 0 : index
    %127 = vector.load %arg10[%c40_78, %c0_79] : memref<73x512xf32, #tpu.memory_space<vmem>>, vector<8x512xf32>
    tpu.vector_store %arg10[%c40_78, %c0_79], %126 {strides = array<i32>} : memref<73x512xf32, #tpu.memory_space<vmem>>, vector<8x512xf32>,
    %128 = vector.extract_strided_slice %86 {offsets = [0, 15], sizes = [8, 497], strides = [1, 1]} : vector<8x512xf32> to vector<8x497xf32>
    %129 = vector.extract_strided_slice %86 {offsets = [0, 0], sizes = [8, 15], strides = [1, 1]} : vector<8x512xf32> to vector<8x15xf32>
    %130 = tpu.concatenate %128, %129 in 1 : vector<8x497xf32>, vector<8x15xf32> -> vector<8x512xf32>
    %c6_80 = arith.constant 6 : index
    %c0_81 = arith.constant 0 : index
    %131 = vector.load %arg4[%c6_80, %c0_81] : memref<9x512xf32, #tpu.memory_space<vmem>>, vector<1x512xf32>
    %132 = vector.broadcast %131 : vector<1x512xf32> to vector<8x512xf32>
    %133 = arith.mulf %130, %132 : vector<8x512xf32>
    %c48_82 = arith.constant 48 : index
    %c0_83 = arith.constant 0 : index
    %134 = vector.load %arg10[%c48_82, %c0_83] : memref<73x512xf32, #tpu.memory_space<vmem>>, vector<8x512xf32>
    tpu.vector_store %arg10[%c48_82, %c0_83], %133 {strides = array<i32>} : memref<73x512xf32, #tpu.memory_space<vmem>>, vector<8x512xf32>,
    %135 = vector.extract_strided_slice %86 {offsets = [0, 16], sizes = [8, 496], strides = [1, 1]} : vector<8x512xf32> to vector<8x496xf32>
    %136 = vector.extract_strided_slice %86 {offsets = [0, 0], sizes = [8, 16], strides = [1, 1]} : vector<8x512xf32> to vector<8x16xf32>
    %137 = tpu.concatenate %135, %136 in 1 : vector<8x496xf32>, vector<8x16xf32> -> vector<8x512xf32>
    %c7_84 = arith.constant 7 : index
    %c0_85 = arith.constant 0 : index
    %138 = vector.load %arg4[%c7_84, %c0_85] : memref<9x512xf32, #tpu.memory_space<vmem>>, vector<1x512xf32>
    %139 = vector.broadcast %138 : vector<1x512xf32> to vector<8x512xf32>
    %140 = arith.mulf %137, %139 : vector<8x512xf32>
    %c56_86 = arith.constant 56 : index
    %c0_87 = arith.constant 0 : index
    %141 = vector.load %arg10[%c56_86, %c0_87] : memref<73x512xf32, #tpu.memory_space<vmem>>, vector<8x512xf32>
    tpu.vector_store %arg10[%c56_86, %c0_87], %140 {strides = array<i32>} : memref<73x512xf32, #tpu.memory_space<vmem>>, vector<8x512xf32>,
    %142 = vector.extract_strided_slice %86 {offsets = [0, 17], sizes = [8, 495], strides = [1, 1]} : vector<8x512xf32> to vector<8x495xf32>
    %143 = vector.extract_strided_slice %86 {offsets = [0, 0], sizes = [8, 17], strides = [1, 1]} : vector<8x512xf32> to vector<8x17xf32>
    %144 = tpu.concatenate %142, %143 in 1 : vector<8x495xf32>, vector<8x17xf32> -> vector<8x512xf32>
    %c8_88 = arith.constant 8 : index
    %c0_89 = arith.constant 0 : index
    %145 = vector.load %arg4[%c8_88, %c0_89] : memref<9x512xf32, #tpu.memory_space<vmem>>, vector<1x512xf32>
    %146 = vector.broadcast %145 : vector<1x512xf32> to vector<8x512xf32>
    %147 = arith.mulf %144, %146 : vector<8x512xf32>
    %c64_90 = arith.constant 64 : index
    %c0_91 = arith.constant 0 : index
    %148 = vector.load %arg10[%c64_90, %c0_91] : memref<73x512xf32, #tpu.memory_space<vmem>>, vector<8x512xf32>
    tpu.vector_store %arg10[%c64_90, %c0_91], %147 {strides = array<i32>} : memref<73x512xf32, #tpu.memory_space<vmem>>, vector<8x512xf32>,
    %c0_92 = arith.constant 0 : index
    %c0_93 = arith.constant 0 : index
    %149 = vector.load %arg10[%c0_92, %c0_93] : memref<73x512xf32, #tpu.memory_space<vmem>>, vector<73x512xf32>
    %cst_94 = arith.constant dense<0.000000e+00> : vector<8x512xf32>
    %150 = tpu.matmul %88, %149, %cst_94 {dimension_numbers = #tpu.dot_dimension_numbers<[1], [0], [0], [1], [0, 0, 1, 1], [], []>} : vector<8x73xf32>, vector<73x512xf32>, vector<8x512xf32> -> vector<8x512xf32>
    %151 = arith.addf %17, %150 : vector<8x512xf32>
    %c1_95 = arith.constant 1 : index
    %c0_96 = arith.constant 0 : index
    %c0_97 = arith.constant 0 : index
    %152 = vector.load %arg5[%c1_95, %c0_96, %c0_97] : memref<2x8x73xf32, #tpu.memory_space<vmem>>, vector<1x8x73xf32>
    %153 = vector.shape_cast %152 : vector<1x8x73xf32> to vector<8x73xf32>
    %154 = vector.extract_strided_slice %151 {offsets = [0, 495], sizes = [8, 17], strides = [1, 1]} : vector<8x512xf32> to vector<8x17xf32>
    %155 = vector.extract_strided_slice %151 {offsets = [0, 0], sizes = [8, 495], strides = [1, 1]} : vector<8x512xf32> to vector<8x495xf32>
    %156 = tpu.concatenate %154, %155 in 1 : vector<8x17xf32>, vector<8x495xf32> -> vector<8x512xf32>
    %c0_98 = arith.constant 0 : index
    %c0_99 = arith.constant 0 : index
    %157 = vector.load %arg4[%c0_98, %c0_99] : memref<9x512xf32, #tpu.memory_space<vmem>>, vector<1x512xf32>
    %158 = vector.broadcast %157 : vector<1x512xf32> to vector<8x512xf32>
    %159 = arith.mulf %156, %158 : vector<8x512xf32>
    %c0_100 = arith.constant 0 : index
    %c0_101 = arith.constant 0 : index
    %160 = vector.load %arg10[%c0_100, %c0_101] : memref<73x512xf32, #tpu.memory_space<vmem>>, vector<8x512xf32>
    tpu.vector_store %arg10[%c0_100, %c0_101], %159 {strides = array<i32>} : memref<73x512xf32, #tpu.memory_space<vmem>>, vector<8x512xf32>,
    %161 = vector.extract_strided_slice %151 {offsets = [0, 496], sizes = [8, 16], strides = [1, 1]} : vector<8x512xf32> to vector<8x16xf32>
    %162 = vector.extract_strided_slice %151 {offsets = [0, 0], sizes = [8, 496], strides = [1, 1]} : vector<8x512xf32> to vector<8x496xf32>
    %163 = tpu.concatenate %161, %162 in 1 : vector<8x16xf32>, vector<8x496xf32> -> vector<8x512xf32>
    %c1_102 = arith.constant 1 : index
    %c0_103 = arith.constant 0 : index
    %164 = vector.load %arg4[%c1_102, %c0_103] : memref<9x512xf32, #tpu.memory_space<vmem>>, vector<1x512xf32>
    %165 = vector.broadcast %164 : vector<1x512xf32> to vector<8x512xf32>
    %166 = arith.mulf %163, %165 : vector<8x512xf32>
    %c8_104 = arith.constant 8 : index
    %c0_105 = arith.constant 0 : index
    %167 = vector.load %arg10[%c8_104, %c0_105] : memref<73x512xf32, #tpu.memory_space<vmem>>, vector<8x512xf32>
    tpu.vector_store %arg10[%c8_104, %c0_105], %166 {strides = array<i32>} : memref<73x512xf32, #tpu.memory_space<vmem>>, vector<8x512xf32>,
    %168 = vector.extract_strided_slice %151 {offsets = [0, 497], sizes = [8, 15], strides = [1, 1]} : vector<8x512xf32> to vector<8x15xf32>
    %169 = vector.extract_strided_slice %151 {offsets = [0, 0], sizes = [8, 497], strides = [1, 1]} : vector<8x512xf32> to vector<8x497xf32>
    %170 = tpu.concatenate %168, %169 in 1 : vector<8x15xf32>, vector<8x497xf32> -> vector<8x512xf32>
    %c2_106 = arith.constant 2 : index
    %c0_107 = arith.constant 0 : index
    %171 = vector.load %arg4[%c2_106, %c0_107] : memref<9x512xf32, #tpu.memory_space<vmem>>, vector<1x512xf32>
    %172 = vector.broadcast %171 : vector<1x512xf32> to vector<8x512xf32>
    %173 = arith.mulf %170, %172 : vector<8x512xf32>
    %c16_108 = arith.constant 16 : index
    %c0_109 = arith.constant 0 : index
    %174 = vector.load %arg10[%c16_108, %c0_109] : memref<73x512xf32, #tpu.memory_space<vmem>>, vector<8x512xf32>
    tpu.vector_store %arg10[%c16_108, %c0_109], %173 {strides = array<i32>} : memref<73x512xf32, #tpu.memory_space<vmem>>, vector<8x512xf32>,
    %175 = vector.extract_strided_slice %151 {offsets = [0, 511], sizes = [8, 1], strides = [1, 1]} : vector<8x512xf32> to vector<8x1xf32>
    %176 = vector.extract_strided_slice %151 {offsets = [0, 0], sizes = [8, 511], strides = [1, 1]} : vector<8x512xf32> to vector<8x511xf32>
    %177 = tpu.concatenate %175, %176 in 1 : vector<8x1xf32>, vector<8x511xf32> -> vector<8x512xf32>
    %c3_110 = arith.constant 3 : index
    %c0_111 = arith.constant 0 : index
    %178 = vector.load %arg4[%c3_110, %c0_111] : memref<9x512xf32, #tpu.memory_space<vmem>>, vector<1x512xf32>
    %179 = vector.broadcast %178 : vector<1x512xf32> to vector<8x512xf32>
    %180 = arith.mulf %177, %179 : vector<8x512xf32>
    %c24_112 = arith.constant 24 : index
    %c0_113 = arith.constant 0 : index
    %181 = vector.load %arg10[%c24_112, %c0_113] : memref<73x512xf32, #tpu.memory_space<vmem>>, vector<8x512xf32>
    tpu.vector_store %arg10[%c24_112, %c0_113], %180 {strides = array<i32>} : memref<73x512xf32, #tpu.memory_space<vmem>>, vector<8x512xf32>,
    %c4_114 = arith.constant 4 : index
    %c0_115 = arith.constant 0 : index
    %182 = vector.load %arg4[%c4_114, %c0_115] : memref<9x512xf32, #tpu.memory_space<vmem>>, vector<1x512xf32>
    %183 = vector.broadcast %182 : vector<1x512xf32> to vector<8x512xf32>
    %184 = arith.mulf %151, %183 : vector<8x512xf32>
    %c32_116 = arith.constant 32 : index
    %c0_117 = arith.constant 0 : index
    %185 = vector.load %arg10[%c32_116, %c0_117] : memref<73x512xf32, #tpu.memory_space<vmem>>, vector<8x512xf32>
    tpu.vector_store %arg10[%c32_116, %c0_117], %184 {strides = array<i32>} : memref<73x512xf32, #tpu.memory_space<vmem>>, vector<8x512xf32>,
    %186 = vector.extract_strided_slice %151 {offsets = [0, 1], sizes = [8, 511], strides = [1, 1]} : vector<8x512xf32> to vector<8x511xf32>
    %187 = vector.extract_strided_slice %151 {offsets = [0, 0], sizes = [8, 1], strides = [1, 1]} : vector<8x512xf32> to vector<8x1xf32>
    %188 = tpu.concatenate %186, %187 in 1 : vector<8x511xf32>, vector<8x1xf32> -> vector<8x512xf32>
    %c5_118 = arith.constant 5 : index
    %c0_119 = arith.constant 0 : index
    %189 = vector.load %arg4[%c5_118, %c0_119] : memref<9x512xf32, #tpu.memory_space<vmem>>, vector<1x512xf32>
    %190 = vector.broadcast %189 : vector<1x512xf32> to vector<8x512xf32>
    %191 = arith.mulf %188, %190 : vector<8x512xf32>
    %c40_120 = arith.constant 40 : index
    %c0_121 = arith.constant 0 : index
    %192 = vector.load %arg10[%c40_120, %c0_121] : memref<73x512xf32, #tpu.memory_space<vmem>>, vector<8x512xf32>
    tpu.vector_store %arg10[%c40_120, %c0_121], %191 {strides = array<i32>} : memref<73x512xf32, #tpu.memory_space<vmem>>, vector<8x512xf32>,
    %193 = vector.extract_strided_slice %151 {offsets = [0, 15], sizes = [8, 497], strides = [1, 1]} : vector<8x512xf32> to vector<8x497xf32>
    %194 = vector.extract_strided_slice %151 {offsets = [0, 0], sizes = [8, 15], strides = [1, 1]} : vector<8x512xf32> to vector<8x15xf32>
    %195 = tpu.concatenate %193, %194 in 1 : vector<8x497xf32>, vector<8x15xf32> -> vector<8x512xf32>
    %c6_122 = arith.constant 6 : index
    %c0_123 = arith.constant 0 : index
    %196 = vector.load %arg4[%c6_122, %c0_123] : memref<9x512xf32, #tpu.memory_space<vmem>>, vector<1x512xf32>
    %197 = vector.broadcast %196 : vector<1x512xf32> to vector<8x512xf32>
    %198 = arith.mulf %195, %197 : vector<8x512xf32>
    %c48_124 = arith.constant 48 : index
    %c0_125 = arith.constant 0 : index
    %199 = vector.load %arg10[%c48_124, %c0_125] : memref<73x512xf32, #tpu.memory_space<vmem>>, vector<8x512xf32>
    tpu.vector_store %arg10[%c48_124, %c0_125], %198 {strides = array<i32>} : memref<73x512xf32, #tpu.memory_space<vmem>>, vector<8x512xf32>,
    %200 = vector.extract_strided_slice %151 {offsets = [0, 16], sizes = [8, 496], strides = [1, 1]} : vector<8x512xf32> to vector<8x496xf32>
    %201 = vector.extract_strided_slice %151 {offsets = [0, 0], sizes = [8, 16], strides = [1, 1]} : vector<8x512xf32> to vector<8x16xf32>
    %202 = tpu.concatenate %200, %201 in 1 : vector<8x496xf32>, vector<8x16xf32> -> vector<8x512xf32>
    %c7_126 = arith.constant 7 : index
    %c0_127 = arith.constant 0 : index
    %203 = vector.load %arg4[%c7_126, %c0_127] : memref<9x512xf32, #tpu.memory_space<vmem>>, vector<1x512xf32>
    %204 = vector.broadcast %203 : vector<1x512xf32> to vector<8x512xf32>
    %205 = arith.mulf %202, %204 : vector<8x512xf32>
    %c56_128 = arith.constant 56 : index
    %c0_129 = arith.constant 0 : index
    %206 = vector.load %arg10[%c56_128, %c0_129] : memref<73x512xf32, #tpu.memory_space<vmem>>, vector<8x512xf32>
    tpu.vector_store %arg10[%c56_128, %c0_129], %205 {strides = array<i32>} : memref<73x512xf32, #tpu.memory_space<vmem>>, vector<8x512xf32>,
    %207 = vector.extract_strided_slice %151 {offsets = [0, 17], sizes = [8, 495], strides = [1, 1]} : vector<8x512xf32> to vector<8x495xf32>
    %208 = vector.extract_strided_slice %151 {offsets = [0, 0], sizes = [8, 17], strides = [1, 1]} : vector<8x512xf32> to vector<8x17xf32>
    %209 = tpu.concatenate %207, %208 in 1 : vector<8x495xf32>, vector<8x17xf32> -> vector<8x512xf32>
    %c8_130 = arith.constant 8 : index
    %c0_131 = arith.constant 0 : index
    %210 = vector.load %arg4[%c8_130, %c0_131] : memref<9x512xf32, #tpu.memory_space<vmem>>, vector<1x512xf32>
    %211 = vector.broadcast %210 : vector<1x512xf32> to vector<8x512xf32>
    %212 = arith.mulf %209, %211 : vector<8x512xf32>
    %c64_132 = arith.constant 64 : index
    %c0_133 = arith.constant 0 : index
    %213 = vector.load %arg10[%c64_132, %c0_133] : memref<73x512xf32, #tpu.memory_space<vmem>>, vector<8x512xf32>
    tpu.vector_store %arg10[%c64_132, %c0_133], %212 {strides = array<i32>} : memref<73x512xf32, #tpu.memory_space<vmem>>, vector<8x512xf32>,
    %c0_134 = arith.constant 0 : index
    %c0_135 = arith.constant 0 : index
    %214 = vector.load %arg10[%c0_134, %c0_135] : memref<73x512xf32, #tpu.memory_space<vmem>>, vector<73x512xf32>
    %cst_136 = arith.constant dense<0.000000e+00> : vector<8x512xf32>
    %215 = tpu.matmul %153, %214, %cst_136 {dimension_numbers = #tpu.dot_dimension_numbers<[1], [0], [0], [1], [0, 0, 1, 1], [], []>} : vector<8x73xf32>, vector<73x512xf32>, vector<8x512xf32> -> vector<8x512xf32>
    %cst_137 = arith.constant 0.00999999977 : f32
    %216 = vector.broadcast %cst_137 : f32 to vector<8x512xf32>
    %217 = arith.mulf %216, %215 : vector<8x512xf32>
    %218 = arith.maximumf %215, %217 : vector<8x512xf32>
    %c1_138 = arith.constant 1 : index
    %c0_139 = arith.constant 0 : index
    %c0_140 = arith.constant 0 : index
    %219 = vector.load %arg6[%c1_138, %c0_139, %c0_140] : memref<2x8x73xf32, #tpu.memory_space<vmem>>, vector<1x8x73xf32>
    %220 = vector.shape_cast %219 : vector<1x8x73xf32> to vector<8x73xf32>
    %221 = vector.extract_strided_slice %218 {offsets = [0, 495], sizes = [8, 17], strides = [1, 1]} : vector<8x512xf32> to vector<8x17xf32>
    %222 = vector.extract_strided_slice %218 {offsets = [0, 0], sizes = [8, 495], strides = [1, 1]} : vector<8x512xf32> to vector<8x495xf32>
    %223 = tpu.concatenate %221, %222 in 1 : vector<8x17xf32>, vector<8x495xf32> -> vector<8x512xf32>
    %c0_141 = arith.constant 0 : index
    %c0_142 = arith.constant 0 : index
    %224 = vector.load %arg4[%c0_141, %c0_142] : memref<9x512xf32, #tpu.memory_space<vmem>>, vector<1x512xf32>
    %225 = vector.broadcast %224 : vector<1x512xf32> to vector<8x512xf32>
    %226 = arith.mulf %223, %225 : vector<8x512xf32>
    %c0_143 = arith.constant 0 : index
    %c0_144 = arith.constant 0 : index
    %227 = vector.load %arg10[%c0_143, %c0_144] : memref<73x512xf32, #tpu.memory_space<vmem>>, vector<8x512xf32>
    tpu.vector_store %arg10[%c0_143, %c0_144], %226 {strides = array<i32>} : memref<73x512xf32, #tpu.memory_space<vmem>>, vector<8x512xf32>,
    %228 = vector.extract_strided_slice %218 {offsets = [0, 496], sizes = [8, 16], strides = [1, 1]} : vector<8x512xf32> to vector<8x16xf32>
    %229 = vector.extract_strided_slice %218 {offsets = [0, 0], sizes = [8, 496], strides = [1, 1]} : vector<8x512xf32> to vector<8x496xf32>
    %230 = tpu.concatenate %228, %229 in 1 : vector<8x16xf32>, vector<8x496xf32> -> vector<8x512xf32>
    %c1_145 = arith.constant 1 : index
    %c0_146 = arith.constant 0 : index
    %231 = vector.load %arg4[%c1_145, %c0_146] : memref<9x512xf32, #tpu.memory_space<vmem>>, vector<1x512xf32>
    %232 = vector.broadcast %231 : vector<1x512xf32> to vector<8x512xf32>
    %233 = arith.mulf %230, %232 : vector<8x512xf32>
    %c8_147 = arith.constant 8 : index
    %c0_148 = arith.constant 0 : index
    %234 = vector.load %arg10[%c8_147, %c0_148] : memref<73x512xf32, #tpu.memory_space<vmem>>, vector<8x512xf32>
    tpu.vector_store %arg10[%c8_147, %c0_148], %233 {strides = array<i32>} : memref<73x512xf32, #tpu.memory_space<vmem>>, vector<8x512xf32>,
    %235 = vector.extract_strided_slice %218 {offsets = [0, 497], sizes = [8, 15], strides = [1, 1]} : vector<8x512xf32> to vector<8x15xf32>
    %236 = vector.extract_strided_slice %218 {offsets = [0, 0], sizes = [8, 497], strides = [1, 1]} : vector<8x512xf32> to vector<8x497xf32>
    %237 = tpu.concatenate %235, %236 in 1 : vector<8x15xf32>, vector<8x497xf32> -> vector<8x512xf32>
    %c2_149 = arith.constant 2 : index
    %c0_150 = arith.constant 0 : index
    %238 = vector.load %arg4[%c2_149, %c0_150] : memref<9x512xf32, #tpu.memory_space<vmem>>, vector<1x512xf32>
    %239 = vector.broadcast %238 : vector<1x512xf32> to vector<8x512xf32>
    %240 = arith.mulf %237, %239 : vector<8x512xf32>
    %c16_151 = arith.constant 16 : index
    %c0_152 = arith.constant 0 : index
    %241 = vector.load %arg10[%c16_151, %c0_152] : memref<73x512xf32, #tpu.memory_space<vmem>>, vector<8x512xf32>
    tpu.vector_store %arg10[%c16_151, %c0_152], %240 {strides = array<i32>} : memref<73x512xf32, #tpu.memory_space<vmem>>, vector<8x512xf32>,
    %242 = vector.extract_strided_slice %218 {offsets = [0, 511], sizes = [8, 1], strides = [1, 1]} : vector<8x512xf32> to vector<8x1xf32>
    %243 = vector.extract_strided_slice %218 {offsets = [0, 0], sizes = [8, 511], strides = [1, 1]} : vector<8x512xf32> to vector<8x511xf32>
    %244 = tpu.concatenate %242, %243 in 1 : vector<8x1xf32>, vector<8x511xf32> -> vector<8x512xf32>
    %c3_153 = arith.constant 3 : index
    %c0_154 = arith.constant 0 : index
    %245 = vector.load %arg4[%c3_153, %c0_154] : memref<9x512xf32, #tpu.memory_space<vmem>>, vector<1x512xf32>
    %246 = vector.broadcast %245 : vector<1x512xf32> to vector<8x512xf32>
    %247 = arith.mulf %244, %246 : vector<8x512xf32>
    %c24_155 = arith.constant 24 : index
    %c0_156 = arith.constant 0 : index
    %248 = vector.load %arg10[%c24_155, %c0_156] : memref<73x512xf32, #tpu.memory_space<vmem>>, vector<8x512xf32>
    tpu.vector_store %arg10[%c24_155, %c0_156], %247 {strides = array<i32>} : memref<73x512xf32, #tpu.memory_space<vmem>>, vector<8x512xf32>,
    %c4_157 = arith.constant 4 : index
    %c0_158 = arith.constant 0 : index
    %249 = vector.load %arg4[%c4_157, %c0_158] : memref<9x512xf32, #tpu.memory_space<vmem>>, vector<1x512xf32>
    %250 = vector.broadcast %249 : vector<1x512xf32> to vector<8x512xf32>
    %251 = arith.mulf %218, %250 : vector<8x512xf32>
    %c32_159 = arith.constant 32 : index
    %c0_160 = arith.constant 0 : index
    %252 = vector.load %arg10[%c32_159, %c0_160] : memref<73x512xf32, #tpu.memory_space<vmem>>, vector<8x512xf32>
    tpu.vector_store %arg10[%c32_159, %c0_160], %251 {strides = array<i32>} : memref<73x512xf32, #tpu.memory_space<vmem>>, vector<8x512xf32>,
    %253 = vector.extract_strided_slice %218 {offsets = [0, 1], sizes = [8, 511], strides = [1, 1]} : vector<8x512xf32> to vector<8x511xf32>
    %254 = vector.extract_strided_slice %218 {offsets = [0, 0], sizes = [8, 1], strides = [1, 1]} : vector<8x512xf32> to vector<8x1xf32>
    %255 = tpu.concatenate %253, %254 in 1 : vector<8x511xf32>, vector<8x1xf32> -> vector<8x512xf32>
    %c5_161 = arith.constant 5 : index
    %c0_162 = arith.constant 0 : index
    %256 = vector.load %arg4[%c5_161, %c0_162] : memref<9x512xf32, #tpu.memory_space<vmem>>, vector<1x512xf32>
    %257 = vector.broadcast %256 : vector<1x512xf32> to vector<8x512xf32>
    %258 = arith.mulf %255, %257 : vector<8x512xf32>
    %c40_163 = arith.constant 40 : index
    %c0_164 = arith.constant 0 : index
    %259 = vector.load %arg10[%c40_163, %c0_164] : memref<73x512xf32, #tpu.memory_space<vmem>>, vector<8x512xf32>
    tpu.vector_store %arg10[%c40_163, %c0_164], %258 {strides = array<i32>} : memref<73x512xf32, #tpu.memory_space<vmem>>, vector<8x512xf32>,
    %260 = vector.extract_strided_slice %218 {offsets = [0, 15], sizes = [8, 497], strides = [1, 1]} : vector<8x512xf32> to vector<8x497xf32>
    %261 = vector.extract_strided_slice %218 {offsets = [0, 0], sizes = [8, 15], strides = [1, 1]} : vector<8x512xf32> to vector<8x15xf32>
    %262 = tpu.concatenate %260, %261 in 1 : vector<8x497xf32>, vector<8x15xf32> -> vector<8x512xf32>
    %c6_165 = arith.constant 6 : index
    %c0_166 = arith.constant 0 : index
    %263 = vector.load %arg4[%c6_165, %c0_166] : memref<9x512xf32, #tpu.memory_space<vmem>>, vector<1x512xf32>
    %264 = vector.broadcast %263 : vector<1x512xf32> to vector<8x512xf32>
    %265 = arith.mulf %262, %264 : vector<8x512xf32>
    %c48_167 = arith.constant 48 : index
    %c0_168 = arith.constant 0 : index
    %266 = vector.load %arg10[%c48_167, %c0_168] : memref<73x512xf32, #tpu.memory_space<vmem>>, vector<8x512xf32>
    tpu.vector_store %arg10[%c48_167, %c0_168], %265 {strides = array<i32>} : memref<73x512xf32, #tpu.memory_space<vmem>>, vector<8x512xf32>,
    %267 = vector.extract_strided_slice %218 {offsets = [0, 16], sizes = [8, 496], strides = [1, 1]} : vector<8x512xf32> to vector<8x496xf32>
    %268 = vector.extract_strided_slice %218 {offsets = [0, 0], sizes = [8, 16], strides = [1, 1]} : vector<8x512xf32> to vector<8x16xf32>
    %269 = tpu.concatenate %267, %268 in 1 : vector<8x496xf32>, vector<8x16xf32> -> vector<8x512xf32>
    %c7_169 = arith.constant 7 : index
    %c0_170 = arith.constant 0 : index
    %270 = vector.load %arg4[%c7_169, %c0_170] : memref<9x512xf32, #tpu.memory_space<vmem>>, vector<1x512xf32>
    %271 = vector.broadcast %270 : vector<1x512xf32> to vector<8x512xf32>
    %272 = arith.mulf %269, %271 : vector<8x512xf32>
    %c56_171 = arith.constant 56 : index
    %c0_172 = arith.constant 0 : index
    %273 = vector.load %arg10[%c56_171, %c0_172] : memref<73x512xf32, #tpu.memory_space<vmem>>, vector<8x512xf32>
    tpu.vector_store %arg10[%c56_171, %c0_172], %272 {strides = array<i32>} : memref<73x512xf32, #tpu.memory_space<vmem>>, vector<8x512xf32>,
    %274 = vector.extract_strided_slice %218 {offsets = [0, 17], sizes = [8, 495], strides = [1, 1]} : vector<8x512xf32> to vector<8x495xf32>
    %275 = vector.extract_strided_slice %218 {offsets = [0, 0], sizes = [8, 17], strides = [1, 1]} : vector<8x512xf32> to vector<8x17xf32>
    %276 = tpu.concatenate %274, %275 in 1 : vector<8x495xf32>, vector<8x17xf32> -> vector<8x512xf32>
    %c8_173 = arith.constant 8 : index
    %c0_174 = arith.constant 0 : index
    %277 = vector.load %arg4[%c8_173, %c0_174] : memref<9x512xf32, #tpu.memory_space<vmem>>, vector<1x512xf32>
    %278 = vector.broadcast %277 : vector<1x512xf32> to vector<8x512xf32>
    %279 = arith.mulf %276, %278 : vector<8x512xf32>
    %c64_175 = arith.constant 64 : index
    %c0_176 = arith.constant 0 : index
    %280 = vector.load %arg10[%c64_175, %c0_176] : memref<73x512xf32, #tpu.memory_space<vmem>>, vector<8x512xf32>
    tpu.vector_store %arg10[%c64_175, %c0_176], %279 {strides = array<i32>} : memref<73x512xf32, #tpu.memory_space<vmem>>, vector<8x512xf32>,
    %c0_177 = arith.constant 0 : index
    %c0_178 = arith.constant 0 : index
    %281 = vector.load %arg10[%c0_177, %c0_178] : memref<73x512xf32, #tpu.memory_space<vmem>>, vector<73x512xf32>
    %cst_179 = arith.constant dense<0.000000e+00> : vector<8x512xf32>
    %282 = tpu.matmul %220, %281, %cst_179 {dimension_numbers = #tpu.dot_dimension_numbers<[1], [0], [0], [1], [0, 0, 1, 1], [], []>} : vector<8x73xf32>, vector<73x512xf32>, vector<8x512xf32> -> vector<8x512xf32>
    %283 = arith.addf %151, %282 : vector<8x512xf32>
    %c0_180 = arith.constant 0 : index
    %c0_181 = arith.constant 0 : index
    %284 = vector.load %arg8[%c0_180, %c0_181] : memref<8x512xf32, #tpu.memory_space<vmem>>, vector<8x512xf32>
    tpu.vector_store %arg8[%c0_180, %c0_181], %283 {strides = array<i32>} : memref<8x512xf32, #tpu.memory_space<vmem>>, vector<8x512xf32>,
    return
  }
  func.func @transform_0(%arg0: i32) -> (i32, i32, i32) {
    %c0_i32 = arith.constant 0 : i32
    %c0_i32_0 = arith.constant 0 : i32
    %c0_i32_1 = arith.constant 0 : i32
    %c0_i32_2 = arith.constant 0 : i32
    return %c0_i32, %c0_i32_0, %c0_i32_1 : i32, i32, i32
  }
  func.func @transform_1(%arg0: i32) -> (i32, i32) {
    %c0_i32 = arith.constant 0 : i32
    %c0_i32_0 = arith.constant 0 : i32
    %c0_i32_1 = arith.constant 0 : i32
    return %c0_i32, %c0_i32_0 : i32, i32
  }
  func.func @transform_2(%arg0: i32) -> (i32, i32) {
    %c0_i32 = arith.constant 0 : i32
    %c0_i32_0 = arith.constant 0 : i32
    %c0_i32_1 = arith.constant 0 : i32
    return %c0_i32, %c0_i32_0 : i32, i32
  }
  func.func @transform_3(%arg0: i32) -> (i32, i32) {
    %c0_i32 = arith.constant 0 : i32
    %c0_i32_0 = arith.constant 0 : i32
    %c0_i32_1 = arith.constant 0 : i32
    return %c0_i32, %c0_i32_0 : i32, i32
  }
  func.func @transform_4(%arg0: i32) -> (i32, i32, i32) {
    %c0_i32 = arith.constant 0 : i32
    %c0_i32_0 = arith.constant 0 : i32
    %c0_i32_1 = arith.constant 0 : i32
    %c0_i32_2 = arith.constant 0 : i32
    return %c0_i32, %c0_i32_0, %c0_i32_1 : i32, i32, i32
  }
  func.func @transform_5(%arg0: i32) -> (i32, i32, i32) {
    %c0_i32 = arith.constant 0 : i32
    %c0_i32_0 = arith.constant 0 : i32
    %c0_i32_1 = arith.constant 0 : i32
    %c0_i32_2 = arith.constant 0 : i32
    return %c0_i32, %c0_i32_0, %c0_i32_1 : i32, i32, i32
  }
  func.func @transform_6(%arg0: i32) -> (i32, i32) {
    %c0_i32 = arith.constant 0 : i32
    %c0_i32_0 = arith.constant 0 : i32
    %c0_i32_1 = arith.constant 0 : i32
    return %c0_i32, %c0_i32_0 : i32, i32
  }
  func.func @transform_7(%arg0: i32) -> (i32, i32) {
    %c0_i32 = arith.constant 0 : i32
    %c0_i32_0 = arith.constant 0 : i32
    %c0_i32_1 = arith.constant 0 : i32
    return %c0_i32, %c0_i32_0 : i32, i32
  }
}

</mosaic_0001>

<llo_original>
// kernel: resizer_forward.1
$region0: #{resizer_forward.1}
  #allocation0 [shape = 'u32[]', space=smem, size = 0x4, offset = 0x4, fixed_abs, tag = 'smem constant byte address 0x4 - core index']
  #allocation1 [shape = 'u32[144,128]{1,0:T(1,128)}', space=vmem, size = 0x12000, scoped, tag = 'internal scratch']
  #allocation2 [shape = 'f32[9,512]{1,0:T(8,128)}', space=vmem, size = 0x8000, scoped, tag = 'scratch operand']
  #allocation3 [shape = 'f32[73,512]{1,0:T(8,128)}', space=vmem, size = 0x28000, scoped, tag = 'scratch operand']
  %s0 = inlined_call_operand.vmem [shape: f32[2,8,64], index: 0, kind: input, shape index: {}]
  %s1 = inlined_call_operand.vmem [shape: f32[16,9], index: 1, kind: input, shape index: {}]
  %s2 = inlined_call_operand.vmem [shape: f32[64,256], index: 2, kind: input, shape index: {}]
  %s3 = inlined_call_operand.vmem [shape: f32[9,512], index: 3, kind: input, shape index: {}]
  %s4 = inlined_call_operand.vmem [shape: f32[2,8,73], index: 4, kind: input, shape index: {}]
  %s5 = inlined_call_operand.vmem [shape: f32[2,8,73], index: 5, kind: input, shape index: {}]
  %s6 = inlined_call_operand.vmem [shape: f32[8,512], index: 6, kind: output, shape index: {0}]
  %s7 = inlined_call_operand.vmem [shape: f32[8,512], index: 7, kind: output, shape index: {1}]
  %8 = xla_tuple %s6, %s7
  %s9 = sld [smem:[#allocation0]]
  $region42: #{resizer_forward.1} parent=0
    _
  %s11 = ssub.s32 1, %s9
  %s12 = scalar_select 0, %s11, %s9
  // Predicated region
  $region2: #{resizer_forward.1} parent=0 // pred_check
    _
  $region3: #{resizer_forward.1} parent=0 // pred_check_branch
    %14 = sbr.rel (0) target = $region5
  $region4: #{resizer_forward.1} parent=0 // pred_region
    _
  $region5: #{resizer_forward.1} parent=0 // pred_fallthru
    _
  // Predicated region
  $region6: #{resizer_forward.1} parent=0 // pred_check
    _
  $region7: #{resizer_forward.1} parent=0 // pred_check_branch
    %16 = sbr.rel (0) target = $region9
  $region8: #{resizer_forward.1} parent=0 // pred_region
    _
  $region9: #{resizer_forward.1} parent=0 // pred_fallthru
    _
  // Predicated region
  $region10: #{resizer_forward.1} parent=0 // pred_check
    _
  $region11: #{resizer_forward.1} parent=0 // pred_check_branch
    %18 = sbr.rel (0) target = $region13
  $region12: #{resizer_forward.1} parent=0 // pred_region
    _
  $region13: #{resizer_forward.1} parent=0 // pred_fallthru
    _
  // Predicated region
  $region14: #{resizer_forward.1} parent=0 // pred_check
    _
  $region15: #{resizer_forward.1} parent=0 // pred_check_branch
    %20 = sbr.rel (0) target = $region17
  $region16: #{resizer_forward.1} parent=0 // pred_region
    _
  $region17: #{resizer_forward.1} parent=0 // pred_fallthru
    _
  // Predicated region
  $region18: #{resizer_forward.1} parent=0 // pred_check
    _
  $region19: #{resizer_forward.1} parent=0 // pred_check_branch
    %22 = sbr.rel (0) target = $region21
  $region20: #{resizer_forward.1} parent=0 // pred_region
    _
  $region21: #{resizer_forward.1} parent=0 // pred_fallthru
    _
  // Predicated region
  $region22: #{resizer_forward.1} parent=0 // pred_check
    _
  $region23: #{resizer_forward.1} parent=0 // pred_check_branch
    %24 = sbr.rel (0) target = $region25
  $region24: #{resizer_forward.1} parent=0 // pred_region
    _
  $region25: #{resizer_forward.1} parent=0 // pred_fallthru
    _
  %v25 = vld [vmem:[%s0] sm:$0xff]
  %v26 = vld [vmem:[%s2] sm:$0xff]
  %v27 = vld [vmem:[%s2 + $0x8] sm:$0xff]
  %v28 = vld [vmem:[%s2 + $0x10] sm:$0xff]
  %v29 = vld [vmem:[%s2 + $0x18] sm:$0xff]
  %v30 = vld [vmem:[%s2 + $0x20] sm:$0xff]
  %v31 = vld [vmem:[%s2 + $0x28] sm:$0xff]
  %v32 = vld [vmem:[%s2 + $0x30] sm:$0xff]
  %v33 = vld [vmem:[%s2 + $0x38] sm:$0xff]
  %v34 = vld [vmem:[%s2 + $0x40] sm:$0xff]
  %v35 = vld [vmem:[%s2 + $0x48] sm:$0xff]
  %v36 = vld [vmem:[%s2 + $0x50] sm:$0xff]
  %v37 = vld [vmem:[%s2 + $0x58] sm:$0xff]
  %v38 = vld [vmem:[%s2 + $0x60] sm:$0xff]
  %v39 = vld [vmem:[%s2 + $0x68] sm:$0xff]
  %v40 = vld [vmem:[%s2 + $0x70] sm:$0xff]
  %v41 = vld [vmem:[%s2 + $0x78] sm:$0xff]
  %vm42 = vcmask 523264
  %v44 = vsel %vm42, %v25, 0
  %46 = vmatprep.subr.mxu0 %v27
  %47 = vmatpush1.msra.mxu0 %v26
  %48 = vmatprep.subr.mxu0 %v29
  %49 = vmatpush1.msra.mxu0 %v28
  %50 = vmatprep.subr.mxu0 %v31
  %51 = vmatpush1.msra.mxu0 %v30
  %52 = vmatprep.subr.mxu0 %v33
  %53 = vmatpush1.msra.mxu0 %v32
  %54 = vmatprep.subr.mxu0 %v35
  %55 = vmatpush1.msra.mxu0 %v34
  %56 = vmatprep.subr.mxu0 %v37
  %57 = vmatpush1.msra.mxu0 %v36
  %58 = vmatprep.subr.mxu0 %v39
  %59 = vmatpush1.msra.mxu0 %v38
  %60 = vmatprep.subr.mxu0 %v41
  %61 = vmatpush1.msra.mxu0 %v40
  %62 = vmatprep.subr.mxu0 0.0
  %63 = vmatpush1.msra.mxu0 0.0
  %64 = vmatprep.subr.mxu0 0.0
  %65 = vmatpush1.msra.mxu0 0.0
  %66 = vmatprep.subr.mxu0 0.0
  %67 = vmatpush1.msra.mxu0 0.0
  %68 = vmatprep.subr.mxu0 0.0
  %69 = vmatpush1.msra.mxu0 0.0
  %70 = vmatprep.subr.mxu0 0.0
  %71 = vmatpush1.msra.mxu0 0.0
  %72 = vmatprep.subr.mxu0 0.0
  %73 = vmatpush1.msra.mxu0 0.0
  %74 = vmatprep.subr.mxu0 0.0
  %75 = vmatpush1.msra.mxu0 0.0
  %76 = vmatprep.subr.mxu0 0.0
  %77 = vmatpush1.msra.mxu0 0.0
  %78 = vmatprep.subr.mxu0 0.0
  %79 = vmatpush1.msra.mxu0 0.0
  %80 = vmatprep.subr.mxu0 0.0
  %81 = vmatpush1.msra.mxu0 0.0
  %82 = vmatprep.subr.mxu0 0.0
  %83 = vmatpush1.msra.mxu0 0.0
  %84 = vmatprep.subr.mxu0 0.0
  %85 = vmatpush1.msra.mxu0 0.0
  %86 = vmatprep.subr.mxu0 0.0
  %87 = vmatpush1.msra.mxu0 0.0
  %88 = vmatprep.subr.mxu0 0.0
  %89 = vmatpush1.msra.mxu0 0.0
  %90 = vmatprep.subr.mxu0 0.0
  %91 = vmatpush1.msra.mxu0 0.0
  %92 = vmatprep.subr.mxu0 0.0
  %93 = vmatpush1.msra.mxu0 0.0
  %94 = vmatprep.subr.mxu0 0.0
  %95 = vmatpush1.msra.mxu0 0.0
  %96 = vmatprep.subr.mxu0 0.0
  %97 = vmatpush1.msra.mxu0 0.0
  %98 = vmatprep.subr.mxu0 0.0
  %99 = vmatpush1.msra.mxu0 0.0
  %100 = vmatprep.subr.mxu0 0.0
  %101 = vmatpush1.msra.mxu0 0.0
  %102 = vmatprep.subr.mxu0 0.0
  %103 = vmatpush1.msra.mxu0 0.0
  %104 = vmatprep.subr.mxu0 0.0
  %105 = vmatpush1.msra.mxu0 0.0
  %106 = vmatprep.subr.mxu0 0.0
  %107 = vmatpush1.msra.mxu0 0.0
  %108 = vmatprep.subr.mxu0 0.0
  %109 = vmatpush1.msra.mxu0 0.0
  %110 = vmatprep.mubr.f32.mxu0 0.0
  %111 = vmatmul.mubr.f32.gmra.mrb[0].mxu0 %v44
  %v112 = vpop.f32.mrb[0].mxu0
  %v113 = vadd.f32 0.0, %v112
  %v114 = vpop.f32.mrb[0].mxu0
  %v115 = vadd.f32 0.0, %v114
  %116 = vdwg.mxu0
  %117 = vst [vmem:[#allocation2] sm:$0xff] %v113
  %118 = vst [vmem:[#allocation2 + $0x8] sm:$0xff] %v115
  %s119 = scalar_lea.vmem %s0, 8
  %v120 = vld [vmem:[%s119] sm:$0xff]
  %v121 = vld [vmem:[%s2] sm:$0xff]
  %v122 = vld [vmem:[%s2 + $0x8] sm:$0xff]
  %v123 = vld [vmem:[%s2 + $0x10] sm:$0xff]
  %v124 = vld [vmem:[%s2 + $0x18] sm:$0xff]
  %v125 = vld [vmem:[%s2 + $0x20] sm:$0xff]
  %v126 = vld [vmem:[%s2 + $0x28] sm:$0xff]
  %v127 = vld [vmem:[%s2 + $0x30] sm:$0xff]
  %v128 = vld [vmem:[%s2 + $0x38] sm:$0xff]
  %v129 = vld [vmem:[%s2 + $0x40] sm:$0xff]
  %v130 = vld [vmem:[%s2 + $0x48] sm:$0xff]
  %v131 = vld [vmem:[%s2 + $0x50] sm:$0xff]
  %v132 = vld [vmem:[%s2 + $0x58] sm:$0xff]
  %v133 = vld [vmem:[%s2 + $0x60] sm:$0xff]
  %v134 = vld [vmem:[%s2 + $0x68] sm:$0xff]
  %v135 = vld [vmem:[%s2 + $0x70] sm:$0xff]
  %v136 = vld [vmem:[%s2 + $0x78] sm:$0xff]
  %v138 = vsel %vm42, %v120, 0
  %140 = vmatprep.subr.mxu0 %v122
  %141 = vmatpush1.msra.mxu0 %v121
  %142 = vmatprep.subr.mxu0 %v124
  %143 = vmatpush1.msra.mxu0 %v123
  %144 = vmatprep.subr.mxu0 %v126
  %145 = vmatpush1.msra.mxu0 %v125
  %146 = vmatprep.subr.mxu0 %v128
  %147 = vmatpush1.msra.mxu0 %v127
  %148 = vmatprep.subr.mxu0 %v130
  %149 = vmatpush1.msra.mxu0 %v129
  %150 = vmatprep.subr.mxu0 %v132
  %151 = vmatpush1.msra.mxu0 %v131
  %152 = vmatprep.subr.mxu0 %v134
  %153 = vmatpush1.msra.mxu0 %v133
  %154 = vmatprep.subr.mxu0 %v136
  %155 = vmatpush1.msra.mxu0 %v135
  %156 = vmatprep.subr.mxu0 0.0
  %157 = vmatpush1.msra.mxu0 0.0
  %158 = vmatprep.subr.mxu0 0.0
  %159 = vmatpush1.msra.mxu0 0.0
  %160 = vmatprep.subr.mxu0 0.0
  %161 = vmatpush1.msra.mxu0 0.0
  %162 = vmatprep.subr.mxu0 0.0
  %163 = vmatpush1.msra.mxu0 0.0
  %164 = vmatprep.subr.mxu0 0.0
  %165 = vmatpush1.msra.mxu0 0.0
  %166 = vmatprep.subr.mxu0 0.0
  %167 = vmatpush1.msra.mxu0 0.0
  %168 = vmatprep.subr.mxu0 0.0
  %169 = vmatpush1.msra.mxu0 0.0
  %170 = vmatprep.subr.mxu0 0.0
  %171 = vmatpush1.msra.mxu0 0.0
  %172 = vmatprep.subr.mxu0 0.0
  %173 = vmatpush1.msra.mxu0 0.0
  %174 = vmatprep.subr.mxu0 0.0
  %175 = vmatpush1.msra.mxu0 0.0
  %176 = vmatprep.subr.mxu0 0.0
  %177 = vmatpush1.msra.mxu0 0.0
  %178 = vmatprep.subr.mxu0 0.0
  %179 = vmatpush1.msra.mxu0 0.0
  %180 = vmatprep.subr.mxu0 0.0
  %181 = vmatpush1.msra.mxu0 0.0
  %182 = vmatprep.subr.mxu0 0.0
  %183 = vmatpush1.msra.mxu0 0.0
  %184 = vmatprep.subr.mxu0 0.0
  %185 = vmatpush1.msra.mxu0 0.0
  %186 = vmatprep.subr.mxu0 0.0
  %187 = vmatpush1.msra.mxu0 0.0
  %188 = vmatprep.subr.mxu0 0.0
  %189 = vmatpush1.msra.mxu0 0.0
  %190 = vmatprep.subr.mxu0 0.0
  %191 = vmatpush1.msra.mxu0 0.0
  %192 = vmatprep.subr.mxu0 0.0
  %193 = vmatpush1.msra.mxu0 0.0
  %194 = vmatprep.subr.mxu0 0.0
  %195 = vmatpush1.msra.mxu0 0.0
  %196 = vmatprep.subr.mxu0 0.0
  %197 = vmatpush1.msra.mxu0 0.0
  %198 = vmatprep.subr.mxu0 0.0
  %199 = vmatpush1.msra.mxu0 0.0
  %200 = vmatprep.subr.mxu0 0.0
  %201 = vmatpush1.msra.mxu0 0.0
  %202 = vmatprep.subr.mxu0 0.0
  %203 = vmatpush1.msra.mxu0 0.0
  %204 = vmatprep.mubr.f32.mxu0 0.0
  %205 = vmatmul.mubr.f32.gmra.mrb[0].mxu0 %v138
  %v206 = vpop.f32.mrb[0].mxu0
  %v207 = vadd.f32 0.0, %v206
  %v208 = vpop.f32.mrb[0].mxu0
  %v209 = vadd.f32 0.0, %v208
  %210 = vdwg.mxu0
  %211 = vst [vmem:[#allocation2 + $0x10] sm:$0xff] %v207
  %212 = vst [vmem:[#allocation2 + $0x18] sm:$0xff] %v209
  %v213 = vlaneseq
  %vm214 = vcmp.ge.s32.totalorder %v213, 0
  %vm215 = vcmp.lt.s32.totalorder %v213, 512
  %vm216 = vmand %vm214, %vm215
  %s217 = scalar_lea.vmem [#allocation2], 32
  %218 = vst.msk [vmem:[%s217] ss:$8 sm:$0xf] %vm216, 1.0
  %219 = vst.msk [vmem:[%s217] ss:$8 sm:$0x0] %vm216, 1.0
  %v220 = vld [vmem:[%s1] sm:$0xff]
  %v221 = vld [vmem:[%s1 + $0x8] sm:$0xff]
  %v222 = vld [vmem:[#allocation2] sm:$0xff]
  %v223 = vld [vmem:[#allocation2 + $0x8] sm:$0xff]
  %v224 = vld [vmem:[#allocation2 + $0x10] sm:$0xff]
  %v225 = vld [vmem:[#allocation2 + $0x18] sm:$0xff]
  %v226 = vld [vmem:[#allocation2 + $0x20] sm:$0x1]
  %v227 = vld [vmem:[#allocation2 + $0x28] sm:$0x1]
  %v228 = vld [vmem:[#allocation2 + $0x30] sm:$0x1]
  %v229 = vld [vmem:[#allocation2 + $0x38] sm:$0x1]
  %vm230 = vcmask 72704
  %v232 = vsel %vm230, %v220, 0
  %v235 = vsel %vm230, %v221, 0
  %vm237 = vcmask 1040384
  %v239 = vsel %vm237, %v226, 0
  %v242 = vsel %vm237, %v227, 0
  %v245 = vsel %vm237, %v228, 0
  %v248 = vsel %vm237, %v229, 0
  %250 = vmatprep.subr.mxu0 %v223
  %251 = vmatpush1.msra.mxu0 %v222
  %252 = vmatprep.subr.mxu0 %v242
  %253 = vmatpush1.msra.mxu0 %v239
  %254 = vmatprep.subr.mxu0 0.0
  %255 = vmatpush1.msra.mxu0 0.0
  %256 = vmatprep.subr.mxu0 0.0
  %257 = vmatpush1.msra.mxu0 0.0
  %258 = vmatprep.subr.mxu0 0.0
  %259 = vmatpush1.msra.mxu0 0.0
  %260 = vmatprep.subr.mxu0 0.0
  %261 = vmatpush1.msra.mxu0 0.0
  %262 = vmatprep.subr.mxu0 0.0
  %263 = vmatpush1.msra.mxu0 0.0
  %264 = vmatprep.subr.mxu0 0.0
  %265 = vmatpush1.msra.mxu0 0.0
  %266 = vmatprep.subr.mxu0 0.0
  %267 = vmatpush1.msra.mxu0 0.0
  %268 = vmatprep.subr.mxu0 0.0
  %269 = vmatpush1.msra.mxu0 0.0
  %270 = vmatprep.subr.mxu0 0.0
  %271 = vmatpush1.msra.mxu0 0.0
  %272 = vmatprep.subr.mxu0 0.0
  %273 = vmatpush1.msra.mxu0 0.0
  %274 = vmatprep.subr.mxu0 0.0
  %275 = vmatpush1.msra.mxu0 0.0
  %276 = vmatprep.subr.mxu0 0.0
  %277 = vmatpush1.msra.mxu0 0.0
  %278 = vmatprep.subr.mxu0 0.0
  %279 = vmatpush1.msra.mxu0 0.0
  %280 = vmatprep.subr.mxu0 0.0
  %281 = vmatpush1.msra.mxu0 0.0
  %282 = vmatprep.subr.mxu0 0.0
  %283 = vmatpush1.msra.mxu0 0.0
  %284 = vmatprep.subr.mxu0 0.0
  %285 = vmatpush1.msra.mxu0 0.0
  %286 = vmatprep.subr.mxu0 0.0
  %287 = vmatpush1.msra.mxu0 0.0
  %288 = vmatprep.subr.mxu0 0.0
  %289 = vmatpush1.msra.mxu0 0.0
  %290 = vmatprep.subr.mxu0 0.0
  %291 = vmatpush1.msra.mxu0 0.0
  %292 = vmatprep.subr.mxu0 0.0
  %293 = vmatpush1.msra.mxu0 0.0
  %294 = vmatprep.subr.mxu0 0.0
  %295 = vmatpush1.msra.mxu0 0.0
  %296 = vmatprep.subr.mxu0 0.0
  %297 = vmatpush1.msra.mxu0 0.0
  %298 = vmatprep.subr.mxu0 0.0
  %299 = vmatpush1.msra.mxu0 0.0
  %300 = vmatprep.subr.mxu0 0.0
  %301 = vmatpush1.msra.mxu0 0.0
  %302 = vmatprep.subr.mxu0 0.0
  %303 = vmatpush1.msra.mxu0 0.0
  %304 = vmatprep.subr.mxu0 0.0
  %305 = vmatpush1.msra.mxu0 0.0
  %306 = vmatprep.subr.mxu0 0.0
  %307 = vmatpush1.msra.mxu0 0.0
  %308 = vmatprep.subr.mxu0 0.0
  %309 = vmatpush1.msra.mxu0 0.0
  %310 = vmatprep.subr.mxu0 0.0
  %311 = vmatpush1.msra.mxu0 0.0
  %312 = vmatprep.subr.mxu0 0.0
  %313 = vmatpush1.msra.mxu0 0.0
  %314 = vmatprep.mubr.f32.mxu0 0.0
  %315 = vmatmul.mubr.f32.gmra.mrb[0].mxu0 %v232
  %v316 = vpop.f32.mrb[0].mxu0
  %v317 = vadd.f32 0.0, %v316
  %v318 = vpop.f32.mrb[0].mxu0
  %v319 = vadd.f32 0.0, %v318
  %320 = vmatprep.mubr.f32.mxu0 0.0
  %321 = vmatmul.mubr.f32.gmra.mrb[0].mxu0 %v235
  %v322 = vpop.f32.mrb[0].mxu0
  %v323 = vadd.f32 0.0, %v322
  %v324 = vpop.f32.mrb[0].mxu0
  %v325 = vadd.f32 0.0, %v324
  %326 = vdwg.mxu0
  %327 = vmatprep.subr.mxu0 %v225
  %328 = vmatpush1.msra.mxu0 %v224
  %329 = vmatprep.subr.mxu0 %v248
  %330 = vmatpush1.msra.mxu0 %v245
  %331 = vmatprep.subr.mxu0 0.0
  %332 = vmatpush1.msra.mxu0 0.0
  %333 = vmatprep.subr.mxu0 0.0
  %334 = vmatpush1.msra.mxu0 0.0
  %335 = vmatprep.subr.mxu0 0.0
  %336 = vmatpush1.msra.mxu0 0.0
  %337 = vmatprep.subr.mxu0 0.0
  %338 = vmatpush1.msra.mxu0 0.0
  %339 = vmatprep.subr.mxu0 0.0
  %340 = vmatpush1.msra.mxu0 0.0
  %341 = vmatprep.subr.mxu0 0.0
  %342 = vmatpush1.msra.mxu0 0.0
  %343 = vmatprep.subr.mxu0 0.0
  %344 = vmatpush1.msra.mxu0 0.0
  %345 = vmatprep.subr.mxu0 0.0
  %346 = vmatpush1.msra.mxu0 0.0
  %347 = vmatprep.subr.mxu0 0.0
  %348 = vmatpush1.msra.mxu0 0.0
  %349 = vmatprep.subr.mxu0 0.0
  %350 = vmatpush1.msra.mxu0 0.0
  %351 = vmatprep.subr.mxu0 0.0
  %352 = vmatpush1.msra.mxu0 0.0
  %353 = vmatprep.subr.mxu0 0.0
  %354 = vmatpush1.msra.mxu0 0.0
  %355 = vmatprep.subr.mxu0 0.0
  %356 = vmatpush1.msra.mxu0 0.0
  %357 = vmatprep.subr.mxu0 0.0
  %358 = vmatpush1.msra.mxu0 0.0
  %359 = vmatprep.subr.mxu0 0.0
  %360 = vmatpush1.msra.mxu0 0.0
  %361 = vmatprep.subr.mxu0 0.0
  %362 = vmatpush1.msra.mxu0 0.0
  %363 = vmatprep.subr.mxu0 0.0
  %364 = vmatpush1.msra.mxu0 0.0
  %365 = vmatprep.subr.mxu0 0.0
  %366 = vmatpush1.msra.mxu0 0.0
  %367 = vmatprep.subr.mxu0 0.0
  %368 = vmatpush1.msra.mxu0 0.0
  %369 = vmatprep.subr.mxu0 0.0
  %370 = vmatpush1.msra.mxu0 0.0
  %371 = vmatprep.subr.mxu0 0.0
  %372 = vmatpush1.msra.mxu0 0.0
  %373 = vmatprep.subr.mxu0 0.0
  %374 = vmatpush1.msra.mxu0 0.0
  %375 = vmatprep.subr.mxu0 0.0
  %376 = vmatpush1.msra.mxu0 0.0
  %377 = vmatprep.subr.mxu0 0.0
  %378 = vmatpush1.msra.mxu0 0.0
  %379 = vmatprep.subr.mxu0 0.0
  %380 = vmatpush1.msra.mxu0 0.0
  %381 = vmatprep.subr.mxu0 0.0
  %382 = vmatpush1.msra.mxu0 0.0
  %383 = vmatprep.subr.mxu0 0.0
  %384 = vmatpush1.msra.mxu0 0.0
  %385 = vmatprep.subr.mxu0 0.0
  %386 = vmatpush1.msra.mxu0 0.0
  %387 = vmatprep.subr.mxu0 0.0
  %388 = vmatpush1.msra.mxu0 0.0
  %389 = vmatprep.subr.mxu0 0.0
  %390 = vmatpush1.msra.mxu0 0.0
  %391 = vmatprep.mubr.f32.mxu0 0.0
  %392 = vmatmul.mubr.f32.gmra.mrb[0].mxu0 %v232
  %v393 = vpop.f32.mrb[0].mxu0
  %v394 = vadd.f32 0.0, %v393
  %v395 = vpop.f32.mrb[0].mxu0
  %v396 = vadd.f32 0.0, %v395
  %397 = vmatprep.mubr.f32.mxu0 0.0
  %398 = vmatmul.mubr.f32.gmra.mrb[0].mxu0 %v235
  %v399 = vpop.f32.mrb[0].mxu0
  %v400 = vadd.f32 0.0, %v399
  %v401 = vpop.f32.mrb[0].mxu0
  %v402 = vadd.f32 0.0, %v401
  %403 = vdwg.mxu0
  %404 = vst [vmem:[%s6] sm:$0xff] %v317
  %405 = vst [vmem:[%s6 + $0x8] sm:$0xff] %v319
  %406 = vst [vmem:[%s6 + $0x10] sm:$0xff] %v394
  %407 = vst [vmem:[%s6 + $0x18] sm:$0xff] %v396
  %s408 = scalar_lea.vmem [#allocation3], 288
  %409 = vst.msk [vmem:[%s408] ss:$8 sm:$0xf] %vm216, 1.0
  %410 = vst.msk [vmem:[%s408] ss:$8 sm:$0x0] %vm216, 1.0
  %v411 = vld [vmem:[%s4] sm:$0xff]
  %413 = vrot.lane.b32.xlu0 %v402, 17
  %v414 = vpop.permute.xlu0 %413
  %419 = vrot.lane.b32.xlu0 %v323, 17
  %v420 = vpop.permute.xlu0 %419
  %421 = vrot.lane.b32.xlu0 %v325, 17
  %v422 = vpop.permute.xlu0 %421
  %423 = vrot.lane.b32.xlu0 %v400, 17
  %v424 = vpop.permute.xlu0 %423
  %vm425 = vcmask 138240
  %v426 = vsel %vm425, %v420, %v422
  %v427 = vsel %vm425, %v422, %v424
  %v428 = vsel %vm425, %v424, %v414
  %v433 = vsel %vm425, %v414, %v420
  %v434 = vld [vmem:[%s3] ss:$8 sm:$0xf]
  %v436 = vlaneseq
  %v437 = vshrl.u32 %v436, 7
  %v438 = vsub.s32 0, %v437
  %v439 = vrot.slane %v434, %v438
  %v440 = vlaneseq
  %v441 = vshrl.u32 %v440, 7
  %v442 = vsub.s32 1, %v441
  %v443 = vrot.slane %v434, %v442
  %v444 = vlaneseq
  %v445 = vshrl.u32 %v444, 7
  %v446 = vsub.s32 2, %v445
  %v447 = vrot.slane %v434, %v446
  %v448 = vlaneseq
  %v449 = vshrl.u32 %v448, 7
  %v450 = vsub.s32 3, %v449
  %v451 = vrot.slane %v434, %v450
  %v456 = vmul.f32 %v433, %v439
  %v457 = vmul.f32 %v426, %v443
  %v458 = vmul.f32 %v427, %v447
  %v459 = vmul.f32 %v428, %v451
  %460 = vst [vmem:[#allocation3] sm:$0xff] %v456
  %461 = vst [vmem:[#allocation3 + $0x8] sm:$0xff] %v457
  %462 = vst [vmem:[#allocation3 + $0x10] sm:$0xff] %v458
  %463 = vst [vmem:[#allocation3 + $0x18] sm:$0xff] %v459
  %464 = vrot.lane.b32.xlu0 %v402, 16
  %v465 = vpop.permute.xlu0 %464
  %467 = vrot.lane.b32.xlu0 %v323, 16
  %v468 = vpop.permute.xlu0 %467
  %469 = vrot.lane.b32.xlu0 %v325, 16
  %v470 = vpop.permute.xlu0 %469
  %471 = vrot.lane.b32.xlu0 %v400, 16
  %v472 = vpop.permute.xlu0 %471
  %vm473 = vcmask 130048
  %v474 = vsel %vm473, %v468, %v470
  %v475 = vsel %vm473, %v470, %v472
  %v476 = vsel %vm473, %v472, %v465
  %v481 = vsel %vm473, %v465, %v468
  %s482 = scalar_lea.vmem %s3, 1
  %v483 = vld [vmem:[%s482] ss:$8 sm:$0xf]
  %v485 = vlaneseq
  %v486 = vshrl.u32 %v485, 7
  %v487 = vsub.s32 0, %v486
  %v488 = vrot.slane %v483, %v487
  %v489 = vlaneseq
  %v490 = vshrl.u32 %v489, 7
  %v491 = vsub.s32 1, %v490
  %v492 = vrot.slane %v483, %v491
  %v493 = vlaneseq
  %v494 = vshrl.u32 %v493, 7
  %v495 = vsub.s32 2, %v494
  %v496 = vrot.slane %v483, %v495
  %v497 = vlaneseq
  %v498 = vshrl.u32 %v497, 7
  %v499 = vsub.s32 3, %v498
  %v500 = vrot.slane %v483, %v499
  %v505 = vmul.f32 %v481, %v488
  %v506 = vmul.f32 %v474, %v492
  %v507 = vmul.f32 %v475, %v496
  %v508 = vmul.f32 %v476, %v500
  %509 = vst [vmem:[#allocation3 + $0x20] sm:$0xff] %v505
  %510 = vst [vmem:[#allocation3 + $0x28] sm:$0xff] %v506
  %511 = vst [vmem:[#allocation3 + $0x30] sm:$0xff] %v507
  %512 = vst [vmem:[#allocation3 + $0x38] sm:$0xff] %v508
  %513 = vrot.lane.b32.xlu0 %v402, 15
  %v514 = vpop.permute.xlu0 %513
  %516 = vrot.lane.b32.xlu0 %v323, 15
  %v517 = vpop.permute.xlu0 %516
  %518 = vrot.lane.b32.xlu0 %v325, 15
  %v519 = vpop.permute.xlu0 %518
  %520 = vrot.lane.b32.xlu0 %v400, 15
  %v521 = vpop.permute.xlu0 %520
  %vm522 = vcmask 121856
  %v523 = vsel %vm522, %v517, %v519
  %v524 = vsel %vm522, %v519, %v521
  %v525 = vsel %vm522, %v521, %v514
  %v530 = vsel %vm522, %v514, %v517
  %s531 = scalar_lea.vmem %s3, 2
  %v532 = vld [vmem:[%s531] ss:$8 sm:$0xf]
  %v534 = vlaneseq
  %v535 = vshrl.u32 %v534, 7
  %v536 = vsub.s32 0, %v535
  %v537 = vrot.slane %v532, %v536
  %v538 = vlaneseq
  %v539 = vshrl.u32 %v538, 7
  %v540 = vsub.s32 1, %v539
  %v541 = vrot.slane %v532, %v540
  %v542 = vlaneseq
  %v543 = vshrl.u32 %v542, 7
  %v544 = vsub.s32 2, %v543
  %v545 = vrot.slane %v532, %v544
  %v546 = vlaneseq
  %v547 = vshrl.u32 %v546, 7
  %v548 = vsub.s32 3, %v547
  %v549 = vrot.slane %v532, %v548
  %v554 = vmul.f32 %v530, %v537
  %v555 = vmul.f32 %v523, %v541
  %v556 = vmul.f32 %v524, %v545
  %v557 = vmul.f32 %v525, %v549
  %558 = vst [vmem:[#allocation3 + $0x40] sm:$0xff] %v554
  %559 = vst [vmem:[#allocation3 + $0x48] sm:$0xff] %v555
  %560 = vst [vmem:[#allocation3 + $0x50] sm:$0xff] %v556
  %561 = vst [vmem:[#allocation3 + $0x58] sm:$0xff] %v557
  %562 = vrot.lane.b32.xlu0 %v402, 1
  %v563 = vpop.permute.xlu0 %562
  %565 = vrot.lane.b32.xlu0 %v323, 1
  %v566 = vpop.permute.xlu0 %565
  %567 = vrot.lane.b32.xlu0 %v325, 1
  %v568 = vpop.permute.xlu0 %567
  %569 = vrot.lane.b32.xlu0 %v400, 1
  %v570 = vpop.permute.xlu0 %569
  %vm571 = vcmask 7168
  %v572 = vsel %vm571, %v566, %v568
  %v573 = vsel %vm571, %v568, %v570
  %v574 = vsel %vm571, %v570, %v563
  %v579 = vsel %vm571, %v563, %v566
  %s580 = scalar_lea.vmem %s3, 3
  %v581 = vld [vmem:[%s580] ss:$8 sm:$0xf]
  %v583 = vlaneseq
  %v584 = vshrl.u32 %v583, 7
  %v585 = vsub.s32 0, %v584
  %v586 = vrot.slane %v581, %v585
  %v587 = vlaneseq
  %v588 = vshrl.u32 %v587, 7
  %v589 = vsub.s32 1, %v588
  %v590 = vrot.slane %v581, %v589
  %v591 = vlaneseq
  %v592 = vshrl.u32 %v591, 7
  %v593 = vsub.s32 2, %v592
  %v594 = vrot.slane %v581, %v593
  %v595 = vlaneseq
  %v596 = vshrl.u32 %v595, 7
  %v597 = vsub.s32 3, %v596
  %v598 = vrot.slane %v581, %v597
  %v603 = vmul.f32 %v579, %v586
  %v604 = vmul.f32 %v572, %v590
  %v605 = vmul.f32 %v573, %v594
  %v606 = vmul.f32 %v574, %v598
  %607 = vst [vmem:[#allocation3 + $0x60] sm:$0xff] %v603
  %608 = vst [vmem:[#allocation3 + $0x68] sm:$0xff] %v604
  %609 = vst [vmem:[#allocation3 + $0x70] sm:$0xff] %v605
  %610 = vst [vmem:[#allocation3 + $0x78] sm:$0xff] %v606
  %s611 = scalar_lea.vmem %s3, 4
  %v612 = vld [vmem:[%s611] ss:$8 sm:$0xf]
  %v614 = vlaneseq
  %v615 = vshrl.u32 %v614, 7
  %v616 = vsub.s32 0, %v615
  %v617 = vrot.slane %v612, %v616
  %v618 = vlaneseq
  %v619 = vshrl.u32 %v618, 7
  %v620 = vsub.s32 1, %v619
  %v621 = vrot.slane %v612, %v620
  %v622 = vlaneseq
  %v623 = vshrl.u32 %v622, 7
  %v624 = vsub.s32 2, %v623
  %v625 = vrot.slane %v612, %v624
  %v626 = vlaneseq
  %v627 = vshrl.u32 %v626, 7
  %v628 = vsub.s32 3, %v627
  %v629 = vrot.slane %v612, %v628
  %v634 = vmul.f32 %v323, %v617
  %v635 = vmul.f32 %v325, %v621
  %v636 = vmul.f32 %v400, %v625
  %v637 = vmul.f32 %v402, %v629
  %638 = vst [vmem:[#allocation3 + $0x80] sm:$0xff] %v634
  %639 = vst [vmem:[#allocation3 + $0x88] sm:$0xff] %v635
  %640 = vst [vmem:[#allocation3 + $0x90] sm:$0xff] %v636
  %641 = vst [vmem:[#allocation3 + $0x98] sm:$0xff] %v637
  %642 = vrot.lane.b32.xlu0 %v323, 127
  %v643 = vpop.permute.xlu0 %642
  %644 = vrot.lane.b32.xlu0 %v325, 127
  %v645 = vpop.permute.xlu0 %644
  %646 = vrot.lane.b32.xlu0 %v400, 127
  %v647 = vpop.permute.xlu0 %646
  %648 = vrot.lane.b32.xlu0 %v402, 127
  %v649 = vpop.permute.xlu0 %648
  %vm650 = vcmask 1039360
  %v651 = vsel %vm650, %v643, %v645
  %v652 = vsel %vm650, %v645, %v647
  %v653 = vsel %vm650, %v647, %v649
  %v659 = vsel %vm650, %v649, %v643
  %s660 = scalar_lea.vmem %s3, 5
  %v661 = vld [vmem:[%s660] ss:$8 sm:$0xf]
  %v663 = vlaneseq
  %v664 = vshrl.u32 %v663, 7
  %v665 = vsub.s32 0, %v664
  %v666 = vrot.slane %v661, %v665
  %v667 = vlaneseq
  %v668 = vshrl.u32 %v667, 7
  %v669 = vsub.s32 1, %v668
  %v670 = vrot.slane %v661, %v669
  %v671 = vlaneseq
  %v672 = vshrl.u32 %v671, 7
  %v673 = vsub.s32 2, %v672
  %v674 = vrot.slane %v661, %v673
  %v675 = vlaneseq
  %v676 = vshrl.u32 %v675, 7
  %v677 = vsub.s32 3, %v676
  %v678 = vrot.slane %v661, %v677
  %v683 = vmul.f32 %v651, %v666
  %v684 = vmul.f32 %v652, %v670
  %v685 = vmul.f32 %v653, %v674
  %v686 = vmul.f32 %v659, %v678
  %687 = vst [vmem:[#allocation3 + $0xa0] sm:$0xff] %v683
  %688 = vst [vmem:[#allocation3 + $0xa8] sm:$0xff] %v684
  %689 = vst [vmem:[#allocation3 + $0xb0] sm:$0xff] %v685
  %690 = vst [vmem:[#allocation3 + $0xb8] sm:$0xff] %v686
  %691 = vrot.lane.b32.xlu0 %v323, 113
  %v692 = vpop.permute.xlu0 %691
  %693 = vrot.lane.b32.xlu0 %v325, 113
  %v694 = vpop.permute.xlu0 %693
  %695 = vrot.lane.b32.xlu0 %v400, 113
  %v696 = vpop.permute.xlu0 %695
  %697 = vrot.lane.b32.xlu0 %v402, 113
  %v698 = vpop.permute.xlu0 %697
  %vm699 = vcmask 924672
  %v700 = vsel %vm699, %v692, %v694
  %v701 = vsel %vm699, %v694, %v696
  %v702 = vsel %vm699, %v696, %v698
  %v708 = vsel %vm699, %v698, %v692
  %s709 = scalar_lea.vmem %s3, 6
  %v710 = vld [vmem:[%s709] ss:$8 sm:$0xf]
  %v712 = vlaneseq
  %v713 = vshrl.u32 %v712, 7
  %v714 = vsub.s32 0, %v713
  %v715 = vrot.slane %v710, %v714
  %v716 = vlaneseq
  %v717 = vshrl.u32 %v716, 7
  %v718 = vsub.s32 1, %v717
  %v719 = vrot.slane %v710, %v718
  %v720 = vlaneseq
  %v721 = vshrl.u32 %v720, 7
  %v722 = vsub.s32 2, %v721
  %v723 = vrot.slane %v710, %v722
  %v724 = vlaneseq
  %v725 = vshrl.u32 %v724, 7
  %v726 = vsub.s32 3, %v725
  %v727 = vrot.slane %v710, %v726
  %v732 = vmul.f32 %v700, %v715
  %v733 = vmul.f32 %v701, %v719
  %v734 = vmul.f32 %v702, %v723
  %v735 = vmul.f32 %v708, %v727
  %736 = vst [vmem:[#allocation3 + $0xc0] sm:$0xff] %v732
  %737 = vst [vmem:[#allocation3 + $0xc8] sm:$0xff] %v733
  %738 = vst [vmem:[#allocation3 + $0xd0] sm:$0xff] %v734
  %739 = vst [vmem:[#allocation3 + $0xd8] sm:$0xff] %v735
  %740 = vrot.lane.b32.xlu0 %v323, 112
  %v741 = vpop.permute.xlu0 %740
  %742 = vrot.lane.b32.xlu0 %v325, 112
  %v743 = vpop.permute.xlu0 %742
  %744 = vrot.lane.b32.xlu0 %v400, 112
  %v745 = vpop.permute.xlu0 %744
  %746 = vrot.lane.b32.xlu0 %v402, 112
  %v747 = vpop.permute.xlu0 %746
  %vm748 = vcmask 916480
  %v749 = vsel %vm748, %v741, %v743
  %v750 = vsel %vm748, %v743, %v745
  %v751 = vsel %vm748, %v745, %v747
  %v757 = vsel %vm748, %v747, %v741
  %s758 = scalar_lea.vmem %s3, 7
  %v759 = vld [vmem:[%s758] ss:$8 sm:$0xf]
  %v761 = vlaneseq
  %v762 = vshrl.u32 %v761, 7
  %v763 = vsub.s32 0, %v762
  %v764 = vrot.slane %v759, %v763
  %v765 = vlaneseq
  %v766 = vshrl.u32 %v765, 7
  %v767 = vsub.s32 1, %v766
  %v768 = vrot.slane %v759, %v767
  %v769 = vlaneseq
  %v770 = vshrl.u32 %v769, 7
  %v771 = vsub.s32 2, %v770
  %v772 = vrot.slane %v759, %v771
  %v773 = vlaneseq
  %v774 = vshrl.u32 %v773, 7
  %v775 = vsub.s32 3, %v774
  %v776 = vrot.slane %v759, %v775
  %v781 = vmul.f32 %v749, %v764
  %v782 = vmul.f32 %v750, %v768
  %v783 = vmul.f32 %v751, %v772
  %v784 = vmul.f32 %v757, %v776
  %785 = vst [vmem:[#allocation3 + $0xe0] sm:$0xff] %v781
  %786 = vst [vmem:[#allocation3 + $0xe8] sm:$0xff] %v782
  %787 = vst [vmem:[#allocation3 + $0xf0] sm:$0xff] %v783
  %788 = vst [vmem:[#allocation3 + $0xf8] sm:$0xff] %v784
  %789 = vrot.lane.b32.xlu0 %v323, 111
  %v790 = vpop.permute.xlu0 %789
  %791 = vrot.lane.b32.xlu0 %v325, 111
  %v792 = vpop.permute.xlu0 %791
  %793 = vrot.lane.b32.xlu0 %v400, 111
  %v794 = vpop.permute.xlu0 %793
  %795 = vrot.lane.b32.xlu0 %v402, 111
  %v796 = vpop.permute.xlu0 %795
  %vm797 = vcmask 908288
  %v798 = vsel %vm797, %v790, %v792
  %v799 = vsel %vm797, %v792, %v794
  %v800 = vsel %vm797, %v794, %v796
  %v806 = vsel %vm797, %v796, %v790
  %s807 = scalar_lea.vmem %s3, 32
  %v808 = vld [vmem:[%s807] ss:$8 sm:$0xf]
  %v810 = vlaneseq
  %v811 = vshrl.u32 %v810, 7
  %v812 = vsub.s32 0, %v811
  %v813 = vrot.slane %v808, %v812
  %v814 = vlaneseq
  %v815 = vshrl.u32 %v814, 7
  %v816 = vsub.s32 1, %v815
  %v817 = vrot.slane %v808, %v816
  %v818 = vlaneseq
  %v819 = vshrl.u32 %v818, 7
  %v820 = vsub.s32 2, %v819
  %v821 = vrot.slane %v808, %v820
  %v822 = vlaneseq
  %v823 = vshrl.u32 %v822, 7
  %v824 = vsub.s32 3, %v823
  %v825 = vrot.slane %v808, %v824
  %v830 = vmul.f32 %v798, %v813
  %v831 = vmul.f32 %v799, %v817
  %v832 = vmul.f32 %v800, %v821
  %v833 = vmul.f32 %v806, %v825
  %834 = vst [vmem:[#allocation3 + $0x100] sm:$0xff] %v830
  %835 = vst [vmem:[#allocation3 + $0x108] sm:$0xff] %v831
  %836 = vst [vmem:[#allocation3 + $0x110] sm:$0xff] %v832
  %837 = vst [vmem:[#allocation3 + $0x118] sm:$0xff] %v833
  %v838 = vld [vmem:[#allocation3] sm:$0xff]
  %v839 = vld [vmem:[#allocation3 + $0x8] sm:$0xff]
  %v840 = vld [vmem:[#allocation3 + $0x10] sm:$0xff]
  %v841 = vld [vmem:[#allocation3 + $0x18] sm:$0xff]
  %v842 = vld [vmem:[#allocation3 + $0x20] sm:$0xff]
  %v843 = vld [vmem:[#allocation3 + $0x28] sm:$0xff]
  %v844 = vld [vmem:[#allocation3 + $0x30] sm:$0xff]
  %v845 = vld [vmem:[#allocation3 + $0x38] sm:$0xff]
  %v846 = vld [vmem:[#allocation3 + $0x40] sm:$0xff]
  %v847 = vld [vmem:[#allocation3 + $0x48] sm:$0xff]
  %v848 = vld [vmem:[#allocation3 + $0x50] sm:$0xff]
  %v849 = vld [vmem:[#allocation3 + $0x58] sm:$0xff]
  %v850 = vld [vmem:[#allocation3 + $0x60] sm:$0xff]
  %v851 = vld [vmem:[#allocation3 + $0x68] sm:$0xff]
  %v852 = vld [vmem:[#allocation3 + $0x70] sm:$0xff]
  %v853 = vld [vmem:[#allocation3 + $0x78] sm:$0xff]
  %v854 = vld [vmem:[#allocation3 + $0x80] sm:$0xff]
  %v855 = vld [vmem:[#allocation3 + $0x88] sm:$0xff]
  %v856 = vld [vmem:[#allocation3 + $0x90] sm:$0xff]
  %v857 = vld [vmem:[#allocation3 + $0x98] sm:$0xff]
  %v858 = vld [vmem:[#allocation3 + $0xa0] sm:$0xff]
  %v859 = vld [vmem:[#allocation3 + $0xa8] sm:$0xff]
  %v860 = vld [vmem:[#allocation3 + $0xb0] sm:$0xff]
  %v861 = vld [vmem:[#allocation3 + $0xb8] sm:$0xff]
  %v862 = vld [vmem:[#allocation3 + $0xc0] sm:$0xff]
  %v863 = vld [vmem:[#allocation3 + $0xc8] sm:$0xff]
  %v864 = vld [vmem:[#allocation3 + $0xd0] sm:$0xff]
  %v865 = vld [vmem:[#allocation3 + $0xd8] sm:$0xff]
  %v866 = vld [vmem:[#allocation3 + $0xe0] sm:$0xff]
  %v867 = vld [vmem:[#allocation3 + $0xe8] sm:$0xff]
  %v868 = vld [vmem:[#allocation3 + $0xf0] sm:$0xff]
  %v869 = vld [vmem:[#allocation3 + $0xf8] sm:$0xff]
  %v870 = vld [vmem:[#allocation3 + $0x100] sm:$0xff]
  %v871 = vld [vmem:[#allocation3 + $0x108] sm:$0xff]
  %v872 = vld [vmem:[#allocation3 + $0x110] sm:$0xff]
  %v873 = vld [vmem:[#allocation3 + $0x118] sm:$0xff]
  %v874 = vld [vmem:[#allocation3 + $0x120] sm:$0x1]
  %v875 = vld [vmem:[#allocation3 + $0x128] sm:$0x1]
  %v876 = vld [vmem:[#allocation3 + $0x130] sm:$0x1]
  %v877 = vld [vmem:[#allocation3 + $0x138] sm:$0x1]
  %vm878 = vcmask 596992
  %v880 = vsel %vm878, %v411, 0
  %v883 = vsel %vm237, %v874, 0
  %v886 = vsel %vm237, %v875, 0
  %v889 = vsel %vm237, %v876, 0
  %v892 = vsel %vm237, %v877, 0
  %894 = vmatprep.subr.mxu0 %v839
  %895 = vmatpush1.msra.mxu0 %v838
  %896 = vmatprep.subr.mxu0 %v843
  %897 = vmatpush1.msra.mxu0 %v842
  %898 = vmatprep.subr.mxu0 %v847
  %899 = vmatpush1.msra.mxu0 %v846
  %900 = vmatprep.subr.mxu0 %v851
  %901 = vmatpush1.msra.mxu0 %v850
  %902 = vmatprep.subr.mxu0 %v855
  %903 = vmatpush1.msra.mxu0 %v854
  %904 = vmatprep.subr.mxu0 %v859
  %905 = vmatpush1.msra.mxu0 %v858
  %906 = vmatprep.subr.mxu0 %v863
  %907 = vmatpush1.msra.mxu0 %v862
  %908 = vmatprep.subr.mxu0 %v867
  %909 = vmatpush1.msra.mxu0 %v866
  %910 = vmatprep.subr.mxu0 %v871
  %911 = vmatpush1.msra.mxu0 %v870
  %912 = vmatprep.subr.mxu0 %v886
  %913 = vmatpush1.msra.mxu0 %v883
  %914 = vmatprep.subr.mxu0 0.0
  %915 = vmatpush1.msra.mxu0 0.0
  %916 = vmatprep.subr.mxu0 0.0
  %917 = vmatpush1.msra.mxu0 0.0
  %918 = vmatprep.subr.mxu0 0.0
  %919 = vmatpush1.msra.mxu0 0.0
  %920 = vmatprep.subr.mxu0 0.0
  %921 = vmatpush1.msra.mxu0 0.0
  %922 = vmatprep.subr.mxu0 0.0
  %923 = vmatpush1.msra.mxu0 0.0
  %924 = vmatprep.subr.mxu0 0.0
  %925 = vmatpush1.msra.mxu0 0.0
  %926 = vmatprep.subr.mxu0 0.0
  %927 = vmatpush1.msra.mxu0 0.0
  %928 = vmatprep.subr.mxu0 0.0
  %929 = vmatpush1.msra.mxu0 0.0
  %930 = vmatprep.subr.mxu0 0.0
  %931 = vmatpush1.msra.mxu0 0.0
  %932 = vmatprep.subr.mxu0 0.0
  %933 = vmatpush1.msra.mxu0 0.0
  %934 = vmatprep.subr.mxu0 0.0
  %935 = vmatpush1.msra.mxu0 0.0
  %936 = vmatprep.subr.mxu0 0.0
  %937 = vmatpush1.msra.mxu0 0.0
  %938 = vmatprep.subr.mxu0 0.0
  %939 = vmatpush1.msra.mxu0 0.0
  %940 = vmatprep.subr.mxu0 0.0
  %941 = vmatpush1.msra.mxu0 0.0
  %942 = vmatprep.subr.mxu0 0.0
  %943 = vmatpush1.msra.mxu0 0.0
  %944 = vmatprep.subr.mxu0 0.0
  %945 = vmatpush1.msra.mxu0 0.0
  %946 = vmatprep.subr.mxu0 0.0
  %947 = vmatpush1.msra.mxu0 0.0
  %948 = vmatprep.subr.mxu0 0.0
  %949 = vmatpush1.msra.mxu0 0.0
  %950 = vmatprep.subr.mxu0 0.0
  %951 = vmatpush1.msra.mxu0 0.0
  %952 = vmatprep.subr.mxu0 0.0
  %953 = vmatpush1.msra.mxu0 0.0
  %954 = vmatprep.subr.mxu0 0.0
  %955 = vmatpush1.msra.mxu0 0.0
  %956 = vmatprep.subr.mxu0 0.0
  %957 = vmatpush1.msra.mxu0 0.0
  %958 = vmatprep.mubr.f32.mxu0 0.0
  %959 = vmatmul.mubr.f32.gmra.mrb[0].mxu0 %v880
  %v960 = vpop.f32.mrb[0].mxu0
  %v961 = vadd.f32 0.0, %v960
  %v962 = vpop.f32.mrb[0].mxu0
  %v963 = vadd.f32 0.0, %v962
  %964 = vdwg.mxu0
  %965 = vmatprep.subr.mxu0 %v841
  %966 = vmatpush1.msra.mxu0 %v840
  %967 = vmatprep.subr.mxu0 %v845
  %968 = vmatpush1.msra.mxu0 %v844
  %969 = vmatprep.subr.mxu0 %v849
  %970 = vmatpush1.msra.mxu0 %v848
  %971 = vmatprep.subr.mxu0 %v853
  %972 = vmatpush1.msra.mxu0 %v852
  %973 = vmatprep.subr.mxu0 %v857
  %974 = vmatpush1.msra.mxu0 %v856
  %975 = vmatprep.subr.mxu0 %v861
  %976 = vmatpush1.msra.mxu0 %v860
  %977 = vmatprep.subr.mxu0 %v865
  %978 = vmatpush1.msra.mxu0 %v864
  %979 = vmatprep.subr.mxu0 %v869
  %980 = vmatpush1.msra.mxu0 %v868
  %981 = vmatprep.subr.mxu0 %v873
  %982 = vmatpush1.msra.mxu0 %v872
  %983 = vmatprep.subr.mxu0 %v892
  %984 = vmatpush1.msra.mxu0 %v889
  %985 = vmatprep.subr.mxu0 0.0
  %986 = vmatpush1.msra.mxu0 0.0
  %987 = vmatprep.subr.mxu0 0.0
  %988 = vmatpush1.msra.mxu0 0.0
  %989 = vmatprep.subr.mxu0 0.0
  %990 = vmatpush1.msra.mxu0 0.0
  %991 = vmatprep.subr.mxu0 0.0
  %992 = vmatpush1.msra.mxu0 0.0
  %993 = vmatprep.subr.mxu0 0.0
  %994 = vmatpush1.msra.mxu0 0.0
  %995 = vmatprep.subr.mxu0 0.0
  %996 = vmatpush1.msra.mxu0 0.0
  %997 = vmatprep.subr.mxu0 0.0
  %998 = vmatpush1.msra.mxu0 0.0
  %999 = vmatprep.subr.mxu0 0.0
  %1000 = vmatpush1.msra.mxu0 0.0
  %1001 = vmatprep.subr.mxu0 0.0
  %1002 = vmatpush1.msra.mxu0 0.0
  %1003 = vmatprep.subr.mxu0 0.0
  %1004 = vmatpush1.msra.mxu0 0.0
  %1005 = vmatprep.subr.mxu0 0.0
  %1006 = vmatpush1.msra.mxu0 0.0
  %1007 = vmatprep.subr.mxu0 0.0
  %1008 = vmatpush1.msra.mxu0 0.0
  %1009 = vmatprep.subr.mxu0 0.0
  %1010 = vmatpush1.msra.mxu0 0.0
  %1011 = vmatprep.subr.mxu0 0.0
  %1012 = vmatpush1.msra.mxu0 0.0
  %1013 = vmatprep.subr.mxu0 0.0
  %1014 = vmatpush1.msra.mxu0 0.0
  %1015 = vmatprep.subr.mxu0 0.0
  %1016 = vmatpush1.msra.mxu0 0.0
  %1017 = vmatprep.subr.mxu0 0.0
  %1018 = vmatpush1.msra.mxu0 0.0
  %1019 = vmatprep.subr.mxu0 0.0
  %1020 = vmatpush1.msra.mxu0 0.0
  %1021 = vmatprep.subr.mxu0 0.0
  %1022 = vmatpush1.msra.mxu0 0.0
  %1023 = vmatprep.subr.mxu0 0.0
  %1024 = vmatpush1.msra.mxu0 0.0
  %1025 = vmatprep.subr.mxu0 0.0
  %1026 = vmatpush1.msra.mxu0 0.0
  %1027 = vmatprep.subr.mxu0 0.0
  %1028 = vmatpush1.msra.mxu0 0.0
  %1029 = vmatprep.mubr.f32.mxu0 0.0
  %1030 = vmatmul.mubr.f32.gmra.mrb[0].mxu0 %v880
  %v1031 = vpop.f32.mrb[0].mxu0
  %v1032 = vadd.f32 0.0, %v1031
  %v1033 = vpop.f32.mrb[0].mxu0
  %v1034 = vadd.f32 0.0, %v1033
  %1035 = vdwg.mxu0
  %v1036 = vmul.f32 %v961, 0.01
  %v1037 = vmul.f32 %v963, 0.01
  %v1038 = vmul.f32 %v1032, 0.01
  %v1039 = vmul.f32 %v1034, 0.01
  %v1040 = vmax.f32 %v961, %v1036
  %v1041 = vmax.f32 %v963, %v1037
  %v1042 = vmax.f32 %v1032, %v1038
  %v1043 = vmax.f32 %v1034, %v1039
  %v1044 = vld [vmem:[%s5] sm:$0xff]
  %1046 = vrot.lane.b32.xlu0 %v1043, 17
  %v1047 = vpop.permute.xlu0 %1046
  %1052 = vrot.lane.b32.xlu0 %v1040, 17
  %v1053 = vpop.permute.xlu0 %1052
  %1054 = vrot.lane.b32.xlu0 %v1041, 17
  %v1055 = vpop.permute.xlu0 %1054
  %1056 = vrot.lane.b32.xlu0 %v1042, 17
  %v1057 = vpop.permute.xlu0 %1056
  %v1058 = vsel %vm425, %v1053, %v1055
  %v1059 = vsel %vm425, %v1055, %v1057
  %v1060 = vsel %vm425, %v1057, %v1047
  %v1065 = vsel %vm425, %v1047, %v1053
  %v1066 = vld [vmem:[%s3] ss:$8 sm:$0xf]
  %v1068 = vlaneseq
  %v1069 = vshrl.u32 %v1068, 7
  %v1070 = vsub.s32 0, %v1069
  %v1071 = vrot.slane %v1066, %v1070
  %v1072 = vlaneseq
  %v1073 = vshrl.u32 %v1072, 7
  %v1074 = vsub.s32 1, %v1073
  %v1075 = vrot.slane %v1066, %v1074
  %v1076 = vlaneseq
  %v1077 = vshrl.u32 %v1076, 7
  %v1078 = vsub.s32 2, %v1077
  %v1079 = vrot.slane %v1066, %v1078
  %v1080 = vlaneseq
  %v1081 = vshrl.u32 %v1080, 7
  %v1082 = vsub.s32 3, %v1081
  %v1083 = vrot.slane %v1066, %v1082
  %v1088 = vmul.f32 %v1065, %v1071
  %v1089 = vmul.f32 %v1058, %v1075
  %v1090 = vmul.f32 %v1059, %v1079
  %v1091 = vmul.f32 %v1060, %v1083
  %1092 = vst [vmem:[#allocation3] sm:$0xff] %v1088
  %1093 = vst [vmem:[#allocation3 + $0x8] sm:$0xff] %v1089
  %1094 = vst [vmem:[#allocation3 + $0x10] sm:$0xff] %v1090
  %1095 = vst [vmem:[#allocation3 + $0x18] sm:$0xff] %v1091
  %1096 = vrot.lane.b32.xlu0 %v1043, 16
  %v1097 = vpop.permute.xlu0 %1096
  %1099 = vrot.lane.b32.xlu0 %v1040, 16
  %v1100 = vpop.permute.xlu0 %1099
  %1101 = vrot.lane.b32.xlu0 %v1041, 16
  %v1102 = vpop.permute.xlu0 %1101
  %1103 = vrot.lane.b32.xlu0 %v1042, 16
  %v1104 = vpop.permute.xlu0 %1103
  %v1105 = vsel %vm473, %v1100, %v1102
  %v1106 = vsel %vm473, %v1102, %v1104
  %v1107 = vsel %vm473, %v1104, %v1097
  %v1112 = vsel %vm473, %v1097, %v1100
  %v1113 = vld [vmem:[%s482] ss:$8 sm:$0xf]
  %v1115 = vlaneseq
  %v1116 = vshrl.u32 %v1115, 7
  %v1117 = vsub.s32 0, %v1116
  %v1118 = vrot.slane %v1113, %v1117
  %v1119 = vlaneseq
  %v1120 = vshrl.u32 %v1119, 7
  %v1121 = vsub.s32 1, %v1120
  %v1122 = vrot.slane %v1113, %v1121
  %v1123 = vlaneseq
  %v1124 = vshrl.u32 %v1123, 7
  %v1125 = vsub.s32 2, %v1124
  %v1126 = vrot.slane %v1113, %v1125
  %v1127 = vlaneseq
  %v1128 = vshrl.u32 %v1127, 7
  %v1129 = vsub.s32 3, %v1128
  %v1130 = vrot.slane %v1113, %v1129
  %v1135 = vmul.f32 %v1112, %v1118
  %v1136 = vmul.f32 %v1105, %v1122
  %v1137 = vmul.f32 %v1106, %v1126
  %v1138 = vmul.f32 %v1107, %v1130
  %1139 = vst [vmem:[#allocation3 + $0x20] sm:$0xff] %v1135
  %1140 = vst [vmem:[#allocation3 + $0x28] sm:$0xff] %v1136
  %1141 = vst [vmem:[#allocation3 + $0x30] sm:$0xff] %v1137
  %1142 = vst [vmem:[#allocation3 + $0x38] sm:$0xff] %v1138
  %1143 = vrot.lane.b32.xlu0 %v1043, 15
  %v1144 = vpop.permute.xlu0 %1143
  %1146 = vrot.lane.b32.xlu0 %v1040, 15
  %v1147 = vpop.permute.xlu0 %1146
  %1148 = vrot.lane.b32.xlu0 %v1041, 15
  %v1149 = vpop.permute.xlu0 %1148
  %1150 = vrot.lane.b32.xlu0 %v1042, 15
  %v1151 = vpop.permute.xlu0 %1150
  %v1152 = vsel %vm522, %v1147, %v1149
  %v1153 = vsel %vm522, %v1149, %v1151
  %v1154 = vsel %vm522, %v1151, %v1144
  %v1159 = vsel %vm522, %v1144, %v1147
  %v1160 = vld [vmem:[%s531] ss:$8 sm:$0xf]
  %v1162 = vlaneseq
  %v1163 = vshrl.u32 %v1162, 7
  %v1164 = vsub.s32 0, %v1163
  %v1165 = vrot.slane %v1160, %v1164
  %v1166 = vlaneseq
  %v1167 = vshrl.u32 %v1166, 7
  %v1168 = vsub.s32 1, %v1167
  %v1169 = vrot.slane %v1160, %v1168
  %v1170 = vlaneseq
  %v1171 = vshrl.u32 %v1170, 7
  %v1172 = vsub.s32 2, %v1171
  %v1173 = vrot.slane %v1160, %v1172
  %v1174 = vlaneseq
  %v1175 = vshrl.u32 %v1174, 7
  %v1176 = vsub.s32 3, %v1175
  %v1177 = vrot.slane %v1160, %v1176
  %v1182 = vmul.f32 %v1159, %v1165
  %v1183 = vmul.f32 %v1152, %v1169
  %v1184 = vmul.f32 %v1153, %v1173
  %v1185 = vmul.f32 %v1154, %v1177
  %1186 = vst [vmem:[#allocation3 + $0x40] sm:$0xff] %v1182
  %1187 = vst [vmem:[#allocation3 + $0x48] sm:$0xff] %v1183
  %1188 = vst [vmem:[#allocation3 + $0x50] sm:$0xff] %v1184
  %1189 = vst [vmem:[#allocation3 + $0x58] sm:$0xff] %v1185
  %1190 = vrot.lane.b32.xlu0 %v1043, 1
  %v1191 = vpop.permute.xlu0 %1190
  %1193 = vrot.lane.b32.xlu0 %v1040, 1
  %v1194 = vpop.permute.xlu0 %1193
  %1195 = vrot.lane.b32.xlu0 %v1041, 1
  %v1196 = vpop.permute.xlu0 %1195
  %1197 = vrot.lane.b32.xlu0 %v1042, 1
  %v1198 = vpop.permute.xlu0 %1197
  %v1199 = vsel %vm571, %v1194, %v1196
  %v1200 = vsel %vm571, %v1196, %v1198
  %v1201 = vsel %vm571, %v1198, %v1191
  %v1206 = vsel %vm571, %v1191, %v1194
  %v1207 = vld [vmem:[%s580] ss:$8 sm:$0xf]
  %v1209 = vlaneseq
  %v1210 = vshrl.u32 %v1209, 7
  %v1211 = vsub.s32 0, %v1210
  %v1212 = vrot.slane %v1207, %v1211
  %v1213 = vlaneseq
  %v1214 = vshrl.u32 %v1213, 7
  %v1215 = vsub.s32 1, %v1214
  %v1216 = vrot.slane %v1207, %v1215
  %v1217 = vlaneseq
  %v1218 = vshrl.u32 %v1217, 7
  %v1219 = vsub.s32 2, %v1218
  %v1220 = vrot.slane %v1207, %v1219
  %v1221 = vlaneseq
  %v1222 = vshrl.u32 %v1221, 7
  %v1223 = vsub.s32 3, %v1222
  %v1224 = vrot.slane %v1207, %v1223
  %v1229 = vmul.f32 %v1206, %v1212
  %v1230 = vmul.f32 %v1199, %v1216
  %v1231 = vmul.f32 %v1200, %v1220
  %v1232 = vmul.f32 %v1201, %v1224
  %1233 = vst [vmem:[#allocation3 + $0x60] sm:$0xff] %v1229
  %1234 = vst [vmem:[#allocation3 + $0x68] sm:$0xff] %v1230
  %1235 = vst [vmem:[#allocation3 + $0x70] sm:$0xff] %v1231
  %1236 = vst [vmem:[#allocation3 + $0x78] sm:$0xff] %v1232
  %v1237 = vld [vmem:[%s611] ss:$8 sm:$0xf]
  %v1239 = vlaneseq
  %v1240 = vshrl.u32 %v1239, 7
  %v1241 = vsub.s32 0, %v1240
  %v1242 = vrot.slane %v1237, %v1241
  %v1243 = vlaneseq
  %v1244 = vshrl.u32 %v1243, 7
  %v1245 = vsub.s32 1, %v1244
  %v1246 = vrot.slane %v1237, %v1245
  %v1247 = vlaneseq
  %v1248 = vshrl.u32 %v1247, 7
  %v1249 = vsub.s32 2, %v1248
  %v1250 = vrot.slane %v1237, %v1249
  %v1251 = vlaneseq
  %v1252 = vshrl.u32 %v1251, 7
  %v1253 = vsub.s32 3, %v1252
  %v1254 = vrot.slane %v1237, %v1253
  %v1259 = vmul.f32 %v1040, %v1242
  %v1260 = vmul.f32 %v1041, %v1246
  %v1261 = vmul.f32 %v1042, %v1250
  %v1262 = vmul.f32 %v1043, %v1254
  %1263 = vst [vmem:[#allocation3 + $0x80] sm:$0xff] %v1259
  %1264 = vst [vmem:[#allocation3 + $0x88] sm:$0xff] %v1260
  %1265 = vst [vmem:[#allocation3 + $0x90] sm:$0xff] %v1261
  %1266 = vst [vmem:[#allocation3 + $0x98] sm:$0xff] %v1262
  %1267 = vrot.lane.b32.xlu0 %v1040, 127
  %v1268 = vpop.permute.xlu0 %1267
  %1269 = vrot.lane.b32.xlu0 %v1041, 127
  %v1270 = vpop.permute.xlu0 %1269
  %1271 = vrot.lane.b32.xlu0 %v1042, 127
  %v1272 = vpop.permute.xlu0 %1271
  %1273 = vrot.lane.b32.xlu0 %v1043, 127
  %v1274 = vpop.permute.xlu0 %1273
  %v1275 = vsel %vm650, %v1268, %v1270
  %v1276 = vsel %vm650, %v1270, %v1272
  %v1277 = vsel %vm650, %v1272, %v1274
  %v1283 = vsel %vm650, %v1274, %v1268
  %v1284 = vld [vmem:[%s660] ss:$8 sm:$0xf]
  %v1286 = vlaneseq
  %v1287 = vshrl.u32 %v1286, 7
  %v1288 = vsub.s32 0, %v1287
  %v1289 = vrot.slane %v1284, %v1288
  %v1290 = vlaneseq
  %v1291 = vshrl.u32 %v1290, 7
  %v1292 = vsub.s32 1, %v1291
  %v1293 = vrot.slane %v1284, %v1292
  %v1294 = vlaneseq
  %v1295 = vshrl.u32 %v1294, 7
  %v1296 = vsub.s32 2, %v1295
  %v1297 = vrot.slane %v1284, %v1296
  %v1298 = vlaneseq
  %v1299 = vshrl.u32 %v1298, 7
  %v1300 = vsub.s32 3, %v1299
  %v1301 = vrot.slane %v1284, %v1300
  %v1306 = vmul.f32 %v1275, %v1289
  %v1307 = vmul.f32 %v1276, %v1293
  %v1308 = vmul.f32 %v1277, %v1297
  %v1309 = vmul.f32 %v1283, %v1301
  %1310 = vst [vmem:[#allocation3 + $0xa0] sm:$0xff] %v1306
  %1311 = vst [vmem:[#allocation3 + $0xa8] sm:$0xff] %v1307
  %1312 = vst [vmem:[#allocation3 + $0xb0] sm:$0xff] %v1308
  %1313 = vst [vmem:[#allocation3 + $0xb8] sm:$0xff] %v1309
  %1314 = vrot.lane.b32.xlu0 %v1040, 113
  %v1315 = vpop.permute.xlu0 %1314
  %1316 = vrot.lane.b32.xlu0 %v1041, 113
  %v1317 = vpop.permute.xlu0 %1316
  %1318 = vrot.lane.b32.xlu0 %v1042, 113
  %v1319 = vpop.permute.xlu0 %1318
  %1320 = vrot.lane.b32.xlu0 %v1043, 113
  %v1321 = vpop.permute.xlu0 %1320
  %v1322 = vsel %vm699, %v1315, %v1317
  %v1323 = vsel %vm699, %v1317, %v1319
  %v1324 = vsel %vm699, %v1319, %v1321
  %v1330 = vsel %vm699, %v1321, %v1315
  %v1331 = vld [vmem:[%s709] ss:$8 sm:$0xf]
  %v1333 = vlaneseq
  %v1334 = vshrl.u32 %v1333, 7
  %v1335 = vsub.s32 0, %v1334
  %v1336 = vrot.slane %v1331, %v1335
  %v1337 = vlaneseq
  %v1338 = vshrl.u32 %v1337, 7
  %v1339 = vsub.s32 1, %v1338
  %v1340 = vrot.slane %v1331, %v1339
  %v1341 = vlaneseq
  %v1342 = vshrl.u32 %v1341, 7
  %v1343 = vsub.s32 2, %v1342
  %v1344 = vrot.slane %v1331, %v1343
  %v1345 = vlaneseq
  %v1346 = vshrl.u32 %v1345, 7
  %v1347 = vsub.s32 3, %v1346
  %v1348 = vrot.slane %v1331, %v1347
  %v1353 = vmul.f32 %v1322, %v1336
  %v1354 = vmul.f32 %v1323, %v1340
  %v1355 = vmul.f32 %v1324, %v1344
  %v1356 = vmul.f32 %v1330, %v1348
  %1357 = vst [vmem:[#allocation3 + $0xc0] sm:$0xff] %v1353
  %1358 = vst [vmem:[#allocation3 + $0xc8] sm:$0xff] %v1354
  %1359 = vst [vmem:[#allocation3 + $0xd0] sm:$0xff] %v1355
  %1360 = vst [vmem:[#allocation3 + $0xd8] sm:$0xff] %v1356
  %1361 = vrot.lane.b32.xlu0 %v1040, 112
  %v1362 = vpop.permute.xlu0 %1361
  %1363 = vrot.lane.b32.xlu0 %v1041, 112
  %v1364 = vpop.permute.xlu0 %1363
  %1365 = vrot.lane.b32.xlu0 %v1042, 112
  %v1366 = vpop.permute.xlu0 %1365
  %1367 = vrot.lane.b32.xlu0 %v1043, 112
  %v1368 = vpop.permute.xlu0 %1367
  %v1369 = vsel %vm748, %v1362, %v1364
  %v1370 = vsel %vm748, %v1364, %v1366
  %v1371 = vsel %vm748, %v1366, %v1368
  %v1377 = vsel %vm748, %v1368, %v1362
  %v1378 = vld [vmem:[%s758] ss:$8 sm:$0xf]
  %v1380 = vlaneseq
  %v1381 = vshrl.u32 %v1380, 7
  %v1382 = vsub.s32 0, %v1381
  %v1383 = vrot.slane %v1378, %v1382
  %v1384 = vlaneseq
  %v1385 = vshrl.u32 %v1384, 7
  %v1386 = vsub.s32 1, %v1385
  %v1387 = vrot.slane %v1378, %v1386
  %v1388 = vlaneseq
  %v1389 = vshrl.u32 %v1388, 7
  %v1390 = vsub.s32 2, %v1389
  %v1391 = vrot.slane %v1378, %v1390
  %v1392 = vlaneseq
  %v1393 = vshrl.u32 %v1392, 7
  %v1394 = vsub.s32 3, %v1393
  %v1395 = vrot.slane %v1378, %v1394
  %v1400 = vmul.f32 %v1369, %v1383
  %v1401 = vmul.f32 %v1370, %v1387
  %v1402 = vmul.f32 %v1371, %v1391
  %v1403 = vmul.f32 %v1377, %v1395
  %1404 = vst [vmem:[#allocation3 + $0xe0] sm:$0xff] %v1400
  %1405 = vst [vmem:[#allocation3 + $0xe8] sm:$0xff] %v1401
  %1406 = vst [vmem:[#allocation3 + $0xf0] sm:$0xff] %v1402
  %1407 = vst [vmem:[#allocation3 + $0xf8] sm:$0xff] %v1403
  %1408 = vrot.lane.b32.xlu0 %v1040, 111
  %v1409 = vpop.permute.xlu0 %1408
  %1410 = vrot.lane.b32.xlu0 %v1041, 111
  %v1411 = vpop.permute.xlu0 %1410
  %1412 = vrot.lane.b32.xlu0 %v1042, 111
  %v1413 = vpop.permute.xlu0 %1412
  %1414 = vrot.lane.b32.xlu0 %v1043, 111
  %v1415 = vpop.permute.xlu0 %1414
  %v1416 = vsel %vm797, %v1409, %v1411
  %v1417 = vsel %vm797, %v1411, %v1413
  %v1418 = vsel %vm797, %v1413, %v1415
  %v1424 = vsel %vm797, %v1415, %v1409
  %v1425 = vld [vmem:[%s807] ss:$8 sm:$0xf]
  %v1427 = vlaneseq
  %v1428 = vshrl.u32 %v1427, 7
  %v1429 = vsub.s32 0, %v1428
  %v1430 = vrot.slane %v1425, %v1429
  %v1431 = vlaneseq
  %v1432 = vshrl.u32 %v1431, 7
  %v1433 = vsub.s32 1, %v1432
  %v1434 = vrot.slane %v1425, %v1433
  %v1435 = vlaneseq
  %v1436 = vshrl.u32 %v1435, 7
  %v1437 = vsub.s32 2, %v1436
  %v1438 = vrot.slane %v1425, %v1437
  %v1439 = vlaneseq
  %v1440 = vshrl.u32 %v1439, 7
  %v1441 = vsub.s32 3, %v1440
  %v1442 = vrot.slane %v1425, %v1441
  %v1447 = vmul.f32 %v1416, %v1430
  %v1448 = vmul.f32 %v1417, %v1434
  %v1449 = vmul.f32 %v1418, %v1438
  %v1450 = vmul.f32 %v1424, %v1442
  %1451 = vst [vmem:[#allocation3 + $0x100] sm:$0xff] %v1447
  %1452 = vst [vmem:[#allocation3 + $0x108] sm:$0xff] %v1448
  %1453 = vst [vmem:[#allocation3 + $0x110] sm:$0xff] %v1449
  %1454 = vst [vmem:[#allocation3 + $0x118] sm:$0xff] %v1450
  %v1455 = vld [vmem:[#allocation3] sm:$0xff]
  %v1456 = vld [vmem:[#allocation3 + $0x8] sm:$0xff]
  %v1457 = vld [vmem:[#allocation3 + $0x10] sm:$0xff]
  %v1458 = vld [vmem:[#allocation3 + $0x18] sm:$0xff]
  %v1459 = vld [vmem:[#allocation3 + $0x20] sm:$0xff]
  %v1460 = vld [vmem:[#allocation3 + $0x28] sm:$0xff]
  %v1461 = vld [vmem:[#allocation3 + $0x30] sm:$0xff]
  %v1462 = vld [vmem:[#allocation3 + $0x38] sm:$0xff]
  %v1463 = vld [vmem:[#allocation3 + $0x40] sm:$0xff]
  %v1464 = vld [vmem:[#allocation3 + $0x48] sm:$0xff]
  %v1465 = vld [vmem:[#allocation3 + $0x50] sm:$0xff]
  %v1466 = vld [vmem:[#allocation3 + $0x58] sm:$0xff]
  %v1467 = vld [vmem:[#allocation3 + $0x60] sm:$0xff]
  %v1468 = vld [vmem:[#allocation3 + $0x68] sm:$0xff]
  %v1469 = vld [vmem:[#allocation3 + $0x70] sm:$0xff]
  %v1470 = vld [vmem:[#allocation3 + $0x78] sm:$0xff]
  %v1471 = vld [vmem:[#allocation3 + $0x80] sm:$0xff]
  %v1472 = vld [vmem:[#allocation3 + $0x88] sm:$0xff]
  %v1473 = vld [vmem:[#allocation3 + $0x90] sm:$0xff]
  %v1474 = vld [vmem:[#allocation3 + $0x98] sm:$0xff]
  %v1475 = vld [vmem:[#allocation3 + $0xa0] sm:$0xff]
  %v1476 = vld [vmem:[#allocation3 + $0xa8] sm:$0xff]
  %v1477 = vld [vmem:[#allocation3 + $0xb0] sm:$0xff]
  %v1478 = vld [vmem:[#allocation3 + $0xb8] sm:$0xff]
  %v1479 = vld [vmem:[#allocation3 + $0xc0] sm:$0xff]
  %v1480 = vld [vmem:[#allocation3 + $0xc8] sm:$0xff]
  %v1481 = vld [vmem:[#allocation3 + $0xd0] sm:$0xff]
  %v1482 = vld [vmem:[#allocation3 + $0xd8] sm:$0xff]
  %v1483 = vld [vmem:[#allocation3 + $0xe0] sm:$0xff]
  %v1484 = vld [vmem:[#allocation3 + $0xe8] sm:$0xff]
  %v1485 = vld [vmem:[#allocation3 + $0xf0] sm:$0xff]
  %v1486 = vld [vmem:[#allocation3 + $0xf8] sm:$0xff]
  %v1487 = vld [vmem:[#allocation3 + $0x100] sm:$0xff]
  %v1488 = vld [vmem:[#allocation3 + $0x108] sm:$0xff]
  %v1489 = vld [vmem:[#allocation3 + $0x110] sm:$0xff]
  %v1490 = vld [vmem:[#allocation3 + $0x118] sm:$0xff]
  %v1491 = vld [vmem:[#allocation3 + $0x120] sm:$0x1]
  %v1492 = vld [vmem:[#allocation3 + $0x128] sm:$0x1]
  %v1493 = vld [vmem:[#allocation3 + $0x130] sm:$0x1]
  %v1494 = vld [vmem:[#allocation3 + $0x138] sm:$0x1]
  %v1496 = vsel %vm878, %v1044, 0
  %v1499 = vsel %vm237, %v1491, 0
  %v1502 = vsel %vm237, %v1492, 0
  %v1505 = vsel %vm237, %v1493, 0
  %v1508 = vsel %vm237, %v1494, 0
  %1510 = vmatprep.subr.mxu0 %v1456
  %1511 = vmatpush1.msra.mxu0 %v1455
  %1512 = vmatprep.subr.mxu0 %v1460
  %1513 = vmatpush1.msra.mxu0 %v1459
  %1514 = vmatprep.subr.mxu0 %v1464
  %1515 = vmatpush1.msra.mxu0 %v1463
  %1516 = vmatprep.subr.mxu0 %v1468
  %1517 = vmatpush1.msra.mxu0 %v1467
  %1518 = vmatprep.subr.mxu0 %v1472
  %1519 = vmatpush1.msra.mxu0 %v1471
  %1520 = vmatprep.subr.mxu0 %v1476
  %1521 = vmatpush1.msra.mxu0 %v1475
  %1522 = vmatprep.subr.mxu0 %v1480
  %1523 = vmatpush1.msra.mxu0 %v1479
  %1524 = vmatprep.subr.mxu0 %v1484
  %1525 = vmatpush1.msra.mxu0 %v1483
  %1526 = vmatprep.subr.mxu0 %v1488
  %1527 = vmatpush1.msra.mxu0 %v1487
  %1528 = vmatprep.subr.mxu0 %v1502
  %1529 = vmatpush1.msra.mxu0 %v1499
  %1530 = vmatprep.subr.mxu0 0.0
  %1531 = vmatpush1.msra.mxu0 0.0
  %1532 = vmatprep.subr.mxu0 0.0
  %1533 = vmatpush1.msra.mxu0 0.0
  %1534 = vmatprep.subr.mxu0 0.0
  %1535 = vmatpush1.msra.mxu0 0.0
  %1536 = vmatprep.subr.mxu0 0.0
  %1537 = vmatpush1.msra.mxu0 0.0
  %1538 = vmatprep.subr.mxu0 0.0
  %1539 = vmatpush1.msra.mxu0 0.0
  %1540 = vmatprep.subr.mxu0 0.0
  %1541 = vmatpush1.msra.mxu0 0.0
  %1542 = vmatprep.subr.mxu0 0.0
  %1543 = vmatpush1.msra.mxu0 0.0
  %1544 = vmatprep.subr.mxu0 0.0
  %1545 = vmatpush1.msra.mxu0 0.0
  %1546 = vmatprep.subr.mxu0 0.0
  %1547 = vmatpush1.msra.mxu0 0.0
  %1548 = vmatprep.subr.mxu0 0.0
  %1549 = vmatpush1.msra.mxu0 0.0
  %1550 = vmatprep.subr.mxu0 0.0
  %1551 = vmatpush1.msra.mxu0 0.0
  %1552 = vmatprep.subr.mxu0 0.0
  %1553 = vmatpush1.msra.mxu0 0.0
  %1554 = vmatprep.subr.mxu0 0.0
  %1555 = vmatpush1.msra.mxu0 0.0
  %1556 = vmatprep.subr.mxu0 0.0
  %1557 = vmatpush1.msra.mxu0 0.0
  %1558 = vmatprep.subr.mxu0 0.0
  %1559 = vmatpush1.msra.mxu0 0.0
  %1560 = vmatprep.subr.mxu0 0.0
  %1561 = vmatpush1.msra.mxu0 0.0
  %1562 = vmatprep.subr.mxu0 0.0
  %1563 = vmatpush1.msra.mxu0 0.0
  %1564 = vmatprep.subr.mxu0 0.0
  %1565 = vmatpush1.msra.mxu0 0.0
  %1566 = vmatprep.subr.mxu0 0.0
  %1567 = vmatpush1.msra.mxu0 0.0
  %1568 = vmatprep.subr.mxu0 0.0
  %1569 = vmatpush1.msra.mxu0 0.0
  %1570 = vmatprep.subr.mxu0 0.0
  %1571 = vmatpush1.msra.mxu0 0.0
  %1572 = vmatprep.subr.mxu0 0.0
  %1573 = vmatpush1.msra.mxu0 0.0
  %1574 = vmatprep.mubr.f32.mxu0 0.0
  %1575 = vmatmul.mubr.f32.gmra.mrb[0].mxu0 %v1496
  %v1576 = vpop.f32.mrb[0].mxu0
  %v1577 = vadd.f32 0.0, %v1576
  %v1578 = vpop.f32.mrb[0].mxu0
  %v1579 = vadd.f32 0.0, %v1578
  %1580 = vdwg.mxu0
  %1581 = vmatprep.subr.mxu0 %v1458
  %1582 = vmatpush1.msra.mxu0 %v1457
  %1583 = vmatprep.subr.mxu0 %v1462
  %1584 = vmatpush1.msra.mxu0 %v1461
  %1585 = vmatprep.subr.mxu0 %v1466
  %1586 = vmatpush1.msra.mxu0 %v1465
  %1587 = vmatprep.subr.mxu0 %v1470
  %1588 = vmatpush1.msra.mxu0 %v1469
  %1589 = vmatprep.subr.mxu0 %v1474
  %1590 = vmatpush1.msra.mxu0 %v1473
  %1591 = vmatprep.subr.mxu0 %v1478
  %1592 = vmatpush1.msra.mxu0 %v1477
  %1593 = vmatprep.subr.mxu0 %v1482
  %1594 = vmatpush1.msra.mxu0 %v1481
  %1595 = vmatprep.subr.mxu0 %v1486
  %1596 = vmatpush1.msra.mxu0 %v1485
  %1597 = vmatprep.subr.mxu0 %v1490
  %1598 = vmatpush1.msra.mxu0 %v1489
  %1599 = vmatprep.subr.mxu0 %v1508
  %1600 = vmatpush1.msra.mxu0 %v1505
  %1601 = vmatprep.subr.mxu0 0.0
  %1602 = vmatpush1.msra.mxu0 0.0
  %1603 = vmatprep.subr.mxu0 0.0
  %1604 = vmatpush1.msra.mxu0 0.0
  %1605 = vmatprep.subr.mxu0 0.0
  %1606 = vmatpush1.msra.mxu0 0.0
  %1607 = vmatprep.subr.mxu0 0.0
  %1608 = vmatpush1.msra.mxu0 0.0
  %1609 = vmatprep.subr.mxu0 0.0
  %1610 = vmatpush1.msra.mxu0 0.0
  %1611 = vmatprep.subr.mxu0 0.0
  %1612 = vmatpush1.msra.mxu0 0.0
  %1613 = vmatprep.subr.mxu0 0.0
  %1614 = vmatpush1.msra.mxu0 0.0
  %1615 = vmatprep.subr.mxu0 0.0
  %1616 = vmatpush1.msra.mxu0 0.0
  %1617 = vmatprep.subr.mxu0 0.0
  %1618 = vmatpush1.msra.mxu0 0.0
  %1619 = vmatprep.subr.mxu0 0.0
  %1620 = vmatpush1.msra.mxu0 0.0
  %1621 = vmatprep.subr.mxu0 0.0
  %1622 = vmatpush1.msra.mxu0 0.0
  %1623 = vmatprep.subr.mxu0 0.0
  %1624 = vmatpush1.msra.mxu0 0.0
  %1625 = vmatprep.subr.mxu0 0.0
  %1626 = vmatpush1.msra.mxu0 0.0
  %1627 = vmatprep.subr.mxu0 0.0
  %1628 = vmatpush1.msra.mxu0 0.0
  %1629 = vmatprep.subr.mxu0 0.0
  %1630 = vmatpush1.msra.mxu0 0.0
  %1631 = vmatprep.subr.mxu0 0.0
  %1632 = vmatpush1.msra.mxu0 0.0
  %1633 = vmatprep.subr.mxu0 0.0
  %1634 = vmatpush1.msra.mxu0 0.0
  %1635 = vmatprep.subr.mxu0 0.0
  %1636 = vmatpush1.msra.mxu0 0.0
  %1637 = vmatprep.subr.mxu0 0.0
  %1638 = vmatpush1.msra.mxu0 0.0
  %1639 = vmatprep.subr.mxu0 0.0
  %1640 = vmatpush1.msra.mxu0 0.0
  %1641 = vmatprep.subr.mxu0 0.0
  %1642 = vmatpush1.msra.mxu0 0.0
  %1643 = vmatprep.subr.mxu0 0.0
  %1644 = vmatpush1.msra.mxu0 0.0
  %1645 = vmatprep.mubr.f32.mxu0 0.0
  %1646 = vmatmul.mubr.f32.gmra.mrb[0].mxu0 %v1496
  %v1647 = vpop.f32.mrb[0].mxu0
  %v1648 = vadd.f32 0.0, %v1647
  %v1649 = vpop.f32.mrb[0].mxu0
  %v1650 = vadd.f32 0.0, %v1649
  %1651 = vdwg.mxu0
  %v1652 = vadd.f32 %v323, %v1577
  %v1653 = vadd.f32 %v325, %v1579
  %v1654 = vadd.f32 %v400, %v1648
  %v1655 = vadd.f32 %v402, %v1650
  %s1656 = scalar_lea.vmem %s4, 8
  %v1657 = vld [vmem:[%s1656] sm:$0xff]
  %1659 = vrot.lane.b32.xlu0 %v1655, 17
  %v1660 = vpop.permute.xlu0 %1659
  %1665 = vrot.lane.b32.xlu0 %v1652, 17
  %v1666 = vpop.permute.xlu0 %1665
  %1667 = vrot.lane.b32.xlu0 %v1653, 17
  %v1668 = vpop.permute.xlu0 %1667
  %1669 = vrot.lane.b32.xlu0 %v1654, 17
  %v1670 = vpop.permute.xlu0 %1669
  %v1671 = vsel %vm425, %v1666, %v1668
  %v1672 = vsel %vm425, %v1668, %v1670
  %v1673 = vsel %vm425, %v1670, %v1660
  %v1678 = vsel %vm425, %v1660, %v1666
  %v1679 = vld [vmem:[%s3] ss:$8 sm:$0xf]
  %v1681 = vlaneseq
  %v1682 = vshrl.u32 %v1681, 7
  %v1683 = vsub.s32 0, %v1682
  %v1684 = vrot.slane %v1679, %v1683
  %v1685 = vlaneseq
  %v1686 = vshrl.u32 %v1685, 7
  %v1687 = vsub.s32 1, %v1686
  %v1688 = vrot.slane %v1679, %v1687
  %v1689 = vlaneseq
  %v1690 = vshrl.u32 %v1689, 7
  %v1691 = vsub.s32 2, %v1690
  %v1692 = vrot.slane %v1679, %v1691
  %v1693 = vlaneseq
  %v1694 = vshrl.u32 %v1693, 7
  %v1695 = vsub.s32 3, %v1694
  %v1696 = vrot.slane %v1679, %v1695
  %v1701 = vmul.f32 %v1678, %v1684
  %v1702 = vmul.f32 %v1671, %v1688
  %v1703 = vmul.f32 %v1672, %v1692
  %v1704 = vmul.f32 %v1673, %v1696
  %1705 = vst [vmem:[#allocation3] sm:$0xff] %v1701
  %1706 = vst [vmem:[#allocation3 + $0x8] sm:$0xff] %v1702
  %1707 = vst [vmem:[#allocation3 + $0x10] sm:$0xff] %v1703
  %1708 = vst [vmem:[#allocation3 + $0x18] sm:$0xff] %v1704
  %1709 = vrot.lane.b32.xlu0 %v1655, 16
  %v1710 = vpop.permute.xlu0 %1709
  %1712 = vrot.lane.b32.xlu0 %v1652, 16
  %v1713 = vpop.permute.xlu0 %1712
  %1714 = vrot.lane.b32.xlu0 %v1653, 16
  %v1715 = vpop.permute.xlu0 %1714
  %1716 = vrot.lane.b32.xlu0 %v1654, 16
  %v1717 = vpop.permute.xlu0 %1716
  %v1718 = vsel %vm473, %v1713, %v1715
  %v1719 = vsel %vm473, %v1715, %v1717
  %v1720 = vsel %vm473, %v1717, %v1710
  %v1725 = vsel %vm473, %v1710, %v1713
  %v1726 = vld [vmem:[%s482] ss:$8 sm:$0xf]
  %v1728 = vlaneseq
  %v1729 = vshrl.u32 %v1728, 7
  %v1730 = vsub.s32 0, %v1729
  %v1731 = vrot.slane %v1726, %v1730
  %v1732 = vlaneseq
  %v1733 = vshrl.u32 %v1732, 7
  %v1734 = vsub.s32 1, %v1733
  %v1735 = vrot.slane %v1726, %v1734
  %v1736 = vlaneseq
  %v1737 = vshrl.u32 %v1736, 7
  %v1738 = vsub.s32 2, %v1737
  %v1739 = vrot.slane %v1726, %v1738
  %v1740 = vlaneseq
  %v1741 = vshrl.u32 %v1740, 7
  %v1742 = vsub.s32 3, %v1741
  %v1743 = vrot.slane %v1726, %v1742
  %v1748 = vmul.f32 %v1725, %v1731
  %v1749 = vmul.f32 %v1718, %v1735
  %v1750 = vmul.f32 %v1719, %v1739
  %v1751 = vmul.f32 %v1720, %v1743
  %1752 = vst [vmem:[#allocation3 + $0x20] sm:$0xff] %v1748
  %1753 = vst [vmem:[#allocation3 + $0x28] sm:$0xff] %v1749
  %1754 = vst [vmem:[#allocation3 + $0x30] sm:$0xff] %v1750
  %1755 = vst [vmem:[#allocation3 + $0x38] sm:$0xff] %v1751
  %1756 = vrot.lane.b32.xlu0 %v1655, 15
  %v1757 = vpop.permute.xlu0 %1756
  %1759 = vrot.lane.b32.xlu0 %v1652, 15
  %v1760 = vpop.permute.xlu0 %1759
  %1761 = vrot.lane.b32.xlu0 %v1653, 15
  %v1762 = vpop.permute.xlu0 %1761
  %1763 = vrot.lane.b32.xlu0 %v1654, 15
  %v1764 = vpop.permute.xlu0 %1763
  %v1765 = vsel %vm522, %v1760, %v1762
  %v1766 = vsel %vm522, %v1762, %v1764
  %v1767 = vsel %vm522, %v1764, %v1757
  %v1772 = vsel %vm522, %v1757, %v1760
  %v1773 = vld [vmem:[%s531] ss:$8 sm:$0xf]
  %v1775 = vlaneseq
  %v1776 = vshrl.u32 %v1775, 7
  %v1777 = vsub.s32 0, %v1776
  %v1778 = vrot.slane %v1773, %v1777
  %v1779 = vlaneseq
  %v1780 = vshrl.u32 %v1779, 7
  %v1781 = vsub.s32 1, %v1780
  %v1782 = vrot.slane %v1773, %v1781
  %v1783 = vlaneseq
  %v1784 = vshrl.u32 %v1783, 7
  %v1785 = vsub.s32 2, %v1784
  %v1786 = vrot.slane %v1773, %v1785
  %v1787 = vlaneseq
  %v1788 = vshrl.u32 %v1787, 7
  %v1789 = vsub.s32 3, %v1788
  %v1790 = vrot.slane %v1773, %v1789
  %v1795 = vmul.f32 %v1772, %v1778
  %v1796 = vmul.f32 %v1765, %v1782
  %v1797 = vmul.f32 %v1766, %v1786
  %v1798 = vmul.f32 %v1767, %v1790
  %1799 = vst [vmem:[#allocation3 + $0x40] sm:$0xff] %v1795
  %1800 = vst [vmem:[#allocation3 + $0x48] sm:$0xff] %v1796
  %1801 = vst [vmem:[#allocation3 + $0x50] sm:$0xff] %v1797
  %1802 = vst [vmem:[#allocation3 + $0x58] sm:$0xff] %v1798
  %1803 = vrot.lane.b32.xlu0 %v1655, 1
  %v1804 = vpop.permute.xlu0 %1803
  %1806 = vrot.lane.b32.xlu0 %v1652, 1
  %v1807 = vpop.permute.xlu0 %1806
  %1808 = vrot.lane.b32.xlu0 %v1653, 1
  %v1809 = vpop.permute.xlu0 %1808
  %1810 = vrot.lane.b32.xlu0 %v1654, 1
  %v1811 = vpop.permute.xlu0 %1810
  %v1812 = vsel %vm571, %v1807, %v1809
  %v1813 = vsel %vm571, %v1809, %v1811
  %v1814 = vsel %vm571, %v1811, %v1804
  %v1819 = vsel %vm571, %v1804, %v1807
  %v1820 = vld [vmem:[%s580] ss:$8 sm:$0xf]
  %v1822 = vlaneseq
  %v1823 = vshrl.u32 %v1822, 7
  %v1824 = vsub.s32 0, %v1823
  %v1825 = vrot.slane %v1820, %v1824
  %v1826 = vlaneseq
  %v1827 = vshrl.u32 %v1826, 7
  %v1828 = vsub.s32 1, %v1827
  %v1829 = vrot.slane %v1820, %v1828
  %v1830 = vlaneseq
  %v1831 = vshrl.u32 %v1830, 7
  %v1832 = vsub.s32 2, %v1831
  %v1833 = vrot.slane %v1820, %v1832
  %v1834 = vlaneseq
  %v1835 = vshrl.u32 %v1834, 7
  %v1836 = vsub.s32 3, %v1835
  %v1837 = vrot.slane %v1820, %v1836
  %v1842 = vmul.f32 %v1819, %v1825
  %v1843 = vmul.f32 %v1812, %v1829
  %v1844 = vmul.f32 %v1813, %v1833
  %v1845 = vmul.f32 %v1814, %v1837
  %1846 = vst [vmem:[#allocation3 + $0x60] sm:$0xff] %v1842
  %1847 = vst [vmem:[#allocation3 + $0x68] sm:$0xff] %v1843
  %1848 = vst [vmem:[#allocation3 + $0x70] sm:$0xff] %v1844
  %1849 = vst [vmem:[#allocation3 + $0x78] sm:$0xff] %v1845
  %v1850 = vld [vmem:[%s611] ss:$8 sm:$0xf]
  %v1852 = vlaneseq
  %v1853 = vshrl.u32 %v1852, 7
  %v1854 = vsub.s32 0, %v1853
  %v1855 = vrot.slane %v1850, %v1854
  %v1856 = vlaneseq
  %v1857 = vshrl.u32 %v1856, 7
  %v1858 = vsub.s32 1, %v1857
  %v1859 = vrot.slane %v1850, %v1858
  %v1860 = vlaneseq
  %v1861 = vshrl.u32 %v1860, 7
  %v1862 = vsub.s32 2, %v1861
  %v1863 = vrot.slane %v1850, %v1862
  %v1864 = vlaneseq
  %v1865 = vshrl.u32 %v1864, 7
  %v1866 = vsub.s32 3, %v1865
  %v1867 = vrot.slane %v1850, %v1866
  %v1872 = vmul.f32 %v1652, %v1855
  %v1873 = vmul.f32 %v1653, %v1859
  %v1874 = vmul.f32 %v1654, %v1863
  %v1875 = vmul.f32 %v1655, %v1867
  %1876 = vst [vmem:[#allocation3 + $0x80] sm:$0xff] %v1872
  %1877 = vst [vmem:[#allocation3 + $0x88] sm:$0xff] %v1873
  %1878 = vst [vmem:[#allocation3 + $0x90] sm:$0xff] %v1874
  %1879 = vst [vmem:[#allocation3 + $0x98] sm:$0xff] %v1875
  %1880 = vrot.lane.b32.xlu0 %v1652, 127
  %v1881 = vpop.permute.xlu0 %1880
  %1882 = vrot.lane.b32.xlu0 %v1653, 127
  %v1883 = vpop.permute.xlu0 %1882
  %1884 = vrot.lane.b32.xlu0 %v1654, 127
  %v1885 = vpop.permute.xlu0 %1884
  %1886 = vrot.lane.b32.xlu0 %v1655, 127
  %v1887 = vpop.permute.xlu0 %1886
  %v1888 = vsel %vm650, %v1881, %v1883
  %v1889 = vsel %vm650, %v1883, %v1885
  %v1890 = vsel %vm650, %v1885, %v1887
  %v1896 = vsel %vm650, %v1887, %v1881
  %v1897 = vld [vmem:[%s660] ss:$8 sm:$0xf]
  %v1899 = vlaneseq
  %v1900 = vshrl.u32 %v1899, 7
  %v1901 = vsub.s32 0, %v1900
  %v1902 = vrot.slane %v1897, %v1901
  %v1903 = vlaneseq
  %v1904 = vshrl.u32 %v1903, 7
  %v1905 = vsub.s32 1, %v1904
  %v1906 = vrot.slane %v1897, %v1905
  %v1907 = vlaneseq
  %v1908 = vshrl.u32 %v1907, 7
  %v1909 = vsub.s32 2, %v1908
  %v1910 = vrot.slane %v1897, %v1909
  %v1911 = vlaneseq
  %v1912 = vshrl.u32 %v1911, 7
  %v1913 = vsub.s32 3, %v1912
  %v1914 = vrot.slane %v1897, %v1913
  %v1919 = vmul.f32 %v1888, %v1902
  %v1920 = vmul.f32 %v1889, %v1906
  %v1921 = vmul.f32 %v1890, %v1910
  %v1922 = vmul.f32 %v1896, %v1914
  %1923 = vst [vmem:[#allocation3 + $0xa0] sm:$0xff] %v1919
  %1924 = vst [vmem:[#allocation3 + $0xa8] sm:$0xff] %v1920
  %1925 = vst [vmem:[#allocation3 + $0xb0] sm:$0xff] %v1921
  %1926 = vst [vmem:[#allocation3 + $0xb8] sm:$0xff] %v1922
  %1927 = vrot.lane.b32.xlu0 %v1652, 113
  %v1928 = vpop.permute.xlu0 %1927
  %1929 = vrot.lane.b32.xlu0 %v1653, 113
  %v1930 = vpop.permute.xlu0 %1929
  %1931 = vrot.lane.b32.xlu0 %v1654, 113
  %v1932 = vpop.permute.xlu0 %1931
  %1933 = vrot.lane.b32.xlu0 %v1655, 113
  %v1934 = vpop.permute.xlu0 %1933
  %v1935 = vsel %vm699, %v1928, %v1930
  %v1936 = vsel %vm699, %v1930, %v1932
  %v1937 = vsel %vm699, %v1932, %v1934
  %v1943 = vsel %vm699, %v1934, %v1928
  %v1944 = vld [vmem:[%s709] ss:$8 sm:$0xf]
  %v1946 = vlaneseq
  %v1947 = vshrl.u32 %v1946, 7
  %v1948 = vsub.s32 0, %v1947
  %v1949 = vrot.slane %v1944, %v1948
  %v1950 = vlaneseq
  %v1951 = vshrl.u32 %v1950, 7
  %v1952 = vsub.s32 1, %v1951
  %v1953 = vrot.slane %v1944, %v1952
  %v1954 = vlaneseq
  %v1955 = vshrl.u32 %v1954, 7
  %v1956 = vsub.s32 2, %v1955
  %v1957 = vrot.slane %v1944, %v1956
  %v1958 = vlaneseq
  %v1959 = vshrl.u32 %v1958, 7
  %v1960 = vsub.s32 3, %v1959
  %v1961 = vrot.slane %v1944, %v1960
  %v1966 = vmul.f32 %v1935, %v1949
  %v1967 = vmul.f32 %v1936, %v1953
  %v1968 = vmul.f32 %v1937, %v1957
  %v1969 = vmul.f32 %v1943, %v1961
  %1970 = vst [vmem:[#allocation3 + $0xc0] sm:$0xff] %v1966
  %1971 = vst [vmem:[#allocation3 + $0xc8] sm:$0xff] %v1967
  %1972 = vst [vmem:[#allocation3 + $0xd0] sm:$0xff] %v1968
  %1973 = vst [vmem:[#allocation3 + $0xd8] sm:$0xff] %v1969
  %1974 = vrot.lane.b32.xlu0 %v1652, 112
  %v1975 = vpop.permute.xlu0 %1974
  %1976 = vrot.lane.b32.xlu0 %v1653, 112
  %v1977 = vpop.permute.xlu0 %1976
  %1978 = vrot.lane.b32.xlu0 %v1654, 112
  %v1979 = vpop.permute.xlu0 %1978
  %1980 = vrot.lane.b32.xlu0 %v1655, 112
  %v1981 = vpop.permute.xlu0 %1980
  %v1982 = vsel %vm748, %v1975, %v1977
  %v1983 = vsel %vm748, %v1977, %v1979
  %v1984 = vsel %vm748, %v1979, %v1981
  %v1990 = vsel %vm748, %v1981, %v1975
  %v1991 = vld [vmem:[%s758] ss:$8 sm:$0xf]
  %v1993 = vlaneseq
  %v1994 = vshrl.u32 %v1993, 7
  %v1995 = vsub.s32 0, %v1994
  %v1996 = vrot.slane %v1991, %v1995
  %v1997 = vlaneseq
  %v1998 = vshrl.u32 %v1997, 7
  %v1999 = vsub.s32 1, %v1998
  %v2000 = vrot.slane %v1991, %v1999
  %v2001 = vlaneseq
  %v2002 = vshrl.u32 %v2001, 7
  %v2003 = vsub.s32 2, %v2002
  %v2004 = vrot.slane %v1991, %v2003
  %v2005 = vlaneseq
  %v2006 = vshrl.u32 %v2005, 7
  %v2007 = vsub.s32 3, %v2006
  %v2008 = vrot.slane %v1991, %v2007
  %v2013 = vmul.f32 %v1982, %v1996
  %v2014 = vmul.f32 %v1983, %v2000
  %v2015 = vmul.f32 %v1984, %v2004
  %v2016 = vmul.f32 %v1990, %v2008
  %2017 = vst [vmem:[#allocation3 + $0xe0] sm:$0xff] %v2013
  %2018 = vst [vmem:[#allocation3 + $0xe8] sm:$0xff] %v2014
  %2019 = vst [vmem:[#allocation3 + $0xf0] sm:$0xff] %v2015
  %2020 = vst [vmem:[#allocation3 + $0xf8] sm:$0xff] %v2016
  %2021 = vrot.lane.b32.xlu0 %v1652, 111
  %v2022 = vpop.permute.xlu0 %2021
  %2023 = vrot.lane.b32.xlu0 %v1653, 111
  %v2024 = vpop.permute.xlu0 %2023
  %2025 = vrot.lane.b32.xlu0 %v1654, 111
  %v2026 = vpop.permute.xlu0 %2025
  %2027 = vrot.lane.b32.xlu0 %v1655, 111
  %v2028 = vpop.permute.xlu0 %2027
  %v2029 = vsel %vm797, %v2022, %v2024
  %v2030 = vsel %vm797, %v2024, %v2026
  %v2031 = vsel %vm797, %v2026, %v2028
  %v2037 = vsel %vm797, %v2028, %v2022
  %v2038 = vld [vmem:[%s807] ss:$8 sm:$0xf]
  %v2040 = vlaneseq
  %v2041 = vshrl.u32 %v2040, 7
  %v2042 = vsub.s32 0, %v2041
  %v2043 = vrot.slane %v2038, %v2042
  %v2044 = vlaneseq
  %v2045 = vshrl.u32 %v2044, 7
  %v2046 = vsub.s32 1, %v2045
  %v2047 = vrot.slane %v2038, %v2046
  %v2048 = vlaneseq
  %v2049 = vshrl.u32 %v2048, 7
  %v2050 = vsub.s32 2, %v2049
  %v2051 = vrot.slane %v2038, %v2050
  %v2052 = vlaneseq
  %v2053 = vshrl.u32 %v2052, 7
  %v2054 = vsub.s32 3, %v2053
  %v2055 = vrot.slane %v2038, %v2054
  %v2060 = vmul.f32 %v2029, %v2043
  %v2061 = vmul.f32 %v2030, %v2047
  %v2062 = vmul.f32 %v2031, %v2051
  %v2063 = vmul.f32 %v2037, %v2055
  %2064 = vst [vmem:[#allocation3 + $0x100] sm:$0xff] %v2060
  %2065 = vst [vmem:[#allocation3 + $0x108] sm:$0xff] %v2061
  %2066 = vst [vmem:[#allocation3 + $0x110] sm:$0xff] %v2062
  %2067 = vst [vmem:[#allocation3 + $0x118] sm:$0xff] %v2063
  %v2068 = vld [vmem:[#allocation3] sm:$0xff]
  %v2069 = vld [vmem:[#allocation3 + $0x8] sm:$0xff]
  %v2070 = vld [vmem:[#allocation3 + $0x10] sm:$0xff]
  %v2071 = vld [vmem:[#allocation3 + $0x18] sm:$0xff]
  %v2072 = vld [vmem:[#allocation3 + $0x20] sm:$0xff]
  %v2073 = vld [vmem:[#allocation3 + $0x28] sm:$0xff]
  %v2074 = vld [vmem:[#allocation3 + $0x30] sm:$0xff]
  %v2075 = vld [vmem:[#allocation3 + $0x38] sm:$0xff]
  %v2076 = vld [vmem:[#allocation3 + $0x40] sm:$0xff]
  %v2077 = vld [vmem:[#allocation3 + $0x48] sm:$0xff]
  %v2078 = vld [vmem:[#allocation3 + $0x50] sm:$0xff]
  %v2079 = vld [vmem:[#allocation3 + $0x58] sm:$0xff]
  %v2080 = vld [vmem:[#allocation3 + $0x60] sm:$0xff]
  %v2081 = vld [vmem:[#allocation3 + $0x68] sm:$0xff]
  %v2082 = vld [vmem:[#allocation3 + $0x70] sm:$0xff]
  %v2083 = vld [vmem:[#allocation3 + $0x78] sm:$0xff]
  %v2084 = vld [vmem:[#allocation3 + $0x80] sm:$0xff]
  %v2085 = vld [vmem:[#allocation3 + $0x88] sm:$0xff]
  %v2086 = vld [vmem:[#allocation3 + $0x90] sm:$0xff]
  %v2087 = vld [vmem:[#allocation3 + $0x98] sm:$0xff]
  %v2088 = vld [vmem:[#allocation3 + $0xa0] sm:$0xff]
  %v2089 = vld [vmem:[#allocation3 + $0xa8] sm:$0xff]
  %v2090 = vld [vmem:[#allocation3 + $0xb0] sm:$0xff]
  %v2091 = vld [vmem:[#allocation3 + $0xb8] sm:$0xff]
  %v2092 = vld [vmem:[#allocation3 + $0xc0] sm:$0xff]
  %v2093 = vld [vmem:[#allocation3 + $0xc8] sm:$0xff]
  %v2094 = vld [vmem:[#allocation3 + $0xd0] sm:$0xff]
  %v2095 = vld [vmem:[#allocation3 + $0xd8] sm:$0xff]
  %v2096 = vld [vmem:[#allocation3 + $0xe0] sm:$0xff]
  %v2097 = vld [vmem:[#allocation3 + $0xe8] sm:$0xff]
  %v2098 = vld [vmem:[#allocation3 + $0xf0] sm:$0xff]
  %v2099 = vld [vmem:[#allocation3 + $0xf8] sm:$0xff]
  %v2100 = vld [vmem:[#allocation3 + $0x100] sm:$0xff]
  %v2101 = vld [vmem:[#allocation3 + $0x108] sm:$0xff]
  %v2102 = vld [vmem:[#allocation3 + $0x110] sm:$0xff]
  %v2103 = vld [vmem:[#allocation3 + $0x118] sm:$0xff]
  %v2104 = vld [vmem:[#allocation3 + $0x120] sm:$0x1]
  %v2105 = vld [vmem:[#allocation3 + $0x128] sm:$0x1]
  %v2106 = vld [vmem:[#allocation3 + $0x130] sm:$0x1]
  %v2107 = vld [vmem:[#allocation3 + $0x138] sm:$0x1]
  %v2109 = vsel %vm878, %v1657, 0
  %v2112 = vsel %vm237, %v2104, 0
  %v2115 = vsel %vm237, %v2105, 0
  %v2118 = vsel %vm237, %v2106, 0
  %v2121 = vsel %vm237, %v2107, 0
  %2123 = vmatprep.subr.mxu0 %v2069
  %2124 = vmatpush1.msra.mxu0 %v2068
  %2125 = vmatprep.subr.mxu0 %v2073
  %2126 = vmatpush1.msra.mxu0 %v2072
  %2127 = vmatprep.subr.mxu0 %v2077
  %2128 = vmatpush1.msra.mxu0 %v2076
  %2129 = vmatprep.subr.mxu0 %v2081
  %2130 = vmatpush1.msra.mxu0 %v2080
  %2131 = vmatprep.subr.mxu0 %v2085
  %2132 = vmatpush1.msra.mxu0 %v2084
  %2133 = vmatprep.subr.mxu0 %v2089
  %2134 = vmatpush1.msra.mxu0 %v2088
  %2135 = vmatprep.subr.mxu0 %v2093
  %2136 = vmatpush1.msra.mxu0 %v2092
  %2137 = vmatprep.subr.mxu0 %v2097
  %2138 = vmatpush1.msra.mxu0 %v2096
  %2139 = vmatprep.subr.mxu0 %v2101
  %2140 = vmatpush1.msra.mxu0 %v2100
  %2141 = vmatprep.subr.mxu0 %v2115
  %2142 = vmatpush1.msra.mxu0 %v2112
  %2143 = vmatprep.subr.mxu0 0.0
  %2144 = vmatpush1.msra.mxu0 0.0
  %2145 = vmatprep.subr.mxu0 0.0
  %2146 = vmatpush1.msra.mxu0 0.0
  %2147 = vmatprep.subr.mxu0 0.0
  %2148 = vmatpush1.msra.mxu0 0.0
  %2149 = vmatprep.subr.mxu0 0.0
  %2150 = vmatpush1.msra.mxu0 0.0
  %2151 = vmatprep.subr.mxu0 0.0
  %2152 = vmatpush1.msra.mxu0 0.0
  %2153 = vmatprep.subr.mxu0 0.0
  %2154 = vmatpush1.msra.mxu0 0.0
  %2155 = vmatprep.subr.mxu0 0.0
  %2156 = vmatpush1.msra.mxu0 0.0
  %2157 = vmatprep.subr.mxu0 0.0
  %2158 = vmatpush1.msra.mxu0 0.0
  %2159 = vmatprep.subr.mxu0 0.0
  %2160 = vmatpush1.msra.mxu0 0.0
  %2161 = vmatprep.subr.mxu0 0.0
  %2162 = vmatpush1.msra.mxu0 0.0
  %2163 = vmatprep.subr.mxu0 0.0
  %2164 = vmatpush1.msra.mxu0 0.0
  %2165 = vmatprep.subr.mxu0 0.0
  %2166 = vmatpush1.msra.mxu0 0.0
  %2167 = vmatprep.subr.mxu0 0.0
  %2168 = vmatpush1.msra.mxu0 0.0
  %2169 = vmatprep.subr.mxu0 0.0
  %2170 = vmatpush1.msra.mxu0 0.0
  %2171 = vmatprep.subr.mxu0 0.0
  %2172 = vmatpush1.msra.mxu0 0.0
  %2173 = vmatprep.subr.mxu0 0.0
  %2174 = vmatpush1.msra.mxu0 0.0
  %2175 = vmatprep.subr.mxu0 0.0
  %2176 = vmatpush1.msra.mxu0 0.0
  %2177 = vmatprep.subr.mxu0 0.0
  %2178 = vmatpush1.msra.mxu0 0.0
  %2179 = vmatprep.subr.mxu0 0.0
  %2180 = vmatpush1.msra.mxu0 0.0
  %2181 = vmatprep.subr.mxu0 0.0
  %2182 = vmatpush1.msra.mxu0 0.0
  %2183 = vmatprep.subr.mxu0 0.0
  %2184 = vmatpush1.msra.mxu0 0.0
  %2185 = vmatprep.subr.mxu0 0.0
  %2186 = vmatpush1.msra.mxu0 0.0
  %2187 = vmatprep.mubr.f32.mxu0 0.0
  %2188 = vmatmul.mubr.f32.gmra.mrb[0].mxu0 %v2109
  %v2189 = vpop.f32.mrb[0].mxu0
  %v2190 = vadd.f32 0.0, %v2189
  %v2191 = vpop.f32.mrb[0].mxu0
  %v2192 = vadd.f32 0.0, %v2191
  %2193 = vdwg.mxu0
  %2194 = vmatprep.subr.mxu0 %v2071
  %2195 = vmatpush1.msra.mxu0 %v2070
  %2196 = vmatprep.subr.mxu0 %v2075
  %2197 = vmatpush1.msra.mxu0 %v2074
  %2198 = vmatprep.subr.mxu0 %v2079
  %2199 = vmatpush1.msra.mxu0 %v2078
  %2200 = vmatprep.subr.mxu0 %v2083
  %2201 = vmatpush1.msra.mxu0 %v2082
  %2202 = vmatprep.subr.mxu0 %v2087
  %2203 = vmatpush1.msra.mxu0 %v2086
  %2204 = vmatprep.subr.mxu0 %v2091
  %2205 = vmatpush1.msra.mxu0 %v2090
  %2206 = vmatprep.subr.mxu0 %v2095
  %2207 = vmatpush1.msra.mxu0 %v2094
  %2208 = vmatprep.subr.mxu0 %v2099
  %2209 = vmatpush1.msra.mxu0 %v2098
  %2210 = vmatprep.subr.mxu0 %v2103
  %2211 = vmatpush1.msra.mxu0 %v2102
  %2212 = vmatprep.subr.mxu0 %v2121
  %2213 = vmatpush1.msra.mxu0 %v2118
  %2214 = vmatprep.subr.mxu0 0.0
  %2215 = vmatpush1.msra.mxu0 0.0
  %2216 = vmatprep.subr.mxu0 0.0
  %2217 = vmatpush1.msra.mxu0 0.0
  %2218 = vmatprep.subr.mxu0 0.0
  %2219 = vmatpush1.msra.mxu0 0.0
  %2220 = vmatprep.subr.mxu0 0.0
  %2221 = vmatpush1.msra.mxu0 0.0
  %2222 = vmatprep.subr.mxu0 0.0
  %2223 = vmatpush1.msra.mxu0 0.0
  %2224 = vmatprep.subr.mxu0 0.0
  %2225 = vmatpush1.msra.mxu0 0.0
  %2226 = vmatprep.subr.mxu0 0.0
  %2227 = vmatpush1.msra.mxu0 0.0
  %2228 = vmatprep.subr.mxu0 0.0
  %2229 = vmatpush1.msra.mxu0 0.0
  %2230 = vmatprep.subr.mxu0 0.0
  %2231 = vmatpush1.msra.mxu0 0.0
  %2232 = vmatprep.subr.mxu0 0.0
  %2233 = vmatpush1.msra.mxu0 0.0
  %2234 = vmatprep.subr.mxu0 0.0
  %2235 = vmatpush1.msra.mxu0 0.0
  %2236 = vmatprep.subr.mxu0 0.0
  %2237 = vmatpush1.msra.mxu0 0.0
  %2238 = vmatprep.subr.mxu0 0.0
  %2239 = vmatpush1.msra.mxu0 0.0
  %2240 = vmatprep.subr.mxu0 0.0
  %2241 = vmatpush1.msra.mxu0 0.0
  %2242 = vmatprep.subr.mxu0 0.0
  %2243 = vmatpush1.msra.mxu0 0.0
  %2244 = vmatprep.subr.mxu0 0.0
  %2245 = vmatpush1.msra.mxu0 0.0
  %2246 = vmatprep.subr.mxu0 0.0
  %2247 = vmatpush1.msra.mxu0 0.0
  %2248 = vmatprep.subr.mxu0 0.0
  %2249 = vmatpush1.msra.mxu0 0.0
  %2250 = vmatprep.subr.mxu0 0.0
  %2251 = vmatpush1.msra.mxu0 0.0
  %2252 = vmatprep.subr.mxu0 0.0
  %2253 = vmatpush1.msra.mxu0 0.0
  %2254 = vmatprep.subr.mxu0 0.0
  %2255 = vmatpush1.msra.mxu0 0.0
  %2256 = vmatprep.subr.mxu0 0.0
  %2257 = vmatpush1.msra.mxu0 0.0
  %2258 = vmatprep.mubr.f32.mxu0 0.0
  %2259 = vmatmul.mubr.f32.gmra.mrb[0].mxu0 %v2109
  %v2260 = vpop.f32.mrb[0].mxu0
  %v2261 = vadd.f32 0.0, %v2260
  %v2262 = vpop.f32.mrb[0].mxu0
  %v2263 = vadd.f32 0.0, %v2262
  %2264 = vdwg.mxu0
  %v2265 = vmul.f32 %v2190, 0.01
  %v2266 = vmul.f32 %v2192, 0.01
  %v2267 = vmul.f32 %v2261, 0.01
  %v2268 = vmul.f32 %v2263, 0.01
  %v2269 = vmax.f32 %v2190, %v2265
  %v2270 = vmax.f32 %v2192, %v2266
  %v2271 = vmax.f32 %v2261, %v2267
  %v2272 = vmax.f32 %v2263, %v2268
  %s2273 = scalar_lea.vmem %s5, 8
  %v2274 = vld [vmem:[%s2273] sm:$0xff]
  %2276 = vrot.lane.b32.xlu0 %v2272, 17
  %v2277 = vpop.permute.xlu0 %2276
  %2282 = vrot.lane.b32.xlu0 %v2269, 17
  %v2283 = vpop.permute.xlu0 %2282
  %2284 = vrot.lane.b32.xlu0 %v2270, 17
  %v2285 = vpop.permute.xlu0 %2284
  %2286 = vrot.lane.b32.xlu0 %v2271, 17
  %v2287 = vpop.permute.xlu0 %2286
  %v2288 = vsel %vm425, %v2283, %v2285
  %v2289 = vsel %vm425, %v2285, %v2287
  %v2290 = vsel %vm425, %v2287, %v2277
  %v2295 = vsel %vm425, %v2277, %v2283
  %v2296 = vld [vmem:[%s3] ss:$8 sm:$0xf]
  %v2298 = vlaneseq
  %v2299 = vshrl.u32 %v2298, 7
  %v2300 = vsub.s32 0, %v2299
  %v2301 = vrot.slane %v2296, %v2300
  %v2302 = vlaneseq
  %v2303 = vshrl.u32 %v2302, 7
  %v2304 = vsub.s32 1, %v2303
  %v2305 = vrot.slane %v2296, %v2304
  %v2306 = vlaneseq
  %v2307 = vshrl.u32 %v2306, 7
  %v2308 = vsub.s32 2, %v2307
  %v2309 = vrot.slane %v2296, %v2308
  %v2310 = vlaneseq
  %v2311 = vshrl.u32 %v2310, 7
  %v2312 = vsub.s32 3, %v2311
  %v2313 = vrot.slane %v2296, %v2312
  %v2318 = vmul.f32 %v2295, %v2301
  %v2319 = vmul.f32 %v2288, %v2305
  %v2320 = vmul.f32 %v2289, %v2309
  %v2321 = vmul.f32 %v2290, %v2313
  %2322 = vst [vmem:[#allocation3] sm:$0xff] %v2318
  %2323 = vst [vmem:[#allocation3 + $0x8] sm:$0xff] %v2319
  %2324 = vst [vmem:[#allocation3 + $0x10] sm:$0xff] %v2320
  %2325 = vst [vmem:[#allocation3 + $0x18] sm:$0xff] %v2321
  %2326 = vrot.lane.b32.xlu0 %v2272, 16
  %v2327 = vpop.permute.xlu0 %2326
  %2329 = vrot.lane.b32.xlu0 %v2269, 16
  %v2330 = vpop.permute.xlu0 %2329
  %2331 = vrot.lane.b32.xlu0 %v2270, 16
  %v2332 = vpop.permute.xlu0 %2331
  %2333 = vrot.lane.b32.xlu0 %v2271, 16
  %v2334 = vpop.permute.xlu0 %2333
  %v2335 = vsel %vm473, %v2330, %v2332
  %v2336 = vsel %vm473, %v2332, %v2334
  %v2337 = vsel %vm473, %v2334, %v2327
  %v2342 = vsel %vm473, %v2327, %v2330
  %v2343 = vld [vmem:[%s482] ss:$8 sm:$0xf]
  %v2345 = vlaneseq
  %v2346 = vshrl.u32 %v2345, 7
  %v2347 = vsub.s32 0, %v2346
  %v2348 = vrot.slane %v2343, %v2347
  %v2349 = vlaneseq
  %v2350 = vshrl.u32 %v2349, 7
  %v2351 = vsub.s32 1, %v2350
  %v2352 = vrot.slane %v2343, %v2351
  %v2353 = vlaneseq
  %v2354 = vshrl.u32 %v2353, 7
  %v2355 = vsub.s32 2, %v2354
  %v2356 = vrot.slane %v2343, %v2355
  %v2357 = vlaneseq
  %v2358 = vshrl.u32 %v2357, 7
  %v2359 = vsub.s32 3, %v2358
  %v2360 = vrot.slane %v2343, %v2359
  %v2365 = vmul.f32 %v2342, %v2348
  %v2366 = vmul.f32 %v2335, %v2352
  %v2367 = vmul.f32 %v2336, %v2356
  %v2368 = vmul.f32 %v2337, %v2360
  %2369 = vst [vmem:[#allocation3 + $0x20] sm:$0xff] %v2365
  %2370 = vst [vmem:[#allocation3 + $0x28] sm:$0xff] %v2366
  %2371 = vst [vmem:[#allocation3 + $0x30] sm:$0xff] %v2367
  %2372 = vst [vmem:[#allocation3 + $0x38] sm:$0xff] %v2368
  %2373 = vrot.lane.b32.xlu0 %v2272, 15
  %v2374 = vpop.permute.xlu0 %2373
  %2376 = vrot.lane.b32.xlu0 %v2269, 15
  %v2377 = vpop.permute.xlu0 %2376
  %2378 = vrot.lane.b32.xlu0 %v2270, 15
  %v2379 = vpop.permute.xlu0 %2378
  %2380 = vrot.lane.b32.xlu0 %v2271, 15
  %v2381 = vpop.permute.xlu0 %2380
  %v2382 = vsel %vm522, %v2377, %v2379
  %v2383 = vsel %vm522, %v2379, %v2381
  %v2384 = vsel %vm522, %v2381, %v2374
  %v2389 = vsel %vm522, %v2374, %v2377
  %v2390 = vld [vmem:[%s531] ss:$8 sm:$0xf]
  %v2392 = vlaneseq
  %v2393 = vshrl.u32 %v2392, 7
  %v2394 = vsub.s32 0, %v2393
  %v2395 = vrot.slane %v2390, %v2394
  %v2396 = vlaneseq
  %v2397 = vshrl.u32 %v2396, 7
  %v2398 = vsub.s32 1, %v2397
  %v2399 = vrot.slane %v2390, %v2398
  %v2400 = vlaneseq
  %v2401 = vshrl.u32 %v2400, 7
  %v2402 = vsub.s32 2, %v2401
  %v2403 = vrot.slane %v2390, %v2402
  %v2404 = vlaneseq
  %v2405 = vshrl.u32 %v2404, 7
  %v2406 = vsub.s32 3, %v2405
  %v2407 = vrot.slane %v2390, %v2406
  %v2412 = vmul.f32 %v2389, %v2395
  %v2413 = vmul.f32 %v2382, %v2399
  %v2414 = vmul.f32 %v2383, %v2403
  %v2415 = vmul.f32 %v2384, %v2407
  %2416 = vst [vmem:[#allocation3 + $0x40] sm:$0xff] %v2412
  %2417 = vst [vmem:[#allocation3 + $0x48] sm:$0xff] %v2413
  %2418 = vst [vmem:[#allocation3 + $0x50] sm:$0xff] %v2414
  %2419 = vst [vmem:[#allocation3 + $0x58] sm:$0xff] %v2415
  %2420 = vrot.lane.b32.xlu0 %v2272, 1
  %v2421 = vpop.permute.xlu0 %2420
  %2423 = vrot.lane.b32.xlu0 %v2269, 1
  %v2424 = vpop.permute.xlu0 %2423
  %2425 = vrot.lane.b32.xlu0 %v2270, 1
  %v2426 = vpop.permute.xlu0 %2425
  %2427 = vrot.lane.b32.xlu0 %v2271, 1
  %v2428 = vpop.permute.xlu0 %2427
  %v2429 = vsel %vm571, %v2424, %v2426
  %v2430 = vsel %vm571, %v2426, %v2428
  %v2431 = vsel %vm571, %v2428, %v2421
  %v2436 = vsel %vm571, %v2421, %v2424
  %v2437 = vld [vmem:[%s580] ss:$8 sm:$0xf]
  %v2439 = vlaneseq
  %v2440 = vshrl.u32 %v2439, 7
  %v2441 = vsub.s32 0, %v2440
  %v2442 = vrot.slane %v2437, %v2441
  %v2443 = vlaneseq
  %v2444 = vshrl.u32 %v2443, 7
  %v2445 = vsub.s32 1, %v2444
  %v2446 = vrot.slane %v2437, %v2445
  %v2447 = vlaneseq
  %v2448 = vshrl.u32 %v2447, 7
  %v2449 = vsub.s32 2, %v2448
  %v2450 = vrot.slane %v2437, %v2449
  %v2451 = vlaneseq
  %v2452 = vshrl.u32 %v2451, 7
  %v2453 = vsub.s32 3, %v2452
  %v2454 = vrot.slane %v2437, %v2453
  %v2459 = vmul.f32 %v2436, %v2442
  %v2460 = vmul.f32 %v2429, %v2446
  %v2461 = vmul.f32 %v2430, %v2450
  %v2462 = vmul.f32 %v2431, %v2454
  %2463 = vst [vmem:[#allocation3 + $0x60] sm:$0xff] %v2459
  %2464 = vst [vmem:[#allocation3 + $0x68] sm:$0xff] %v2460
  %2465 = vst [vmem:[#allocation3 + $0x70] sm:$0xff] %v2461
  %2466 = vst [vmem:[#allocation3 + $0x78] sm:$0xff] %v2462
  %v2467 = vld [vmem:[%s611] ss:$8 sm:$0xf]
  %v2469 = vlaneseq
  %v2470 = vshrl.u32 %v2469, 7
  %v2471 = vsub.s32 0, %v2470
  %v2472 = vrot.slane %v2467, %v2471
  %v2473 = vlaneseq
  %v2474 = vshrl.u32 %v2473, 7
  %v2475 = vsub.s32 1, %v2474
  %v2476 = vrot.slane %v2467, %v2475
  %v2477 = vlaneseq
  %v2478 = vshrl.u32 %v2477, 7
  %v2479 = vsub.s32 2, %v2478
  %v2480 = vrot.slane %v2467, %v2479
  %v2481 = vlaneseq
  %v2482 = vshrl.u32 %v2481, 7
  %v2483 = vsub.s32 3, %v2482
  %v2484 = vrot.slane %v2467, %v2483
  %v2489 = vmul.f32 %v2269, %v2472
  %v2490 = vmul.f32 %v2270, %v2476
  %v2491 = vmul.f32 %v2271, %v2480
  %v2492 = vmul.f32 %v2272, %v2484
  %2493 = vst [vmem:[#allocation3 + $0x80] sm:$0xff] %v2489
  %2494 = vst [vmem:[#allocation3 + $0x88] sm:$0xff] %v2490
  %2495 = vst [vmem:[#allocation3 + $0x90] sm:$0xff] %v2491
  %2496 = vst [vmem:[#allocation3 + $0x98] sm:$0xff] %v2492
  %2497 = vrot.lane.b32.xlu0 %v2269, 127
  %v2498 = vpop.permute.xlu0 %2497
  %2499 = vrot.lane.b32.xlu0 %v2270, 127
  %v2500 = vpop.permute.xlu0 %2499
  %2501 = vrot.lane.b32.xlu0 %v2271, 127
  %v2502 = vpop.permute.xlu0 %2501
  %2503 = vrot.lane.b32.xlu0 %v2272, 127
  %v2504 = vpop.permute.xlu0 %2503
  %v2505 = vsel %vm650, %v2498, %v2500
  %v2506 = vsel %vm650, %v2500, %v2502
  %v2507 = vsel %vm650, %v2502, %v2504
  %v2513 = vsel %vm650, %v2504, %v2498
  %v2514 = vld [vmem:[%s660] ss:$8 sm:$0xf]
  %v2516 = vlaneseq
  %v2517 = vshrl.u32 %v2516, 7
  %v2518 = vsub.s32 0, %v2517
  %v2519 = vrot.slane %v2514, %v2518
  %v2520 = vlaneseq
  %v2521 = vshrl.u32 %v2520, 7
  %v2522 = vsub.s32 1, %v2521
  %v2523 = vrot.slane %v2514, %v2522
  %v2524 = vlaneseq
  %v2525 = vshrl.u32 %v2524, 7
  %v2526 = vsub.s32 2, %v2525
  %v2527 = vrot.slane %v2514, %v2526
  %v2528 = vlaneseq
  %v2529 = vshrl.u32 %v2528, 7
  %v2530 = vsub.s32 3, %v2529
  %v2531 = vrot.slane %v2514, %v2530
  %v2536 = vmul.f32 %v2505, %v2519
  %v2537 = vmul.f32 %v2506, %v2523
  %v2538 = vmul.f32 %v2507, %v2527
  %v2539 = vmul.f32 %v2513, %v2531
  %2540 = vst [vmem:[#allocation3 + $0xa0] sm:$0xff] %v2536
  %2541 = vst [vmem:[#allocation3 + $0xa8] sm:$0xff] %v2537
  %2542 = vst [vmem:[#allocation3 + $0xb0] sm:$0xff] %v2538
  %2543 = vst [vmem:[#allocation3 + $0xb8] sm:$0xff] %v2539
  %2544 = vrot.lane.b32.xlu0 %v2269, 113
  %v2545 = vpop.permute.xlu0 %2544
  %2546 = vrot.lane.b32.xlu0 %v2270, 113
  %v2547 = vpop.permute.xlu0 %2546
  %2548 = vrot.lane.b32.xlu0 %v2271, 113
  %v2549 = vpop.permute.xlu0 %2548
  %2550 = vrot.lane.b32.xlu0 %v2272, 113
  %v2551 = vpop.permute.xlu0 %2550
  %v2552 = vsel %vm699, %v2545, %v2547
  %v2553 = vsel %vm699, %v2547, %v2549
  %v2554 = vsel %vm699, %v2549, %v2551
  %v2560 = vsel %vm699, %v2551, %v2545
  %v2561 = vld [vmem:[%s709] ss:$8 sm:$0xf]
  %v2563 = vlaneseq
  %v2564 = vshrl.u32 %v2563, 7
  %v2565 = vsub.s32 0, %v2564
  %v2566 = vrot.slane %v2561, %v2565
  %v2567 = vlaneseq
  %v2568 = vshrl.u32 %v2567, 7
  %v2569 = vsub.s32 1, %v2568
  %v2570 = vrot.slane %v2561, %v2569
  %v2571 = vlaneseq
  %v2572 = vshrl.u32 %v2571, 7
  %v2573 = vsub.s32 2, %v2572
  %v2574 = vrot.slane %v2561, %v2573
  %v2575 = vlaneseq
  %v2576 = vshrl.u32 %v2575, 7
  %v2577 = vsub.s32 3, %v2576
  %v2578 = vrot.slane %v2561, %v2577
  %v2583 = vmul.f32 %v2552, %v2566
  %v2584 = vmul.f32 %v2553, %v2570
  %v2585 = vmul.f32 %v2554, %v2574
  %v2586 = vmul.f32 %v2560, %v2578
  %2587 = vst [vmem:[#allocation3 + $0xc0] sm:$0xff] %v2583
  %2588 = vst [vmem:[#allocation3 + $0xc8] sm:$0xff] %v2584
  %2589 = vst [vmem:[#allocation3 + $0xd0] sm:$0xff] %v2585
  %2590 = vst [vmem:[#allocation3 + $0xd8] sm:$0xff] %v2586
  %2591 = vrot.lane.b32.xlu0 %v2269, 112
  %v2592 = vpop.permute.xlu0 %2591
  %2593 = vrot.lane.b32.xlu0 %v2270, 112
  %v2594 = vpop.permute.xlu0 %2593
  %2595 = vrot.lane.b32.xlu0 %v2271, 112
  %v2596 = vpop.permute.xlu0 %2595
  %2597 = vrot.lane.b32.xlu0 %v2272, 112
  %v2598 = vpop.permute.xlu0 %2597
  %v2599 = vsel %vm748, %v2592, %v2594
  %v2600 = vsel %vm748, %v2594, %v2596
  %v2601 = vsel %vm748, %v2596, %v2598
  %v2607 = vsel %vm748, %v2598, %v2592
  %v2608 = vld [vmem:[%s758] ss:$8 sm:$0xf]
  %v2610 = vlaneseq
  %v2611 = vshrl.u32 %v2610, 7
  %v2612 = vsub.s32 0, %v2611
  %v2613 = vrot.slane %v2608, %v2612
  %v2614 = vlaneseq
  %v2615 = vshrl.u32 %v2614, 7
  %v2616 = vsub.s32 1, %v2615
  %v2617 = vrot.slane %v2608, %v2616
  %v2618 = vlaneseq
  %v2619 = vshrl.u32 %v2618, 7
  %v2620 = vsub.s32 2, %v2619
  %v2621 = vrot.slane %v2608, %v2620
  %v2622 = vlaneseq
  %v2623 = vshrl.u32 %v2622, 7
  %v2624 = vsub.s32 3, %v2623
  %v2625 = vrot.slane %v2608, %v2624
  %v2630 = vmul.f32 %v2599, %v2613
  %v2631 = vmul.f32 %v2600, %v2617
  %v2632 = vmul.f32 %v2601, %v2621
  %v2633 = vmul.f32 %v2607, %v2625
  %2634 = vst [vmem:[#allocation3 + $0xe0] sm:$0xff] %v2630
  %2635 = vst [vmem:[#allocation3 + $0xe8] sm:$0xff] %v2631
  %2636 = vst [vmem:[#allocation3 + $0xf0] sm:$0xff] %v2632
  %2637 = vst [vmem:[#allocation3 + $0xf8] sm:$0xff] %v2633
  %2638 = vrot.lane.b32.xlu0 %v2269, 111
  %v2639 = vpop.permute.xlu0 %2638
  %2640 = vrot.lane.b32.xlu0 %v2270, 111
  %v2641 = vpop.permute.xlu0 %2640
  %2642 = vrot.lane.b32.xlu0 %v2271, 111
  %v2643 = vpop.permute.xlu0 %2642
  %2644 = vrot.lane.b32.xlu0 %v2272, 111
  %v2645 = vpop.permute.xlu0 %2644
  %v2646 = vsel %vm797, %v2639, %v2641
  %v2647 = vsel %vm797, %v2641, %v2643
  %v2648 = vsel %vm797, %v2643, %v2645
  %v2654 = vsel %vm797, %v2645, %v2639
  %v2655 = vld [vmem:[%s807] ss:$8 sm:$0xf]
  %v2657 = vlaneseq
  %v2658 = vshrl.u32 %v2657, 7
  %v2659 = vsub.s32 0, %v2658
  %v2660 = vrot.slane %v2655, %v2659
  %v2661 = vlaneseq
  %v2662 = vshrl.u32 %v2661, 7
  %v2663 = vsub.s32 1, %v2662
  %v2664 = vrot.slane %v2655, %v2663
  %v2665 = vlaneseq
  %v2666 = vshrl.u32 %v2665, 7
  %v2667 = vsub.s32 2, %v2666
  %v2668 = vrot.slane %v2655, %v2667
  %v2669 = vlaneseq
  %v2670 = vshrl.u32 %v2669, 7
  %v2671 = vsub.s32 3, %v2670
  %v2672 = vrot.slane %v2655, %v2671
  %v2677 = vmul.f32 %v2646, %v2660
  %v2678 = vmul.f32 %v2647, %v2664
  %v2679 = vmul.f32 %v2648, %v2668
  %v2680 = vmul.f32 %v2654, %v2672
  %2681 = vst [vmem:[#allocation3 + $0x100] sm:$0xff] %v2677
  %2682 = vst [vmem:[#allocation3 + $0x108] sm:$0xff] %v2678
  %2683 = vst [vmem:[#allocation3 + $0x110] sm:$0xff] %v2679
  %2684 = vst [vmem:[#allocation3 + $0x118] sm:$0xff] %v2680
  %v2685 = vld [vmem:[#allocation3] sm:$0xff]
  %v2686 = vld [vmem:[#allocation3 + $0x8] sm:$0xff]
  %v2687 = vld [vmem:[#allocation3 + $0x10] sm:$0xff]
  %v2688 = vld [vmem:[#allocation3 + $0x18] sm:$0xff]
  %v2689 = vld [vmem:[#allocation3 + $0x20] sm:$0xff]
  %v2690 = vld [vmem:[#allocation3 + $0x28] sm:$0xff]
  %v2691 = vld [vmem:[#allocation3 + $0x30] sm:$0xff]
  %v2692 = vld [vmem:[#allocation3 + $0x38] sm:$0xff]
  %v2693 = vld [vmem:[#allocation3 + $0x40] sm:$0xff]
  %v2694 = vld [vmem:[#allocation3 + $0x48] sm:$0xff]
  %v2695 = vld [vmem:[#allocation3 + $0x50] sm:$0xff]
  %v2696 = vld [vmem:[#allocation3 + $0x58] sm:$0xff]
  %v2697 = vld [vmem:[#allocation3 + $0x60] sm:$0xff]
  %v2698 = vld [vmem:[#allocation3 + $0x68] sm:$0xff]
  %v2699 = vld [vmem:[#allocation3 + $0x70] sm:$0xff]
  %v2700 = vld [vmem:[#allocation3 + $0x78] sm:$0xff]
  %v2701 = vld [vmem:[#allocation3 + $0x80] sm:$0xff]
  %v2702 = vld [vmem:[#allocation3 + $0x88] sm:$0xff]
  %v2703 = vld [vmem:[#allocation3 + $0x90] sm:$0xff]
  %v2704 = vld [vmem:[#allocation3 + $0x98] sm:$0xff]
  %v2705 = vld [vmem:[#allocation3 + $0xa0] sm:$0xff]
  %v2706 = vld [vmem:[#allocation3 + $0xa8] sm:$0xff]
  %v2707 = vld [vmem:[#allocation3 + $0xb0] sm:$0xff]
  %v2708 = vld [vmem:[#allocation3 + $0xb8] sm:$0xff]
  %v2709 = vld [vmem:[#allocation3 + $0xc0] sm:$0xff]
  %v2710 = vld [vmem:[#allocation3 + $0xc8] sm:$0xff]
  %v2711 = vld [vmem:[#allocation3 + $0xd0] sm:$0xff]
  %v2712 = vld [vmem:[#allocation3 + $0xd8] sm:$0xff]
  %v2713 = vld [vmem:[#allocation3 + $0xe0] sm:$0xff]
  %v2714 = vld [vmem:[#allocation3 + $0xe8] sm:$0xff]
  %v2715 = vld [vmem:[#allocation3 + $0xf0] sm:$0xff]
  %v2716 = vld [vmem:[#allocation3 + $0xf8] sm:$0xff]
  %v2717 = vld [vmem:[#allocation3 + $0x100] sm:$0xff]
  %v2718 = vld [vmem:[#allocation3 + $0x108] sm:$0xff]
  %v2719 = vld [vmem:[#allocation3 + $0x110] sm:$0xff]
  %v2720 = vld [vmem:[#allocation3 + $0x118] sm:$0xff]
  %v2721 = vld [vmem:[#allocation3 + $0x120] sm:$0x1]
  %v2722 = vld [vmem:[#allocation3 + $0x128] sm:$0x1]
  %v2723 = vld [vmem:[#allocation3 + $0x130] sm:$0x1]
  %v2724 = vld [vmem:[#allocation3 + $0x138] sm:$0x1]
  %v2726 = vsel %vm878, %v2274, 0
  %v2729 = vsel %vm237, %v2721, 0
  %v2732 = vsel %vm237, %v2722, 0
  %v2735 = vsel %vm237, %v2723, 0
  %v2738 = vsel %vm237, %v2724, 0
  %2740 = vmatprep.subr.mxu0 %v2686
  %2741 = vmatpush1.msra.mxu0 %v2685
  %2742 = vmatprep.subr.mxu0 %v2690
  %2743 = vmatpush1.msra.mxu0 %v2689
  %2744 = vmatprep.subr.mxu0 %v2694
  %2745 = vmatpush1.msra.mxu0 %v2693
  %2746 = vmatprep.subr.mxu0 %v2698
  %2747 = vmatpush1.msra.mxu0 %v2697
  %2748 = vmatprep.subr.mxu0 %v2702
  %2749 = vmatpush1.msra.mxu0 %v2701
  %2750 = vmatprep.subr.mxu0 %v2706
  %2751 = vmatpush1.msra.mxu0 %v2705
  %2752 = vmatprep.subr.mxu0 %v2710
  %2753 = vmatpush1.msra.mxu0 %v2709
  %2754 = vmatprep.subr.mxu0 %v2714
  %2755 = vmatpush1.msra.mxu0 %v2713
  %2756 = vmatprep.subr.mxu0 %v2718
  %2757 = vmatpush1.msra.mxu0 %v2717
  %2758 = vmatprep.subr.mxu0 %v2732
  %2759 = vmatpush1.msra.mxu0 %v2729
  %2760 = vmatprep.subr.mxu0 0.0
  %2761 = vmatpush1.msra.mxu0 0.0
  %2762 = vmatprep.subr.mxu0 0.0
  %2763 = vmatpush1.msra.mxu0 0.0
  %2764 = vmatprep.subr.mxu0 0.0
  %2765 = vmatpush1.msra.mxu0 0.0
  %2766 = vmatprep.subr.mxu0 0.0
  %2767 = vmatpush1.msra.mxu0 0.0
  %2768 = vmatprep.subr.mxu0 0.0
  %2769 = vmatpush1.msra.mxu0 0.0
  %2770 = vmatprep.subr.mxu0 0.0
  %2771 = vmatpush1.msra.mxu0 0.0
  %2772 = vmatprep.subr.mxu0 0.0
  %2773 = vmatpush1.msra.mxu0 0.0
  %2774 = vmatprep.subr.mxu0 0.0
  %2775 = vmatpush1.msra.mxu0 0.0
  %2776 = vmatprep.subr.mxu0 0.0
  %2777 = vmatpush1.msra.mxu0 0.0
  %2778 = vmatprep.subr.mxu0 0.0
  %2779 = vmatpush1.msra.mxu0 0.0
  %2780 = vmatprep.subr.mxu0 0.0
  %2781 = vmatpush1.msra.mxu0 0.0
  %2782 = vmatprep.subr.mxu0 0.0
  %2783 = vmatpush1.msra.mxu0 0.0
  %2784 = vmatprep.subr.mxu0 0.0
  %2785 = vmatpush1.msra.mxu0 0.0
  %2786 = vmatprep.subr.mxu0 0.0
  %2787 = vmatpush1.msra.mxu0 0.0
  %2788 = vmatprep.subr.mxu0 0.0
  %2789 = vmatpush1.msra.mxu0 0.0
  %2790 = vmatprep.subr.mxu0 0.0
  %2791 = vmatpush1.msra.mxu0 0.0
  %2792 = vmatprep.subr.mxu0 0.0
  %2793 = vmatpush1.msra.mxu0 0.0
  %2794 = vmatprep.subr.mxu0 0.0
  %2795 = vmatpush1.msra.mxu0 0.0
  %2796 = vmatprep.subr.mxu0 0.0
  %2797 = vmatpush1.msra.mxu0 0.0
  %2798 = vmatprep.subr.mxu0 0.0
  %2799 = vmatpush1.msra.mxu0 0.0
  %2800 = vmatprep.subr.mxu0 0.0
  %2801 = vmatpush1.msra.mxu0 0.0
  %2802 = vmatprep.subr.mxu0 0.0
  %2803 = vmatpush1.msra.mxu0 0.0
  %2804 = vmatprep.mubr.f32.mxu0 0.0
  %2805 = vmatmul.mubr.f32.gmra.mrb[0].mxu0 %v2726
  %v2806 = vpop.f32.mrb[0].mxu0
  %v2807 = vadd.f32 0.0, %v2806
  %v2808 = vpop.f32.mrb[0].mxu0
  %v2809 = vadd.f32 0.0, %v2808
  %2810 = vdwg.mxu0
  %2811 = vmatprep.subr.mxu0 %v2688
  %2812 = vmatpush1.msra.mxu0 %v2687
  %2813 = vmatprep.subr.mxu0 %v2692
  %2814 = vmatpush1.msra.mxu0 %v2691
  %2815 = vmatprep.subr.mxu0 %v2696
  %2816 = vmatpush1.msra.mxu0 %v2695
  %2817 = vmatprep.subr.mxu0 %v2700
  %2818 = vmatpush1.msra.mxu0 %v2699
  %2819 = vmatprep.subr.mxu0 %v2704
  %2820 = vmatpush1.msra.mxu0 %v2703
  %2821 = vmatprep.subr.mxu0 %v2708
  %2822 = vmatpush1.msra.mxu0 %v2707
  %2823 = vmatprep.subr.mxu0 %v2712
  %2824 = vmatpush1.msra.mxu0 %v2711
  %2825 = vmatprep.subr.mxu0 %v2716
  %2826 = vmatpush1.msra.mxu0 %v2715
  %2827 = vmatprep.subr.mxu0 %v2720
  %2828 = vmatpush1.msra.mxu0 %v2719
  %2829 = vmatprep.subr.mxu0 %v2738
  %2830 = vmatpush1.msra.mxu0 %v2735
  %2831 = vmatprep.subr.mxu0 0.0
  %2832 = vmatpush1.msra.mxu0 0.0
  %2833 = vmatprep.subr.mxu0 0.0
  %2834 = vmatpush1.msra.mxu0 0.0
  %2835 = vmatprep.subr.mxu0 0.0
  %2836 = vmatpush1.msra.mxu0 0.0
  %2837 = vmatprep.subr.mxu0 0.0
  %2838 = vmatpush1.msra.mxu0 0.0
  %2839 = vmatprep.subr.mxu0 0.0
  %2840 = vmatpush1.msra.mxu0 0.0
  %2841 = vmatprep.subr.mxu0 0.0
  %2842 = vmatpush1.msra.mxu0 0.0
  %2843 = vmatprep.subr.mxu0 0.0
  %2844 = vmatpush1.msra.mxu0 0.0
  %2845 = vmatprep.subr.mxu0 0.0
  %2846 = vmatpush1.msra.mxu0 0.0
  %2847 = vmatprep.subr.mxu0 0.0
  %2848 = vmatpush1.msra.mxu0 0.0
  %2849 = vmatprep.subr.mxu0 0.0
  %2850 = vmatpush1.msra.mxu0 0.0
  %2851 = vmatprep.subr.mxu0 0.0
  %2852 = vmatpush1.msra.mxu0 0.0
  %2853 = vmatprep.subr.mxu0 0.0
  %2854 = vmatpush1.msra.mxu0 0.0
  %2855 = vmatprep.subr.mxu0 0.0
  %2856 = vmatpush1.msra.mxu0 0.0
  %2857 = vmatprep.subr.mxu0 0.0
  %2858 = vmatpush1.msra.mxu0 0.0
  %2859 = vmatprep.subr.mxu0 0.0
  %2860 = vmatpush1.msra.mxu0 0.0
  %2861 = vmatprep.subr.mxu0 0.0
  %2862 = vmatpush1.msra.mxu0 0.0
  %2863 = vmatprep.subr.mxu0 0.0
  %2864 = vmatpush1.msra.mxu0 0.0
  %2865 = vmatprep.subr.mxu0 0.0
  %2866 = vmatpush1.msra.mxu0 0.0
  %2867 = vmatprep.subr.mxu0 0.0
  %2868 = vmatpush1.msra.mxu0 0.0
  %2869 = vmatprep.subr.mxu0 0.0
  %2870 = vmatpush1.msra.mxu0 0.0
  %2871 = vmatprep.subr.mxu0 0.0
  %2872 = vmatpush1.msra.mxu0 0.0
  %2873 = vmatprep.subr.mxu0 0.0
  %2874 = vmatpush1.msra.mxu0 0.0
  %2875 = vmatprep.mubr.f32.mxu0 0.0
  %2876 = vmatmul.mubr.f32.gmra.mrb[0].mxu0 %v2726
  %v2877 = vpop.f32.mrb[0].mxu0
  %v2878 = vadd.f32 0.0, %v2877
  %v2879 = vpop.f32.mrb[0].mxu0
  %v2880 = vadd.f32 0.0, %v2879
  %2881 = vdwg.mxu0
  %v2882 = vadd.f32 %v1652, %v2807
  %v2883 = vadd.f32 %v1653, %v2809
  %v2884 = vadd.f32 %v1654, %v2878
  %v2885 = vadd.f32 %v1655, %v2880
  %2886 = vst [vmem:[%s7] sm:$0xff] %v2882
  %2887 = vst [vmem:[%s7 + $0x8] sm:$0xff] %v2883
  %2888 = vst [vmem:[%s7 + $0x10] sm:$0xff] %v2884
  %2889 = vst [vmem:[%s7 + $0x18] sm:$0xff] %v2885
  // Predicated region
  $region26: #{resizer_forward.1} parent=0 // pred_check
    _
  $region27: #{resizer_forward.1} parent=0 // pred_check_branch
    %2891 = sbr.rel (0) target = $region29
  $region28: #{resizer_forward.1} parent=0 // pred_region
    _
  $region29: #{resizer_forward.1} parent=0 // pred_fallthru
    _
  // Predicated region
  $region30: #{resizer_forward.1} parent=0 // pred_check
    _
  $region31: #{resizer_forward.1} parent=0 // pred_check_branch
    %2893 = sbr.rel (0) target = $region33
  $region32: #{resizer_forward.1} parent=0 // pred_region
    _
  $region33: #{resizer_forward.1} parent=0 // pred_fallthru
    _
  // Predicated region
  $region34: #{resizer_forward.1} parent=0 // pred_check
    _
  $region35: #{resizer_forward.1} parent=0 // pred_check_branch
    %2895 = sbr.rel (0) target = $region37
  $region36: #{resizer_forward.1} parent=0 // pred_region
    _
  $region37: #{resizer_forward.1} parent=0 // pred_fallthru
    _
  // Predicated region
  $region38: #{resizer_forward.1} parent=0 // pred_check
    _
  $region39: #{resizer_forward.1} parent=0 // pred_check_branch
    %2897 = sbr.rel (0) target = $region41
  $region40: #{resizer_forward.1} parent=0 // pred_region
    _
  $region41: #{resizer_forward.1} parent=0 // pred_fallthru
    _

</llo_original>
